<compile_context>
chip_gen: v7x
topology: tpu7x:2x2x1
jax: 0.10.0
libtpu: 0.0.40
codegen_flags: <defaults>
</compile_context>

<pallas_src>
import functools

import jax
import jax.numpy as jnp
import numpy as np
from jax import lax
from jax.experimental import pallas as pl
from jax.experimental.pallas import tpu as pltpu

EPS = 1e-5                      # BatchNorm2d default eps
VMEM_LIMIT = 32 * 1024 * 1024   # safe scoped-VMEM budget on v5e/v6e/v7x


def conv2_norm_relu(x, weight, bias, gamma, beta, *, stride, padding, dilation,
                    matmul_dtype=jnp.float32):
    """x: (N, Cin, H, W) NCHW f32.  weight: (Cout, Cin, KH, KW) (PyTorch OIHW)."""
    del bias  # cancels exactly under training-mode BatchNorm (mean subtraction)

    N, Cin, H, W = x.shape
    Cout, _, KH, KW = weight.shape

    OH = (H + 2 * padding - dilation * (KH - 1) - 1) // stride + 1
    OW = (W + 2 * padding - dilation * (KW - 1) - 1) // stride + 1
    P = OH * OW                  # output pixels per image
    M = N * P                    # rows entering the batch statistics

    # Even image count -> the parallel grid axis always splits across both
    # v7x TensorCores.  The dummy zero image is excluded from the statistics
    # and its output rows are sliced away.
    N_pad = N if (N % 2 == 0 or N == 1) else N + 1

    Hp, Wp = H + 2 * padding, W + 2 * padding

    # --- input prep: one small XLA pad+transpose (no im2col blow-up) ---
    xp = jnp.pad(x, ((0, N_pad - N), (0, 0),
                     (padding, padding), (padding, padding)))
    xp = xp.transpose(0, 2, 3, 1).astype(matmul_dtype)        # (N_pad,Hp,Wp,Cin)
    w = weight.transpose(2, 3, 1, 0).astype(matmul_dtype)     # (KH,KW,Cin,Cout)

    sublane_ok = (P % 8 == 0)

    # ------------------------------------------------------------------
    # Kernel 1: fused im2col + conv matmul + per-image batch statistics.
    # One grid step == one image.
    # ------------------------------------------------------------------
    def conv_stats_kernel(x_ref, w_ref, y_ref, stats_ref):
        acc = jnp.zeros((P, Cout), jnp.float32)
        for kh in range(KH):
            for kw in range(KW):
                h0 = kh * dilation
                w0 = kw * dilation
                if stride == 1:
                    win = x_ref[h0:h0 + OH, w0:w0 + OW, :]
                else:
                    win = x_ref[pl.ds(h0, OH, stride),
                                pl.ds(w0, OW, stride), :]
                acc = acc + jnp.dot(win.reshape(P, Cin), w_ref[kh, kw, :, :],
                                    preferred_element_type=jnp.float32)
        y_ref[...] = acc

        # Per-image channel sums + centered sum-of-squares, kept as 8-row
        # sublane partials (pure VALU); the 8->1 reduce and the cross-image
        # variance combine happen in tiny JAX outside the kernel.
        if sublane_ok:
            g = P // 8
            psum8 = jnp.sum(acc.reshape(g, 8, Cout), axis=0)            # (8,C)
            s_full = jnp.sum(psum8, axis=0, keepdims=True)              # (1,C)
            cent = acc - s_full * (1.0 / P)
            q8 = jnp.sum((cent * cent).reshape(g, 8, Cout), axis=0)     # (8,C)
            stats_ref[0:8, :] = psum8
            stats_ref[8:16, :] = q8
        else:  # rare ragged case: cross-sublane reduce fallback
            stats_ref[...] = jnp.zeros_like(stats_ref)
            s1 = jnp.sum(acc, axis=0, keepdims=True)
            cent = acc - s1 * (1.0 / P)
            stats_ref[0:1, :] = s1
            stats_ref[8:9, :] = jnp.sum(cent * cent, axis=0, keepdims=True)

    conv_out, stats = pl.pallas_call(
        conv_stats_kernel,
        out_shape=(jax.ShapeDtypeStruct((N_pad, P, Cout), jnp.float32),
                   jax.ShapeDtypeStruct((N_pad, 16, Cout), jnp.float32)),
        grid=(N_pad,),
        in_specs=[
            pl.BlockSpec((None, Hp, Wp, Cin), lambda n: (n, 0, 0, 0)),
            pl.BlockSpec((KH, KW, Cin, Cout), lambda n: (0, 0, 0, 0)),
        ],
        out_specs=(
            pl.BlockSpec((None, P, Cout), lambda n: (n, 0, 0)),
            pl.BlockSpec((None, 16, Cout), lambda n: (n, 0, 0)),
        ),
        compiler_params=pltpu.CompilerParams(
            dimension_semantics=("parallel",),
            vmem_limit_bytes=VMEM_LIMIT),
    )(xp, w)

    # --- fold BN into per-channel scale/shift (tiny JAX, stable variance) ---
    st = stats[:N]                                   # drop padded images
    s_img = st[:, 0:8, :].sum(axis=1)                # (N, Cout) per-image sums
    q_img = st[:, 8:16, :].sum(axis=1)               # (N, Cout) centered sumsq
    mean = s_img.sum(axis=0) / M                     # (Cout,)
    mean_img = s_img / P
    var = (q_img.sum(axis=0) + P * ((mean_img - mean) ** 2).sum(axis=0)) / M
    var = jnp.maximum(var, 0.0)
    inv = lax.rsqrt(var + EPS)
    g32 = gamma.astype(jnp.float32)
    scale = (g32 * inv).reshape(1, 1, Cout)
    shift = (beta.astype(jnp.float32) - mean * g32 * inv).reshape(1, 1, Cout)

    # ------------------------------------------------------------------
    # Kernel 2: folded BN (scale/shift) + ReLU, in place over the conv buffer,
    # large image-group blocks, unpadded channels.
    # ------------------------------------------------------------------
    bytes_per_img = P * Cout * 4
    bn = 1
    for b in range(1, N_pad + 1):
        if N_pad % b == 0 and b * bytes_per_img <= (2 << 20):
            bn = b

    def bn_relu_kernel(y_ref, scale_ref, shift_ref, o_ref):
        o_ref[...] = jnp.maximum(
            y_ref[...] * scale_ref[...] + shift_ref[...], 0.0)

    y = pl.pallas_call(
        bn_relu_kernel,
        out_shape=jax.ShapeDtypeStruct((N_pad, P, Cout), jnp.float32),
        grid=(N_pad // bn,),
        in_specs=[
            pl.BlockSpec((bn, P, Cout), lambda i: (i, 0, 0)),
            pl.BlockSpec((1, 1, Cout), lambda i: (0, 0, 0)),
            pl.BlockSpec((1, 1, Cout), lambda i: (0, 0, 0)),
        ],
        out_specs=pl.BlockSpec((bn, P, Cout), lambda i: (i, 0, 0)),
        input_output_aliases={0: 0},
        compiler_params=pltpu.CompilerParams(
            dimension_semantics=("parallel",),
            vmem_limit_bytes=VMEM_LIMIT),
    )(conv_out, scale, shift)

    # Back to NCHW.  Output-sized relayout only (channel padding already gone).
    # TODO(synk): fuse this transpose into kernel 2's out_spec (write
    # (Cout, P) blocks) to remove the last XLA relayout pass.
    return y[:N].reshape(N, OH, OW, Cout).transpose(0, 3, 1, 2)


# ---------------------------------------------------------------------------
# Reference in plain JAX (matches PyTorch conv + training-mode BN + ReLU).
# ---------------------------------------------------------------------------
def reference(x, weight, bias, gamma, beta, *, stride, padding, dilation):
    conv = jax.lax.conv_general_dilated(
        x, weight,
        window_strides=(stride, stride),
        padding=[(padding, padding), (padding, padding)],
        rhs_dilation=(dilation, dilation),
        dimension_numbers=("NCHW", "OIHW", "NCHW"),
    ) + bias.reshape(1, -1, 1, 1)
    mean = conv.mean(axis=(0, 2, 3), keepdims=True)
    var = ((conv - mean) ** 2).mean(axis=(0, 2, 3), keepdims=True)  # biased
    y = (conv - mean) / jnp.sqrt(var + EPS)
    y = y * gamma.reshape(1, -1, 1, 1) + beta.reshape(1, -1, 1, 1)
    return jnp.maximum(y, 0.0)


if __name__ == "__main__":
    # Module config: conv2normRelu(in_c, out_c, kernel_size, stride, padding,
    # dilation, bias).
    in_c, out_c = 4, 8
    kernel_size, stride, padding, dilation = 3, 1, 1, 1

    key = jax.random.PRNGKey(0)
    kx, kw, kb = jax.random.split(key, 3)

    # Input (NCHW, like PyTorch): batch=2, channels=4, spatial=16
    x = jax.random.normal(kx, (2, in_c, 16, 16), dtype=jnp.float32)

    fan_in = in_c * kernel_size * kernel_size
    weight = jax.random.normal(
        kw, (out_c, in_c, kernel_size, kernel_size), dtype=jnp.float32
    ) * (1.0 / np.sqrt(fan_in))
    bias = jax.random.normal(kb, (out_c,), dtype=jnp.float32) * 0.1
    gamma = jnp.ones((out_c,), dtype=jnp.float32)   # BatchNorm2d default
    beta = jnp.zeros((out_c,), dtype=jnp.float32)   # BatchNorm2d default

    run = jax.jit(functools.partial(
        conv2_norm_relu, stride=stride, padding=padding, dilation=dilation))
    out = jax.block_until_ready(run(x, weight, bias, gamma, beta))

    ref = jax.block_until_ready(
        reference(x, weight, bias, gamma, beta,
                  stride=stride, padding=padding, dilation=dilation))

    max_err = float(jnp.max(jnp.abs(out - ref)))
    assert out.shape == (2, out_c, 16, 16), out.shape
    assert max_err < 1e-3, f"mismatch vs reference: {max_err}"
    print("KERNEL_OK")
</pallas_src>

<mosaic_0001>
module attributes {stable_mosaic.version = 11 : i64} {
  func.func @conv_stats_kernel(%arg0: i32, %arg1: memref<1x18x18x4xf32, #tpu.memory_space<vmem>>, %arg2: memref<3x3x4x8xf32, #tpu.memory_space<vmem>>, %arg3: memref<1x256x8xf32, #tpu.memory_space<vmem>>, %arg4: memref<1x16x8xf32, #tpu.memory_space<vmem>>) attributes {dimension_semantics = [#tpu.dimension_semantics<parallel>], iteration_bounds = array<i64: 2>, scalar_prefetch = 0 : i64, scratch_operands = 0 : i64, tpu.core_type = #tpu.core_type<tc>, window_params = [{transform_indices = @transform_0, window_bounds = array<i64: 1, 18, 18, 4>}, {pipeline_mode = #tpu.pipeline_mode<synchronous>, transform_indices = @transform_1, window_bounds = array<i64: 3, 3, 4, 8>}, {transform_indices = @transform_2, window_bounds = array<i64: 1, 256, 8>}, {transform_indices = @transform_3, window_bounds = array<i64: 1, 16, 8>}]} {
    %cst = arith.constant 0.000000e+00 : f32
    %0 = vector.broadcast %cst : f32 to vector<256x8xf32>
    %c0 = arith.constant 0 : index
    %c0_0 = arith.constant 0 : index
    %c0_1 = arith.constant 0 : index
    %c0_2 = arith.constant 0 : index
    %1 = vector.load %arg1[%c0, %c0_0, %c0_1, %c0_2] : memref<1x18x18x4xf32, #tpu.memory_space<vmem>>, vector<1x16x16x4xf32>
    %2 = vector.shape_cast %1 : vector<1x16x16x4xf32> to vector<16x16x4xf32>
    %3 = vector.shape_cast %2 : vector<16x16x4xf32> to vector<256x4xf32>
    %c0_3 = arith.constant 0 : index
    %c0_4 = arith.constant 0 : index
    %c0_5 = arith.constant 0 : index
    %c0_6 = arith.constant 0 : index
    %4 = vector.load %arg2[%c0_3, %c0_4, %c0_5, %c0_6] : memref<3x3x4x8xf32, #tpu.memory_space<vmem>>, vector<1x1x4x8xf32>
    %5 = vector.shape_cast %4 : vector<1x1x4x8xf32> to vector<4x8xf32>
    %cst_7 = arith.constant dense<0.000000e+00> : vector<256x8xf32>
    %6 = tpu.matmul %3, %5, %cst_7 {dimension_numbers = #tpu.dot_dimension_numbers<[1], [0], [0], [1], [0, 0, 1, 1], [], []>} : vector<256x4xf32>, vector<4x8xf32>, vector<256x8xf32> -> vector<256x8xf32>
    %7 = arith.addf %0, %6 : vector<256x8xf32>
    %c0_8 = arith.constant 0 : index
    %c0_9 = arith.constant 0 : index
    %c1 = arith.constant 1 : index
    %c0_10 = arith.constant 0 : index
    %8 = vector.load %arg1[%c0_8, %c0_9, %c1, %c0_10] : memref<1x18x18x4xf32, #tpu.memory_space<vmem>>, vector<1x16x16x4xf32>
    %9 = vector.shape_cast %8 : vector<1x16x16x4xf32> to vector<16x16x4xf32>
    %10 = vector.shape_cast %9 : vector<16x16x4xf32> to vector<256x4xf32>
    %c0_11 = arith.constant 0 : index
    %c1_12 = arith.constant 1 : index
    %c0_13 = arith.constant 0 : index
    %c0_14 = arith.constant 0 : index
    %11 = vector.load %arg2[%c0_11, %c1_12, %c0_13, %c0_14] : memref<3x3x4x8xf32, #tpu.memory_space<vmem>>, vector<1x1x4x8xf32>
    %12 = vector.shape_cast %11 : vector<1x1x4x8xf32> to vector<4x8xf32>
    %cst_15 = arith.constant dense<0.000000e+00> : vector<256x8xf32>
    %13 = tpu.matmul %10, %12, %cst_15 {dimension_numbers = #tpu.dot_dimension_numbers<[1], [0], [0], [1], [0, 0, 1, 1], [], []>} : vector<256x4xf32>, vector<4x8xf32>, vector<256x8xf32> -> vector<256x8xf32>
    %14 = arith.addf %7, %13 : vector<256x8xf32>
    %c0_16 = arith.constant 0 : index
    %c0_17 = arith.constant 0 : index
    %c2 = arith.constant 2 : index
    %c0_18 = arith.constant 0 : index
    %15 = vector.load %arg1[%c0_16, %c0_17, %c2, %c0_18] : memref<1x18x18x4xf32, #tpu.memory_space<vmem>>, vector<1x16x16x4xf32>
    %16 = vector.shape_cast %15 : vector<1x16x16x4xf32> to vector<16x16x4xf32>
    %17 = vector.shape_cast %16 : vector<16x16x4xf32> to vector<256x4xf32>
    %c0_19 = arith.constant 0 : index
    %c2_20 = arith.constant 2 : index
    %c0_21 = arith.constant 0 : index
    %c0_22 = arith.constant 0 : index
    %18 = vector.load %arg2[%c0_19, %c2_20, %c0_21, %c0_22] : memref<3x3x4x8xf32, #tpu.memory_space<vmem>>, vector<1x1x4x8xf32>
    %19 = vector.shape_cast %18 : vector<1x1x4x8xf32> to vector<4x8xf32>
    %cst_23 = arith.constant dense<0.000000e+00> : vector<256x8xf32>
    %20 = tpu.matmul %17, %19, %cst_23 {dimension_numbers = #tpu.dot_dimension_numbers<[1], [0], [0], [1], [0, 0, 1, 1], [], []>} : vector<256x4xf32>, vector<4x8xf32>, vector<256x8xf32> -> vector<256x8xf32>
    %21 = arith.addf %14, %20 : vector<256x8xf32>
    %c0_24 = arith.constant 0 : index
    %c1_25 = arith.constant 1 : index
    %c0_26 = arith.constant 0 : index
    %c0_27 = arith.constant 0 : index
    %22 = vector.load %arg1[%c0_24, %c1_25, %c0_26, %c0_27] : memref<1x18x18x4xf32, #tpu.memory_space<vmem>>, vector<1x16x16x4xf32>
    %23 = vector.shape_cast %22 : vector<1x16x16x4xf32> to vector<16x16x4xf32>
    %24 = vector.shape_cast %23 : vector<16x16x4xf32> to vector<256x4xf32>
    %c1_28 = arith.constant 1 : index
    %c0_29 = arith.constant 0 : index
    %c0_30 = arith.constant 0 : index
    %c0_31 = arith.constant 0 : index
    %25 = vector.load %arg2[%c1_28, %c0_29, %c0_30, %c0_31] : memref<3x3x4x8xf32, #tpu.memory_space<vmem>>, vector<1x1x4x8xf32>
    %26 = vector.shape_cast %25 : vector<1x1x4x8xf32> to vector<4x8xf32>
    %cst_32 = arith.constant dense<0.000000e+00> : vector<256x8xf32>
    %27 = tpu.matmul %24, %26, %cst_32 {dimension_numbers = #tpu.dot_dimension_numbers<[1], [0], [0], [1], [0, 0, 1, 1], [], []>} : vector<256x4xf32>, vector<4x8xf32>, vector<256x8xf32> -> vector<256x8xf32>
    %28 = arith.addf %21, %27 : vector<256x8xf32>
    %c0_33 = arith.constant 0 : index
    %c1_34 = arith.constant 1 : index
    %c1_35 = arith.constant 1 : index
    %c0_36 = arith.constant 0 : index
    %29 = vector.load %arg1[%c0_33, %c1_34, %c1_35, %c0_36] : memref<1x18x18x4xf32, #tpu.memory_space<vmem>>, vector<1x16x16x4xf32>
    %30 = vector.shape_cast %29 : vector<1x16x16x4xf32> to vector<16x16x4xf32>
    %31 = vector.shape_cast %30 : vector<16x16x4xf32> to vector<256x4xf32>
    %c1_37 = arith.constant 1 : index
    %c1_38 = arith.constant 1 : index
    %c0_39 = arith.constant 0 : index
    %c0_40 = arith.constant 0 : index
    %32 = vector.load %arg2[%c1_37, %c1_38, %c0_39, %c0_40] : memref<3x3x4x8xf32, #tpu.memory_space<vmem>>, vector<1x1x4x8xf32>
    %33 = vector.shape_cast %32 : vector<1x1x4x8xf32> to vector<4x8xf32>
    %cst_41 = arith.constant dense<0.000000e+00> : vector<256x8xf32>
    %34 = tpu.matmul %31, %33, %cst_41 {dimension_numbers = #tpu.dot_dimension_numbers<[1], [0], [0], [1], [0, 0, 1, 1], [], []>} : vector<256x4xf32>, vector<4x8xf32>, vector<256x8xf32> -> vector<256x8xf32>
    %35 = arith.addf %28, %34 : vector<256x8xf32>
    %c0_42 = arith.constant 0 : index
    %c1_43 = arith.constant 1 : index
    %c2_44 = arith.constant 2 : index
    %c0_45 = arith.constant 0 : index
    %36 = vector.load %arg1[%c0_42, %c1_43, %c2_44, %c0_45] : memref<1x18x18x4xf32, #tpu.memory_space<vmem>>, vector<1x16x16x4xf32>
    %37 = vector.shape_cast %36 : vector<1x16x16x4xf32> to vector<16x16x4xf32>
    %38 = vector.shape_cast %37 : vector<16x16x4xf32> to vector<256x4xf32>
    %c1_46 = arith.constant 1 : index
    %c2_47 = arith.constant 2 : index
    %c0_48 = arith.constant 0 : index
    %c0_49 = arith.constant 0 : index
    %39 = vector.load %arg2[%c1_46, %c2_47, %c0_48, %c0_49] : memref<3x3x4x8xf32, #tpu.memory_space<vmem>>, vector<1x1x4x8xf32>
    %40 = vector.shape_cast %39 : vector<1x1x4x8xf32> to vector<4x8xf32>
    %cst_50 = arith.constant dense<0.000000e+00> : vector<256x8xf32>
    %41 = tpu.matmul %38, %40, %cst_50 {dimension_numbers = #tpu.dot_dimension_numbers<[1], [0], [0], [1], [0, 0, 1, 1], [], []>} : vector<256x4xf32>, vector<4x8xf32>, vector<256x8xf32> -> vector<256x8xf32>
    %42 = arith.addf %35, %41 : vector<256x8xf32>
    %c0_51 = arith.constant 0 : index
    %c2_52 = arith.constant 2 : index
    %c0_53 = arith.constant 0 : index
    %c0_54 = arith.constant 0 : index
    %43 = vector.load %arg1[%c0_51, %c2_52, %c0_53, %c0_54] : memref<1x18x18x4xf32, #tpu.memory_space<vmem>>, vector<1x16x16x4xf32>
    %44 = vector.shape_cast %43 : vector<1x16x16x4xf32> to vector<16x16x4xf32>
    %45 = vector.shape_cast %44 : vector<16x16x4xf32> to vector<256x4xf32>
    %c2_55 = arith.constant 2 : index
    %c0_56 = arith.constant 0 : index
    %c0_57 = arith.constant 0 : index
    %c0_58 = arith.constant 0 : index
    %46 = vector.load %arg2[%c2_55, %c0_56, %c0_57, %c0_58] : memref<3x3x4x8xf32, #tpu.memory_space<vmem>>, vector<1x1x4x8xf32>
    %47 = vector.shape_cast %46 : vector<1x1x4x8xf32> to vector<4x8xf32>
    %cst_59 = arith.constant dense<0.000000e+00> : vector<256x8xf32>
    %48 = tpu.matmul %45, %47, %cst_59 {dimension_numbers = #tpu.dot_dimension_numbers<[1], [0], [0], [1], [0, 0, 1, 1], [], []>} : vector<256x4xf32>, vector<4x8xf32>, vector<256x8xf32> -> vector<256x8xf32>
    %49 = arith.addf %42, %48 : vector<256x8xf32>
    %c0_60 = arith.constant 0 : index
    %c2_61 = arith.constant 2 : index
    %c1_62 = arith.constant 1 : index
    %c0_63 = arith.constant 0 : index
    %50 = vector.load %arg1[%c0_60, %c2_61, %c1_62, %c0_63] : memref<1x18x18x4xf32, #tpu.memory_space<vmem>>, vector<1x16x16x4xf32>
    %51 = vector.shape_cast %50 : vector<1x16x16x4xf32> to vector<16x16x4xf32>
    %52 = vector.shape_cast %51 : vector<16x16x4xf32> to vector<256x4xf32>
    %c2_64 = arith.constant 2 : index
    %c1_65 = arith.constant 1 : index
    %c0_66 = arith.constant 0 : index
    %c0_67 = arith.constant 0 : index
    %53 = vector.load %arg2[%c2_64, %c1_65, %c0_66, %c0_67] : memref<3x3x4x8xf32, #tpu.memory_space<vmem>>, vector<1x1x4x8xf32>
    %54 = vector.shape_cast %53 : vector<1x1x4x8xf32> to vector<4x8xf32>
    %cst_68 = arith.constant dense<0.000000e+00> : vector<256x8xf32>
    %55 = tpu.matmul %52, %54, %cst_68 {dimension_numbers = #tpu.dot_dimension_numbers<[1], [0], [0], [1], [0, 0, 1, 1], [], []>} : vector<256x4xf32>, vector<4x8xf32>, vector<256x8xf32> -> vector<256x8xf32>
    %56 = arith.addf %49, %55 : vector<256x8xf32>
    %c0_69 = arith.constant 0 : index
    %c2_70 = arith.constant 2 : index
    %c2_71 = arith.constant 2 : index
    %c0_72 = arith.constant 0 : index
    %57 = vector.load %arg1[%c0_69, %c2_70, %c2_71, %c0_72] : memref<1x18x18x4xf32, #tpu.memory_space<vmem>>, vector<1x16x16x4xf32>
    %58 = vector.shape_cast %57 : vector<1x16x16x4xf32> to vector<16x16x4xf32>
    %59 = vector.shape_cast %58 : vector<16x16x4xf32> to vector<256x4xf32>
    %c2_73 = arith.constant 2 : index
    %c2_74 = arith.constant 2 : index
    %c0_75 = arith.constant 0 : index
    %c0_76 = arith.constant 0 : index
    %60 = vector.load %arg2[%c2_73, %c2_74, %c0_75, %c0_76] : memref<3x3x4x8xf32, #tpu.memory_space<vmem>>, vector<1x1x4x8xf32>
    %61 = vector.shape_cast %60 : vector<1x1x4x8xf32> to vector<4x8xf32>
    %cst_77 = arith.constant dense<0.000000e+00> : vector<256x8xf32>
    %62 = tpu.matmul %59, %61, %cst_77 {dimension_numbers = #tpu.dot_dimension_numbers<[1], [0], [0], [1], [0, 0, 1, 1], [], []>} : vector<256x4xf32>, vector<4x8xf32>, vector<256x8xf32> -> vector<256x8xf32>
    %63 = arith.addf %56, %62 : vector<256x8xf32>
    %c0_78 = arith.constant 0 : index
    %c0_79 = arith.constant 0 : index
    %c0_80 = arith.constant 0 : index
    %64 = vector.load %arg3[%c0_78, %c0_79, %c0_80] : memref<1x256x8xf32, #tpu.memory_space<vmem>>, vector<1x256x8xf32>
    %65 = vector.shape_cast %64 : vector<1x256x8xf32> to vector<256x8xf32>
    %66 = vector.shape_cast %63 : vector<256x8xf32> to vector<1x256x8xf32>
    tpu.vector_store %arg3[%c0_78, %c0_79, %c0_80], %66 {strides = array<i32>} : memref<1x256x8xf32, #tpu.memory_space<vmem>>, vector<1x256x8xf32>,
    %67 = vector.shape_cast %63 : vector<256x8xf32> to vector<32x8x8xf32>
    %cst_81 = arith.constant dense<0.000000e+00> : vector<8x8xf32>
    %68 = vector.multi_reduction <add>, %67, %cst_81 [0] : vector<32x8x8xf32> to vector<8x8xf32>
    %cst_82 = arith.constant dense<0.000000e+00> : vector<8xf32>
    %69 = vector.multi_reduction <add>, %68, %cst_82 [0] : vector<8x8xf32> to vector<8xf32>
    %70 = vector.shape_cast %69 : vector<8xf32> to vector<1x8xf32>
    %cst_83 = arith.constant 3.906250e-03 : f32
    %71 = vector.broadcast %cst_83 : f32 to vector<1x8xf32>
    %72 = arith.mulf %70, %71 : vector<1x8xf32>
    %73 = vector.broadcast %72 : vector<1x8xf32> to vector<256x8xf32>
    %74 = arith.subf %63, %73 : vector<256x8xf32>
    %75 = arith.mulf %74, %74 : vector<256x8xf32>
    %76 = vector.shape_cast %75 : vector<256x8xf32> to vector<32x8x8xf32>
    %cst_84 = arith.constant dense<0.000000e+00> : vector<8x8xf32>
    %77 = vector.multi_reduction <add>, %76, %cst_84 [0] : vector<32x8x8xf32> to vector<8x8xf32>
    %c0_85 = arith.constant 0 : index
    %c0_86 = arith.constant 0 : index
    %c0_87 = arith.constant 0 : index
    %78 = vector.load %arg4[%c0_85, %c0_86, %c0_87] : memref<1x16x8xf32, #tpu.memory_space<vmem>>, vector<1x8x8xf32>
    %79 = vector.shape_cast %78 : vector<1x8x8xf32> to vector<8x8xf32>
    %80 = vector.shape_cast %68 : vector<8x8xf32> to vector<1x8x8xf32>
    tpu.vector_store %arg4[%c0_85, %c0_86, %c0_87], %80 {strides = array<i32>} : memref<1x16x8xf32, #tpu.memory_space<vmem>>, vector<1x8x8xf32>,
    %c0_88 = arith.constant 0 : index
    %c8 = arith.constant 8 : index
    %c0_89 = arith.constant 0 : index
    %81 = vector.load %arg4[%c0_88, %c8, %c0_89] : memref<1x16x8xf32, #tpu.memory_space<vmem>>, vector<1x8x8xf32>
    %82 = vector.shape_cast %81 : vector<1x8x8xf32> to vector<8x8xf32>
    %83 = vector.shape_cast %77 : vector<8x8xf32> to vector<1x8x8xf32>
    tpu.vector_store %arg4[%c0_88, %c8, %c0_89], %83 {strides = array<i32>} : memref<1x16x8xf32, #tpu.memory_space<vmem>>, vector<1x8x8xf32>,
    return
  }
  func.func @transform_0(%arg0: i32) -> (i32, i32, i32, i32) {
    %c0_i32 = arith.constant 0 : i32
    %c0_i32_0 = arith.constant 0 : i32
    %c0_i32_1 = arith.constant 0 : i32
    %c0_i32_2 = arith.constant 0 : i32
    return %arg0, %c0_i32, %c0_i32_0, %c0_i32_1 : i32, i32, i32, i32
  }
  func.func @transform_1(%arg0: i32) -> (i32, i32, i32, i32) {
    %c0_i32 = arith.constant 0 : i32
    %c0_i32_0 = arith.constant 0 : i32
    %c0_i32_1 = arith.constant 0 : i32
    %c0_i32_2 = arith.constant 0 : i32
    %c0_i32_3 = arith.constant 0 : i32
    return %c0_i32, %c0_i32_0, %c0_i32_1, %c0_i32_2 : i32, i32, i32, i32
  }
  func.func @transform_2(%arg0: i32) -> (i32, i32, i32) {
    %c0_i32 = arith.constant 0 : i32
    %c0_i32_0 = arith.constant 0 : i32
    %c0_i32_1 = arith.constant 0 : i32
    return %arg0, %c0_i32, %c0_i32_0 : i32, i32, i32
  }
  func.func @transform_3(%arg0: i32) -> (i32, i32, i32) {
    %c0_i32 = arith.constant 0 : i32
    %c0_i32_0 = arith.constant 0 : i32
    %c0_i32_1 = arith.constant 0 : i32
    return %arg0, %c0_i32, %c0_i32_0 : i32, i32, i32
  }
}

module attributes {stable_mosaic.version = 11 : i64} {
  func.func @bn_relu_kernel(%arg0: i32, %arg1: memref<2x256x8xf32, #tpu.memory_space<vmem>>, %arg2: memref<1x1x8xf32, #tpu.memory_space<vmem>>, %arg3: memref<1x1x8xf32, #tpu.memory_space<vmem>>, %arg4: memref<2x256x8xf32, #tpu.memory_space<vmem>>) attributes {dimension_semantics = [#tpu.dimension_semantics<parallel>], iteration_bounds = array<i64: 1>, scalar_prefetch = 0 : i64, scratch_operands = 0 : i64, tpu.core_type = #tpu.core_type<tc>, window_params = [{transform_indices = @transform_0, window_bounds = array<i64: 2, 256, 8>}, {pipeline_mode = #tpu.pipeline_mode<synchronous>, transform_indices = @transform_1, window_bounds = array<i64: 1, 1, 8>}, {pipeline_mode = #tpu.pipeline_mode<synchronous>, transform_indices = @transform_2, window_bounds = array<i64: 1, 1, 8>}, {transform_indices = @transform_3, window_bounds = array<i64: 2, 256, 8>}]} {
    %c0 = arith.constant 0 : index
    %c0_0 = arith.constant 0 : index
    %c0_1 = arith.constant 0 : index
    %0 = vector.load %arg1[%c0, %c0_0, %c0_1] : memref<2x256x8xf32, #tpu.memory_space<vmem>>, vector<2x256x8xf32>
    %c0_2 = arith.constant 0 : index
    %c0_3 = arith.constant 0 : index
    %c0_4 = arith.constant 0 : index
    %1 = vector.load %arg2[%c0_2, %c0_3, %c0_4] : memref<1x1x8xf32, #tpu.memory_space<vmem>>, vector<1x1x8xf32>
    %2 = vector.broadcast %1 : vector<1x1x8xf32> to vector<2x256x8xf32>
    %3 = arith.mulf %0, %2 : vector<2x256x8xf32>
    %c0_5 = arith.constant 0 : index
    %c0_6 = arith.constant 0 : index
    %c0_7 = arith.constant 0 : index
    %4 = vector.load %arg3[%c0_5, %c0_6, %c0_7] : memref<1x1x8xf32, #tpu.memory_space<vmem>>, vector<1x1x8xf32>
    %5 = vector.broadcast %4 : vector<1x1x8xf32> to vector<2x256x8xf32>
    %6 = arith.addf %3, %5 : vector<2x256x8xf32>
    %cst = arith.constant 0.000000e+00 : f32
    %7 = vector.broadcast %cst : f32 to vector<2x256x8xf32>
    %8 = arith.maximumf %6, %7 : vector<2x256x8xf32>
    %c0_8 = arith.constant 0 : index
    %c0_9 = arith.constant 0 : index
    %c0_10 = arith.constant 0 : index
    %9 = vector.load %arg4[%c0_8, %c0_9, %c0_10] : memref<2x256x8xf32, #tpu.memory_space<vmem>>, vector<2x256x8xf32>
    tpu.vector_store %arg4[%c0_8, %c0_9, %c0_10], %8 {strides = array<i32>} : memref<2x256x8xf32, #tpu.memory_space<vmem>>, vector<2x256x8xf32>,
    return
  }
  func.func @transform_0(%arg0: i32) -> (i32, i32, i32) {
    %c0_i32 = arith.constant 0 : i32
    %c0_i32_0 = arith.constant 0 : i32
    %c0_i32_1 = arith.constant 0 : i32
    return %arg0, %c0_i32, %c0_i32_0 : i32, i32, i32
  }
  func.func @transform_1(%arg0: i32) -> (i32, i32, i32) {
    %c0_i32 = arith.constant 0 : i32
    %c0_i32_0 = arith.constant 0 : i32
    %c0_i32_1 = arith.constant 0 : i32
    %c0_i32_2 = arith.constant 0 : i32
    return %c0_i32, %c0_i32_0, %c0_i32_1 : i32, i32, i32
  }
  func.func @transform_2(%arg0: i32) -> (i32, i32, i32) {
    %c0_i32 = arith.constant 0 : i32
    %c0_i32_0 = arith.constant 0 : i32
    %c0_i32_1 = arith.constant 0 : i32
    %c0_i32_2 = arith.constant 0 : i32
    return %c0_i32, %c0_i32_0, %c0_i32_1 : i32, i32, i32
  }
  func.func @transform_3(%arg0: i32) -> (i32, i32, i32) {
    %c0_i32 = arith.constant 0 : i32
    %c0_i32_0 = arith.constant 0 : i32
    %c0_i32_1 = arith.constant 0 : i32
    return %arg0, %c0_i32, %c0_i32_0 : i32, i32, i32
  }
}

</mosaic_0001>

<llo_original>
// kernel: conv2_norm_relu.3
$region0: #{conv2_norm_relu.3}
  #allocation0 [shape = 'u32[]', space=smem, size = 0x4, offset = 0x4, fixed_abs, tag = 'smem constant byte address 0x4 - core index']
  #allocation1 [shape = 'u32[144,128]{1,0:T(1,128)}', space=vmem, size = 0x12000, scoped, tag = 'internal scratch']
  %s0 = inlined_call_operand.vmem [shape: f32[2,256,8], index: 0, kind: input, shape index: {}, may-alias: {0,3}]
  %s1 = inlined_call_operand.vmem [shape: f32[1,1,8], index: 1, kind: input, shape index: {}]
  %s2 = inlined_call_operand.vmem [shape: f32[1,1,8], index: 2, kind: input, shape index: {}]
  %s3 = inlined_call_operand.vmem [shape: f32[2,256,8], index: 3, kind: output, shape index: {}, may-alias: {0,3}]
  %s4 = sld [smem:[#allocation0]]
  $region22: #{conv2_norm_relu.3} parent=0
    _
  %s6 = ssub.s32 1, %s4
  %s7 = scalar_select 0, %s6, %s4
  // Predicated region
  $region2: #{conv2_norm_relu.3} parent=0 // pred_check
    _
  $region3: #{conv2_norm_relu.3} parent=0 // pred_check_branch
    %9 = sbr.rel (0) target = $region5
  $region4: #{conv2_norm_relu.3} parent=0 // pred_region
    _
  $region5: #{conv2_norm_relu.3} parent=0 // pred_fallthru
    _
  // Predicated region
  $region6: #{conv2_norm_relu.3} parent=0 // pred_check
    _
  $region7: #{conv2_norm_relu.3} parent=0 // pred_check_branch
    %11 = sbr.rel (0) target = $region9
  $region8: #{conv2_norm_relu.3} parent=0 // pred_region
    _
  $region9: #{conv2_norm_relu.3} parent=0 // pred_fallthru
    _
  // Predicated region
  $region10: #{conv2_norm_relu.3} parent=0 // pred_check
    _
  $region11: #{conv2_norm_relu.3} parent=0 // pred_check_branch
    %13 = sbr.rel (0) target = $region13
  $region12: #{conv2_norm_relu.3} parent=0 // pred_region
    _
  $region13: #{conv2_norm_relu.3} parent=0 // pred_fallthru
    _
  %v14 = vld [vmem:[%s0] sm:$0xff]
  %v15 = vld [vmem:[%s0 + $0x8] sm:$0xff]
  %v16 = vld [vmem:[%s0 + $0x10] sm:$0xff]
  %v17 = vld [vmem:[%s0 + $0x18] sm:$0xff]
  %v18 = vld [vmem:[%s0 + $0x20] sm:$0xff]
  %v19 = vld [vmem:[%s0 + $0x28] sm:$0xff]
  %v20 = vld [vmem:[%s0 + $0x30] sm:$0xff]
  %v21 = vld [vmem:[%s0 + $0x38] sm:$0xff]
  %v22 = vld [vmem:[%s0 + $0x40] sm:$0xff]
  %v23 = vld [vmem:[%s0 + $0x48] sm:$0xff]
  %v24 = vld [vmem:[%s0 + $0x50] sm:$0xff]
  %v25 = vld [vmem:[%s0 + $0x58] sm:$0xff]
  %v26 = vld [vmem:[%s0 + $0x60] sm:$0xff]
  %v27 = vld [vmem:[%s0 + $0x68] sm:$0xff]
  %v28 = vld [vmem:[%s0 + $0x70] sm:$0xff]
  %v29 = vld [vmem:[%s0 + $0x78] sm:$0xff]
  %v30 = vld [vmem:[%s0 + $0x80] sm:$0xff]
  %v31 = vld [vmem:[%s0 + $0x88] sm:$0xff]
  %v32 = vld [vmem:[%s0 + $0x90] sm:$0xff]
  %v33 = vld [vmem:[%s0 + $0x98] sm:$0xff]
  %v34 = vld [vmem:[%s0 + $0xa0] sm:$0xff]
  %v35 = vld [vmem:[%s0 + $0xa8] sm:$0xff]
  %v36 = vld [vmem:[%s0 + $0xb0] sm:$0xff]
  %v37 = vld [vmem:[%s0 + $0xb8] sm:$0xff]
  %v38 = vld [vmem:[%s0 + $0xc0] sm:$0xff]
  %v39 = vld [vmem:[%s0 + $0xc8] sm:$0xff]
  %v40 = vld [vmem:[%s0 + $0xd0] sm:$0xff]
  %v41 = vld [vmem:[%s0 + $0xd8] sm:$0xff]
  %v42 = vld [vmem:[%s0 + $0xe0] sm:$0xff]
  %v43 = vld [vmem:[%s0 + $0xe8] sm:$0xff]
  %v44 = vld [vmem:[%s0 + $0xf0] sm:$0xff]
  %v45 = vld [vmem:[%s0 + $0xf8] sm:$0xff]
  %v46 = vld [vmem:[%s0 + $0x100] sm:$0xff]
  %v47 = vld [vmem:[%s0 + $0x108] sm:$0xff]
  %v48 = vld [vmem:[%s0 + $0x110] sm:$0xff]
  %v49 = vld [vmem:[%s0 + $0x118] sm:$0xff]
  %v50 = vld [vmem:[%s0 + $0x120] sm:$0xff]
  %v51 = vld [vmem:[%s0 + $0x128] sm:$0xff]
  %v52 = vld [vmem:[%s0 + $0x130] sm:$0xff]
  %v53 = vld [vmem:[%s0 + $0x138] sm:$0xff]
  %v54 = vld [vmem:[%s0 + $0x140] sm:$0xff]
  %v55 = vld [vmem:[%s0 + $0x148] sm:$0xff]
  %v56 = vld [vmem:[%s0 + $0x150] sm:$0xff]
  %v57 = vld [vmem:[%s0 + $0x158] sm:$0xff]
  %v58 = vld [vmem:[%s0 + $0x160] sm:$0xff]
  %v59 = vld [vmem:[%s0 + $0x168] sm:$0xff]
  %v60 = vld [vmem:[%s0 + $0x170] sm:$0xff]
  %v61 = vld [vmem:[%s0 + $0x178] sm:$0xff]
  %v62 = vld [vmem:[%s0 + $0x180] sm:$0xff]
  %v63 = vld [vmem:[%s0 + $0x188] sm:$0xff]
  %v64 = vld [vmem:[%s0 + $0x190] sm:$0xff]
  %v65 = vld [vmem:[%s0 + $0x198] sm:$0xff]
  %v66 = vld [vmem:[%s0 + $0x1a0] sm:$0xff]
  %v67 = vld [vmem:[%s0 + $0x1a8] sm:$0xff]
  %v68 = vld [vmem:[%s0 + $0x1b0] sm:$0xff]
  %v69 = vld [vmem:[%s0 + $0x1b8] sm:$0xff]
  %v70 = vld [vmem:[%s0 + $0x1c0] sm:$0xff]
  %v71 = vld [vmem:[%s0 + $0x1c8] sm:$0xff]
  %v72 = vld [vmem:[%s0 + $0x1d0] sm:$0xff]
  %v73 = vld [vmem:[%s0 + $0x1d8] sm:$0xff]
  %v74 = vld [vmem:[%s0 + $0x1e0] sm:$0xff]
  %v75 = vld [vmem:[%s0 + $0x1e8] sm:$0xff]
  %v76 = vld [vmem:[%s0 + $0x1f0] sm:$0xff]
  %v77 = vld [vmem:[%s0 + $0x1f8] sm:$0xff]
  %v78 = vld [vmem:[%s1] sm:$0x1]
  %v80 = vlaneseq
  %v81 = vshrl.u32 %v80, 7
  %v82 = vsub.s32 0, %v81
  %v83 = vrot.slane %v78, %v82
  %v85 = vmul.f32 %v14, %v83
  %v86 = vmul.f32 %v15, %v83
  %v87 = vmul.f32 %v16, %v83
  %v88 = vmul.f32 %v17, %v83
  %v89 = vmul.f32 %v18, %v83
  %v90 = vmul.f32 %v19, %v83
  %v91 = vmul.f32 %v20, %v83
  %v92 = vmul.f32 %v21, %v83
  %v93 = vmul.f32 %v22, %v83
  %v94 = vmul.f32 %v23, %v83
  %v95 = vmul.f32 %v24, %v83
  %v96 = vmul.f32 %v25, %v83
  %v97 = vmul.f32 %v26, %v83
  %v98 = vmul.f32 %v27, %v83
  %v99 = vmul.f32 %v28, %v83
  %v100 = vmul.f32 %v29, %v83
  %v101 = vmul.f32 %v30, %v83
  %v102 = vmul.f32 %v31, %v83
  %v103 = vmul.f32 %v32, %v83
  %v104 = vmul.f32 %v33, %v83
  %v105 = vmul.f32 %v34, %v83
  %v106 = vmul.f32 %v35, %v83
  %v107 = vmul.f32 %v36, %v83
  %v108 = vmul.f32 %v37, %v83
  %v109 = vmul.f32 %v38, %v83
  %v110 = vmul.f32 %v39, %v83
  %v111 = vmul.f32 %v40, %v83
  %v112 = vmul.f32 %v41, %v83
  %v113 = vmul.f32 %v42, %v83
  %v114 = vmul.f32 %v43, %v83
  %v115 = vmul.f32 %v44, %v83
  %v116 = vmul.f32 %v45, %v83
  %v117 = vmul.f32 %v46, %v83
  %v118 = vmul.f32 %v47, %v83
  %v119 = vmul.f32 %v48, %v83
  %v120 = vmul.f32 %v49, %v83
  %v121 = vmul.f32 %v50, %v83
  %v122 = vmul.f32 %v51, %v83
  %v123 = vmul.f32 %v52, %v83
  %v124 = vmul.f32 %v53, %v83
  %v125 = vmul.f32 %v54, %v83
  %v126 = vmul.f32 %v55, %v83
  %v127 = vmul.f32 %v56, %v83
  %v128 = vmul.f32 %v57, %v83
  %v129 = vmul.f32 %v58, %v83
  %v130 = vmul.f32 %v59, %v83
  %v131 = vmul.f32 %v60, %v83
  %v132 = vmul.f32 %v61, %v83
  %v133 = vmul.f32 %v62, %v83
  %v134 = vmul.f32 %v63, %v83
  %v135 = vmul.f32 %v64, %v83
  %v136 = vmul.f32 %v65, %v83
  %v137 = vmul.f32 %v66, %v83
  %v138 = vmul.f32 %v67, %v83
  %v139 = vmul.f32 %v68, %v83
  %v140 = vmul.f32 %v69, %v83
  %v141 = vmul.f32 %v70, %v83
  %v142 = vmul.f32 %v71, %v83
  %v143 = vmul.f32 %v72, %v83
  %v144 = vmul.f32 %v73, %v83
  %v145 = vmul.f32 %v74, %v83
  %v146 = vmul.f32 %v75, %v83
  %v147 = vmul.f32 %v76, %v83
  %v148 = vmul.f32 %v77, %v83
  %v149 = vld [vmem:[%s2] sm:$0x1]
  %v151 = vlaneseq
  %v152 = vshrl.u32 %v151, 7
  %v153 = vsub.s32 0, %v152
  %v154 = vrot.slane %v149, %v153
  %v156 = vadd.f32 %v85, %v154
  %v157 = vadd.f32 %v86, %v154
  %v158 = vadd.f32 %v87, %v154
  %v159 = vadd.f32 %v88, %v154
  %v160 = vadd.f32 %v89, %v154
  %v161 = vadd.f32 %v90, %v154
  %v162 = vadd.f32 %v91, %v154
  %v163 = vadd.f32 %v92, %v154
  %v164 = vadd.f32 %v93, %v154
  %v165 = vadd.f32 %v94, %v154
  %v166 = vadd.f32 %v95, %v154
  %v167 = vadd.f32 %v96, %v154
  %v168 = vadd.f32 %v97, %v154
  %v169 = vadd.f32 %v98, %v154
  %v170 = vadd.f32 %v99, %v154
  %v171 = vadd.f32 %v100, %v154
  %v172 = vadd.f32 %v101, %v154
  %v173 = vadd.f32 %v102, %v154
  %v174 = vadd.f32 %v103, %v154
  %v175 = vadd.f32 %v104, %v154
  %v176 = vadd.f32 %v105, %v154
  %v177 = vadd.f32 %v106, %v154
  %v178 = vadd.f32 %v107, %v154
  %v179 = vadd.f32 %v108, %v154
  %v180 = vadd.f32 %v109, %v154
  %v181 = vadd.f32 %v110, %v154
  %v182 = vadd.f32 %v111, %v154
  %v183 = vadd.f32 %v112, %v154
  %v184 = vadd.f32 %v113, %v154
  %v185 = vadd.f32 %v114, %v154
  %v186 = vadd.f32 %v115, %v154
  %v187 = vadd.f32 %v116, %v154
  %v188 = vadd.f32 %v117, %v154
  %v189 = vadd.f32 %v118, %v154
  %v190 = vadd.f32 %v119, %v154
  %v191 = vadd.f32 %v120, %v154
  %v192 = vadd.f32 %v121, %v154
  %v193 = vadd.f32 %v122, %v154
  %v194 = vadd.f32 %v123, %v154
  %v195 = vadd.f32 %v124, %v154
  %v196 = vadd.f32 %v125, %v154
  %v197 = vadd.f32 %v126, %v154
  %v198 = vadd.f32 %v127, %v154
  %v199 = vadd.f32 %v128, %v154
  %v200 = vadd.f32 %v129, %v154
  %v201 = vadd.f32 %v130, %v154
  %v202 = vadd.f32 %v131, %v154
  %v203 = vadd.f32 %v132, %v154
  %v204 = vadd.f32 %v133, %v154
  %v205 = vadd.f32 %v134, %v154
  %v206 = vadd.f32 %v135, %v154
  %v207 = vadd.f32 %v136, %v154
  %v208 = vadd.f32 %v137, %v154
  %v209 = vadd.f32 %v138, %v154
  %v210 = vadd.f32 %v139, %v154
  %v211 = vadd.f32 %v140, %v154
  %v212 = vadd.f32 %v141, %v154
  %v213 = vadd.f32 %v142, %v154
  %v214 = vadd.f32 %v143, %v154
  %v215 = vadd.f32 %v144, %v154
  %v216 = vadd.f32 %v145, %v154
  %v217 = vadd.f32 %v146, %v154
  %v218 = vadd.f32 %v147, %v154
  %v219 = vadd.f32 %v148, %v154
  %v220 = vmax.f32 %v156, 0.0
  %v221 = vmax.f32 %v157, 0.0
  %v222 = vmax.f32 %v158, 0.0
  %v223 = vmax.f32 %v159, 0.0
  %v224 = vmax.f32 %v160, 0.0
  %v225 = vmax.f32 %v161, 0.0
  %v226 = vmax.f32 %v162, 0.0
  %v227 = vmax.f32 %v163, 0.0
  %v228 = vmax.f32 %v164, 0.0
  %v229 = vmax.f32 %v165, 0.0
  %v230 = vmax.f32 %v166, 0.0
  %v231 = vmax.f32 %v167, 0.0
  %v232 = vmax.f32 %v168, 0.0
  %v233 = vmax.f32 %v169, 0.0
  %v234 = vmax.f32 %v170, 0.0
  %v235 = vmax.f32 %v171, 0.0
  %v236 = vmax.f32 %v172, 0.0
  %v237 = vmax.f32 %v173, 0.0
  %v238 = vmax.f32 %v174, 0.0
  %v239 = vmax.f32 %v175, 0.0
  %v240 = vmax.f32 %v176, 0.0
  %v241 = vmax.f32 %v177, 0.0
  %v242 = vmax.f32 %v178, 0.0
  %v243 = vmax.f32 %v179, 0.0
  %v244 = vmax.f32 %v180, 0.0
  %v245 = vmax.f32 %v181, 0.0
  %v246 = vmax.f32 %v182, 0.0
  %v247 = vmax.f32 %v183, 0.0
  %v248 = vmax.f32 %v184, 0.0
  %v249 = vmax.f32 %v185, 0.0
  %v250 = vmax.f32 %v186, 0.0
  %v251 = vmax.f32 %v187, 0.0
  %v252 = vmax.f32 %v188, 0.0
  %v253 = vmax.f32 %v189, 0.0
  %v254 = vmax.f32 %v190, 0.0
  %v255 = vmax.f32 %v191, 0.0
  %v256 = vmax.f32 %v192, 0.0
  %v257 = vmax.f32 %v193, 0.0
  %v258 = vmax.f32 %v194, 0.0
  %v259 = vmax.f32 %v195, 0.0
  %v260 = vmax.f32 %v196, 0.0
  %v261 = vmax.f32 %v197, 0.0
  %v262 = vmax.f32 %v198, 0.0
  %v263 = vmax.f32 %v199, 0.0
  %v264 = vmax.f32 %v200, 0.0
  %v265 = vmax.f32 %v201, 0.0
  %v266 = vmax.f32 %v202, 0.0
  %v267 = vmax.f32 %v203, 0.0
  %v268 = vmax.f32 %v204, 0.0
  %v269 = vmax.f32 %v205, 0.0
  %v270 = vmax.f32 %v206, 0.0
  %v271 = vmax.f32 %v207, 0.0
  %v272 = vmax.f32 %v208, 0.0
  %v273 = vmax.f32 %v209, 0.0
  %v274 = vmax.f32 %v210, 0.0
  %v275 = vmax.f32 %v211, 0.0
  %v276 = vmax.f32 %v212, 0.0
  %v277 = vmax.f32 %v213, 0.0
  %v278 = vmax.f32 %v214, 0.0
  %v279 = vmax.f32 %v215, 0.0
  %v280 = vmax.f32 %v216, 0.0
  %v281 = vmax.f32 %v217, 0.0
  %v282 = vmax.f32 %v218, 0.0
  %v283 = vmax.f32 %v219, 0.0
  %vm284 = vcmask 64512
  %285 = vst.msk [vmem:[%s3] sm:$0xff] %vm284, %v220
  %286 = vst.msk [vmem:[%s3 + $0x8] sm:$0xff] %vm284, %v221
  %287 = vst.msk [vmem:[%s3 + $0x10] sm:$0xff] %vm284, %v222
  %288 = vst.msk [vmem:[%s3 + $0x18] sm:$0xff] %vm284, %v223
  %289 = vst.msk [vmem:[%s3 + $0x20] sm:$0xff] %vm284, %v224
  %290 = vst.msk [vmem:[%s3 + $0x28] sm:$0xff] %vm284, %v225
  %291 = vst.msk [vmem:[%s3 + $0x30] sm:$0xff] %vm284, %v226
  %292 = vst.msk [vmem:[%s3 + $0x38] sm:$0xff] %vm284, %v227
  %293 = vst.msk [vmem:[%s3 + $0x40] sm:$0xff] %vm284, %v228
  %294 = vst.msk [vmem:[%s3 + $0x48] sm:$0xff] %vm284, %v229
  %295 = vst.msk [vmem:[%s3 + $0x50] sm:$0xff] %vm284, %v230
  %296 = vst.msk [vmem:[%s3 + $0x58] sm:$0xff] %vm284, %v231
  %297 = vst.msk [vmem:[%s3 + $0x60] sm:$0xff] %vm284, %v232
  %298 = vst.msk [vmem:[%s3 + $0x68] sm:$0xff] %vm284, %v233
  %299 = vst.msk [vmem:[%s3 + $0x70] sm:$0xff] %vm284, %v234
  %300 = vst.msk [vmem:[%s3 + $0x78] sm:$0xff] %vm284, %v235
  %301 = vst.msk [vmem:[%s3 + $0x80] sm:$0xff] %vm284, %v236
  %302 = vst.msk [vmem:[%s3 + $0x88] sm:$0xff] %vm284, %v237
  %303 = vst.msk [vmem:[%s3 + $0x90] sm:$0xff] %vm284, %v238
  %304 = vst.msk [vmem:[%s3 + $0x98] sm:$0xff] %vm284, %v239
  %305 = vst.msk [vmem:[%s3 + $0xa0] sm:$0xff] %vm284, %v240
  %306 = vst.msk [vmem:[%s3 + $0xa8] sm:$0xff] %vm284, %v241
  %307 = vst.msk [vmem:[%s3 + $0xb0] sm:$0xff] %vm284, %v242
  %308 = vst.msk [vmem:[%s3 + $0xb8] sm:$0xff] %vm284, %v243
  %309 = vst.msk [vmem:[%s3 + $0xc0] sm:$0xff] %vm284, %v244
  %310 = vst.msk [vmem:[%s3 + $0xc8] sm:$0xff] %vm284, %v245
  %311 = vst.msk [vmem:[%s3 + $0xd0] sm:$0xff] %vm284, %v246
  %312 = vst.msk [vmem:[%s3 + $0xd8] sm:$0xff] %vm284, %v247
  %313 = vst.msk [vmem:[%s3 + $0xe0] sm:$0xff] %vm284, %v248
  %314 = vst.msk [vmem:[%s3 + $0xe8] sm:$0xff] %vm284, %v249
  %315 = vst.msk [vmem:[%s3 + $0xf0] sm:$0xff] %vm284, %v250
  %316 = vst.msk [vmem:[%s3 + $0xf8] sm:$0xff] %vm284, %v251
  %317 = vst.msk [vmem:[%s3 + $0x100] sm:$0xff] %vm284, %v252
  %318 = vst.msk [vmem:[%s3 + $0x108] sm:$0xff] %vm284, %v253
  %319 = vst.msk [vmem:[%s3 + $0x110] sm:$0xff] %vm284, %v254
  %320 = vst.msk [vmem:[%s3 + $0x118] sm:$0xff] %vm284, %v255
  %321 = vst.msk [vmem:[%s3 + $0x120] sm:$0xff] %vm284, %v256
  %322 = vst.msk [vmem:[%s3 + $0x128] sm:$0xff] %vm284, %v257
  %323 = vst.msk [vmem:[%s3 + $0x130] sm:$0xff] %vm284, %v258
  %324 = vst.msk [vmem:[%s3 + $0x138] sm:$0xff] %vm284, %v259
  %325 = vst.msk [vmem:[%s3 + $0x140] sm:$0xff] %vm284, %v260
  %326 = vst.msk [vmem:[%s3 + $0x148] sm:$0xff] %vm284, %v261
  %327 = vst.msk [vmem:[%s3 + $0x150] sm:$0xff] %vm284, %v262
  %328 = vst.msk [vmem:[%s3 + $0x158] sm:$0xff] %vm284, %v263
  %329 = vst.msk [vmem:[%s3 + $0x160] sm:$0xff] %vm284, %v264
  %330 = vst.msk [vmem:[%s3 + $0x168] sm:$0xff] %vm284, %v265
  %331 = vst.msk [vmem:[%s3 + $0x170] sm:$0xff] %vm284, %v266
  %332 = vst.msk [vmem:[%s3 + $0x178] sm:$0xff] %vm284, %v267
  %333 = vst.msk [vmem:[%s3 + $0x180] sm:$0xff] %vm284, %v268
  %334 = vst.msk [vmem:[%s3 + $0x188] sm:$0xff] %vm284, %v269
  %335 = vst.msk [vmem:[%s3 + $0x190] sm:$0xff] %vm284, %v270
  %336 = vst.msk [vmem:[%s3 + $0x198] sm:$0xff] %vm284, %v271
  %337 = vst.msk [vmem:[%s3 + $0x1a0] sm:$0xff] %vm284, %v272
  %338 = vst.msk [vmem:[%s3 + $0x1a8] sm:$0xff] %vm284, %v273
  %339 = vst.msk [vmem:[%s3 + $0x1b0] sm:$0xff] %vm284, %v274
  %340 = vst.msk [vmem:[%s3 + $0x1b8] sm:$0xff] %vm284, %v275
  %341 = vst.msk [vmem:[%s3 + $0x1c0] sm:$0xff] %vm284, %v276
  %342 = vst.msk [vmem:[%s3 + $0x1c8] sm:$0xff] %vm284, %v277
  %343 = vst.msk [vmem:[%s3 + $0x1d0] sm:$0xff] %vm284, %v278
  %344 = vst.msk [vmem:[%s3 + $0x1d8] sm:$0xff] %vm284, %v279
  %345 = vst.msk [vmem:[%s3 + $0x1e0] sm:$0xff] %vm284, %v280
  %346 = vst.msk [vmem:[%s3 + $0x1e8] sm:$0xff] %vm284, %v281
  %347 = vst.msk [vmem:[%s3 + $0x1f0] sm:$0xff] %vm284, %v282
  %348 = vst.msk [vmem:[%s3 + $0x1f8] sm:$0xff] %vm284, %v283
  // Predicated region
  $region14: #{conv2_norm_relu.3} parent=0 // pred_check
    _
  $region15: #{conv2_norm_relu.3} parent=0 // pred_check_branch
    %350 = sbr.rel (0) target = $region17
  $region16: #{conv2_norm_relu.3} parent=0 // pred_region
    _
  $region17: #{conv2_norm_relu.3} parent=0 // pred_fallthru
    _
  // Predicated region
  $region18: #{conv2_norm_relu.3} parent=0 // pred_check
    _
  $region19: #{conv2_norm_relu.3} parent=0 // pred_check_branch
    %352 = sbr.rel (0) target = $region21
  $region20: #{conv2_norm_relu.3} parent=0 // pred_region
    _
  $region21: #{conv2_norm_relu.3} parent=0 // pred_fallthru
    _

// kernel: conv2_norm_relu.2
$region0: #{conv2_norm_relu.2}
  #allocation0 [shape = 'u32[]', space=smem, size = 0x4, offset = 0x4, fixed_abs, tag = 'smem constant byte address 0x4 - core index']
  #allocation1 [shape = 'u32[144,128]{1,0:T(1,128)}', space=vmem, size = 0x12000, scoped, tag = 'internal scratch']
  %s0 = inlined_call_operand.vmem [shape: f32[2,18,18,4], index: 0, kind: input, shape index: {}]
  %s1 = inlined_call_operand.vmem [shape: f32[3,3,4,8], index: 1, kind: input, shape index: {}]
  %s2 = inlined_call_operand.vmem [shape: f32[2,256,8], index: 2, kind: output, shape index: {0}]
  %s3 = inlined_call_operand.vmem [shape: f32[2,16,8], index: 3, kind: output, shape index: {1}]
  %4 = xla_tuple %s2, %s3
  %s5 = sld [smem:[#allocation0]]
  $region49: #{conv2_norm_relu.2} parent=0
    _
  %s7 = ssub.s32 1, %s5
  %s8 = scalar_select 0, %s7, %s5
  loop: start=0, step=1, limit=4
  $region2: #{conv2_norm_relu.2} parent=0 // loop_pre_header
    _
  $region3: #{conv2_norm_relu.2} parent=0 // loop_header
    %s10 = sphi 0, %s14
    %p11 = scmp.ge.s32.totalorder %s10, 4
    %s20 = sphi 0, %s22
    %s23 = sphi 0, %s20
    %s24 = sphi 0, %s23
    %s40 = sphi 0, %s24
    %s44 = sphi 0, %s44
    %s46 = sphi 0, %s44
    %s47 = sphi 0, %s46
    %s61 = sphi 0, %s47
    %s67 = sphi 0, %s69
    %s70 = sphi 0, %s67
    %s71 = sphi 0, %s70
    %s87 = sphi 0, %s71
    %s93 = sphi 0, %s95
    %s96 = sphi 0, %s93
    %s97 = sphi 0, %s96
    %s113 = sphi 0, %s97
  $region4: #{conv2_norm_relu.2} parent=0 // loop_header_branch
    %13 = sbr.rel (%p11) target = $region8
  $region5: #{conv2_norm_relu.2} parent=0 // loop_body
    %s15 = ssub.s32 %s10, 1
    %s16 = ssub.s32 %s10, 2
    %s17 = sadd.s32 %s10, 1
    %s18 = ssub.s32 %s10, %s17
    %p19 = scmp.eq.s32.totalorder %s18, 0
    %s21 = sadd.s32 %s20, 1
    %s22 = scalar_select %p19, %s20, %s21
    %p25 = pneg %p19
    %p26 = scmp.eq.s32.totalorder %s10, 1
    %p27 = por %p25, %p26
    %p28 = scmp.ne.s32.totalorder %s20, %s23
    %p29 = scmp.eq.s32.totalorder %s10, 0
    %p30 = por %p28, %p29
    %p31 = scmp.ne.s32.totalorder %s20, %s23
    %p32 = scmp.eq.s32.totalorder %s15, 1
    %p33 = por %p31, %p32
    %p34 = scmp.ne.s32.totalorder %s23, %s24
    %p35 = scmp.eq.s32.totalorder %s15, 0
    %p36 = por %p34, %p35
    %p37 = scmp.ne.s32.totalorder %s23, %s24
    %p38 = scmp.eq.s32.totalorder %s16, 1
    %p39 = por %p37, %p38
    %p41 = scmp.ne.s32.totalorder %s24, %s40
    %p42 = scmp.eq.s32.totalorder %s16, 0
    %p43 = por %p41, %p42
    %s45 = sadd.s32 %s44, 1
    %p48 = scmp.eq.s32.totalorder %s10, 1
    %p49 = scmp.ne.s32.totalorder %s44, %s46
    %p50 = scmp.eq.s32.totalorder %s10, 0
    %p51 = por %p49, %p50
    %p52 = scmp.ne.s32.totalorder %s44, %s46
    %p53 = scmp.eq.s32.totalorder %s15, 1
    %p54 = por %p52, %p53
    %p55 = scmp.ne.s32.totalorder %s46, %s47
    %p56 = scmp.eq.s32.totalorder %s15, 0
    %p57 = por %p55, %p56
    %p58 = scmp.ne.s32.totalorder %s46, %s47
    %p59 = scmp.eq.s32.totalorder %s16, 1
    %p60 = por %p58, %p59
    %p62 = scmp.ne.s32.totalorder %s47, %s61
    %p63 = scmp.eq.s32.totalorder %s16, 0
    %p64 = por %p62, %p63
    %s65 = ssub.s32 %s10, %s17
    %p66 = scmp.eq.s32.totalorder %s65, 0
    %s68 = sadd.s32 %s67, 1
    %s69 = scalar_select %p66, %s67, %s68
    %p72 = pneg %p66
    %p73 = scmp.eq.s32.totalorder %s10, 1
    %p74 = por %p72, %p73
    %p75 = scmp.ne.s32.totalorder %s67, %s70
    %p76 = scmp.eq.s32.totalorder %s10, 0
    %p77 = por %p75, %p76
    %p78 = scmp.ne.s32.totalorder %s67, %s70
    %p79 = scmp.eq.s32.totalorder %s15, 1
    %p80 = por %p78, %p79
    %p81 = scmp.ne.s32.totalorder %s70, %s71
    %p82 = scmp.eq.s32.totalorder %s15, 0
    %p83 = por %p81, %p82
    %p84 = scmp.ne.s32.totalorder %s70, %s71
    %p85 = scmp.eq.s32.totalorder %s16, 1
    %p86 = por %p84, %p85
    %p88 = scmp.ne.s32.totalorder %s71, %s87
    %p89 = scmp.eq.s32.totalorder %s16, 0
    %p90 = por %p88, %p89
    %s91 = ssub.s32 %s10, %s17
    %p92 = scmp.eq.s32.totalorder %s91, 0
    %s94 = sadd.s32 %s93, 1
    %s95 = scalar_select %p92, %s93, %s94
    %p98 = pneg %p92
    %p99 = scmp.eq.s32.totalorder %s10, 1
    %p100 = por %p98, %p99
    %p101 = scmp.ne.s32.totalorder %s93, %s96
    %p102 = scmp.eq.s32.totalorder %s10, 0
    %p103 = por %p101, %p102
    %p104 = scmp.ne.s32.totalorder %s93, %s96
    %p105 = scmp.eq.s32.totalorder %s15, 1
    %p106 = por %p104, %p105
    %p107 = scmp.ne.s32.totalorder %s96, %s97
    %p108 = scmp.eq.s32.totalorder %s15, 0
    %p109 = por %p107, %p108
    %p110 = scmp.ne.s32.totalorder %s96, %s97
    %p111 = scmp.eq.s32.totalorder %s16, 1
    %p112 = por %p110, %p111
    %p114 = scmp.ne.s32.totalorder %s97, %s113
    %p115 = scmp.eq.s32.totalorder %s16, 0
    %p116 = por %p114, %p115
    %p117 = scmp.le.s32.totalorder 1, %s10
    %p118 = scmp.lt.s32.totalorder %s10, 3
    %p119 = pnand %p117, %p118
    %p120 = pneg %p119
    // Predicated region
    $region9: #{conv2_norm_relu.2} parent=5 // pred_check
      _
    $region10: #{conv2_norm_relu.2} parent=5 // pred_check_branch
      %122 = sbr.rel (%p119) target = $region12
    $region11: #{conv2_norm_relu.2} parent=5 // pred_region
      %s123 = ssub.s32 %s10, 1
      // Predicated region
      $region13: #{conv2_norm_relu.2} parent=11 // pred_check
        %p124 = pneg %p57
      $region14: #{conv2_norm_relu.2} parent=11 // pred_check_branch
        %126 = sbr.rel (%p124) target = $region16
      $region15: #{conv2_norm_relu.2} parent=11 // pred_region
        _
      $region16: #{conv2_norm_relu.2} parent=11 // pred_fallthru
        _
    $region12: #{conv2_norm_relu.2} parent=5 // pred_fallthru
      _
    %p127 = scmp.lt.s32.totalorder %s10, 2
    // Predicated region
    $region17: #{conv2_norm_relu.2} parent=5 // pred_check
      %p128 = pneg %p127
    $region18: #{conv2_norm_relu.2} parent=5 // pred_check_branch
      %130 = sbr.rel (%p128) target = $region20
    $region19: #{conv2_norm_relu.2} parent=5 // pred_region
      // Predicated region
      $region21: #{conv2_norm_relu.2} parent=19 // pred_check
        %p131 = pneg %p30
      $region22: #{conv2_norm_relu.2} parent=19 // pred_check_branch
        %133 = sbr.rel (%p131) target = $region24
      $region23: #{conv2_norm_relu.2} parent=19 // pred_region
        %p134 = scmp.lt.s32.totalorder %s10, 1
        %s135 = scalar_select %p134, %s10, 1
        %s136 = smul.addr %s135, 54
        %s137 = smul.addr %s136, 8
        %s138 = scalar_lea.vmem %s0, %s137
      $region24: #{conv2_norm_relu.2} parent=19 // pred_fallthru
        _
    $region20: #{conv2_norm_relu.2} parent=5 // pred_fallthru
      _
    %p139 = scmp.le.s32.totalorder 1, %s10
    %p140 = scmp.lt.s32.totalorder %s10, 3
    %p141 = pnand %p139, %p140
    %p142 = pneg %p141
    // Predicated region
    $region25: #{conv2_norm_relu.2} parent=5 // pred_check
      _
    $region26: #{conv2_norm_relu.2} parent=5 // pred_check_branch
      %144 = sbr.rel (%p141) target = $region28
    $region27: #{conv2_norm_relu.2} parent=5 // pred_region
      %s145 = ssub.s32 %s10, 1
      %p146 = scmp.lt.s32.totalorder %s15, 1
      %s147 = scalar_select %p146, %s15, 1
      %s148 = smul.addr %s147, 54
      %s149 = smul.addr %s148, 8
      %s150 = scalar_lea.vmem %s0, %s149
      %p151 = pneg %p36
      %p152 = pneg %p33
      %p153 = pneg %p57
      %p154 = pneg %p54
      %p155 = pneg %p83
      %p156 = pneg %p80
      %p157 = scmp.lt.s32.totalorder %s15, 1
      %s158 = scalar_select %p157, %s15, 1
      %s159 = smul.addr %s158, 32
      %s160 = smul.addr %s159, 8
      %s161 = scalar_lea.vmem %s2, %s160
      %p162 = pneg %p109
      %p163 = pneg %p106
      %p164 = scmp.lt.s32.totalorder %s15, 1
      %s165 = scalar_select %p164, %s15, 1
      %s166 = smul.addr %s165, 2
      %s167 = smul.addr %s166, 8
      %s168 = scalar_lea.vmem %s3, %s167
      %p169 = scmp.lt.s32.totalorder %s15, 1
      %s170 = scalar_select %p169, %s15, 1
      %s171 = smul.addr %s170, 54
      %s172 = smul.addr %s171, 8
      %s173 = scalar_lea.vmem %s0, %s172
      %p174 = scmp.lt.s32.totalorder %s15, 1
      %s175 = scalar_select %p174, %s15, 1
      %s176 = smul.addr %s175, 32
      %s177 = smul.addr %s176, 8
      %s178 = scalar_lea.vmem %s2, %s177
      %p179 = scmp.lt.s32.totalorder %s15, 1
      %s180 = scalar_select %p179, %s15, 1
      %s181 = smul.addr %s180, 2
      %s182 = smul.addr %s181, 8
      %s183 = scalar_lea.vmem %s3, %s182
      %v184 = vld [vmem:[%s173] sm:$0xff]
      %v185 = vld [vmem:[%s173 + $0x8] sm:$0xff]
      %v186 = vld [vmem:[%s173 + $0x18] sm:$0xff]
      %v187 = vld [vmem:[%s173 + $0x20] sm:$0xff]
      %v188 = vld [vmem:[%s173 + $0x30] sm:$0xff]
      %v189 = vld [vmem:[%s173 + $0x38] sm:$0xff]
      %v190 = vld [vmem:[%s173 + $0x48] sm:$0xff]
      %v191 = vld [vmem:[%s173 + $0x50] sm:$0xff]
      %v192 = vld [vmem:[%s173 + $0x60] sm:$0xff]
      %v193 = vld [vmem:[%s173 + $0x68] sm:$0xff]
      %v194 = vld [vmem:[%s173 + $0x78] sm:$0xff]
      %v195 = vld [vmem:[%s173 + $0x80] sm:$0xff]
      %v196 = vld [vmem:[%s173 + $0x90] sm:$0xff]
      %v197 = vld [vmem:[%s173 + $0x98] sm:$0xff]
      %v198 = vld [vmem:[%s173 + $0xa8] sm:$0xff]
      %v199 = vld [vmem:[%s173 + $0xb0] sm:$0xff]
      %v200 = vld [vmem:[%s173 + $0xc0] sm:$0xff]
      %v201 = vld [vmem:[%s173 + $0xc8] sm:$0xff]
      %v202 = vld [vmem:[%s173 + $0xd8] sm:$0xff]
      %v203 = vld [vmem:[%s173 + $0xe0] sm:$0xff]
      %v204 = vld [vmem:[%s173 + $0xf0] sm:$0xff]
      %v205 = vld [vmem:[%s173 + $0xf8] sm:$0xff]
      %v206 = vld [vmem:[%s173 + $0x108] sm:$0xff]
      %v207 = vld [vmem:[%s173 + $0x110] sm:$0xff]
      %v208 = vld [vmem:[%s173 + $0x120] sm:$0xff]
      %v209 = vld [vmem:[%s173 + $0x128] sm:$0xff]
      %v210 = vld [vmem:[%s173 + $0x138] sm:$0xff]
      %v211 = vld [vmem:[%s173 + $0x140] sm:$0xff]
      %v212 = vld [vmem:[%s173 + $0x150] sm:$0xff]
      %v213 = vld [vmem:[%s173 + $0x158] sm:$0xff]
      %v214 = vld [vmem:[%s173 + $0x168] sm:$0xff]
      %v215 = vld [vmem:[%s173 + $0x170] sm:$0xff]
      %v216 = vld [vmem:[%s1] sm:$0xf]
      %v217 = vld [vmem:[%s173 + $0x1] sm:$0xff]
      %v218 = vld [vmem:[%s173 + $0x9] sm:$0xff]
      %v219 = vld [vmem:[%s173 + $0x19] sm:$0xff]
      %v220 = vld [vmem:[%s173 + $0x21] sm:$0xff]
      %v221 = vld [vmem:[%s173 + $0x31] sm:$0xff]
      %v222 = vld [vmem:[%s173 + $0x39] sm:$0xff]
      %v223 = vld [vmem:[%s173 + $0x49] sm:$0xff]
      %v224 = vld [vmem:[%s173 + $0x51] sm:$0xff]
      %v225 = vld [vmem:[%s173 + $0x61] sm:$0xff]
      %v226 = vld [vmem:[%s173 + $0x69] sm:$0xff]
      %v227 = vld [vmem:[%s173 + $0x79] sm:$0xff]
      %v228 = vld [vmem:[%s173 + $0x81] sm:$0xff]
      %v229 = vld [vmem:[%s173 + $0x91] sm:$0xff]
      %v230 = vld [vmem:[%s173 + $0x99] sm:$0xff]
      %v231 = vld [vmem:[%s173 + $0xa9] sm:$0xff]
      %v232 = vld [vmem:[%s173 + $0xb1] sm:$0xff]
      %v233 = vld [vmem:[%s173 + $0xc1] sm:$0xff]
      %v234 = vld [vmem:[%s173 + $0xc9] sm:$0xff]
      %v235 = vld [vmem:[%s173 + $0xd9] sm:$0xff]
      %v236 = vld [vmem:[%s173 + $0xe1] sm:$0xff]
      %v237 = vld [vmem:[%s173 + $0xf1] sm:$0xff]
      %v238 = vld [vmem:[%s173 + $0xf9] sm:$0xff]
      %v239 = vld [vmem:[%s173 + $0x109] sm:$0xff]
      %v240 = vld [vmem:[%s173 + $0x111] sm:$0xff]
      %v241 = vld [vmem:[%s173 + $0x121] sm:$0xff]
      %v242 = vld [vmem:[%s173 + $0x129] sm:$0xff]
      %v243 = vld [vmem:[%s173 + $0x139] sm:$0xff]
      %v244 = vld [vmem:[%s173 + $0x141] sm:$0xff]
      %v245 = vld [vmem:[%s173 + $0x151] sm:$0xff]
      %v246 = vld [vmem:[%s173 + $0x159] sm:$0xff]
      %v247 = vld [vmem:[%s173 + $0x169] sm:$0xff]
      %v248 = vld [vmem:[%s173 + $0x171] sm:$0xff]
      %s249 = scalar_lea.vmem %s1, 4
      %v250 = vld [vmem:[%s249] sm:$0xf]
      %vm251 = vcmask 31744
      %v253 = vsel %vm251, %v217, 0
      %v256 = vsel %vm251, %v218, 0
      %v259 = vsel %vm251, %v219, 0
      %v262 = vsel %vm251, %v220, 0
      %v265 = vsel %vm251, %v221, 0
      %v268 = vsel %vm251, %v222, 0
      %v271 = vsel %vm251, %v223, 0
      %v274 = vsel %vm251, %v224, 0
      %v277 = vsel %vm251, %v225, 0
      %v280 = vsel %vm251, %v226, 0
      %v283 = vsel %vm251, %v227, 0
      %v286 = vsel %vm251, %v228, 0
      %v289 = vsel %vm251, %v229, 0
      %v292 = vsel %vm251, %v230, 0
      %v295 = vsel %vm251, %v231, 0
      %v298 = vsel %vm251, %v232, 0
      %v301 = vsel %vm251, %v233, 0
      %v304 = vsel %vm251, %v234, 0
      %v307 = vsel %vm251, %v235, 0
      %v310 = vsel %vm251, %v236, 0
      %v313 = vsel %vm251, %v237, 0
      %v316 = vsel %vm251, %v238, 0
      %v319 = vsel %vm251, %v239, 0
      %v322 = vsel %vm251, %v240, 0
      %v325 = vsel %vm251, %v241, 0
      %v328 = vsel %vm251, %v242, 0
      %v331 = vsel %vm251, %v243, 0
      %v334 = vsel %vm251, %v244, 0
      %v337 = vsel %vm251, %v245, 0
      %v340 = vsel %vm251, %v246, 0
      %v343 = vsel %vm251, %v247, 0
      %v346 = vsel %vm251, %v248, 0
      %vm348 = vcmask 1043456
      %v350 = vsel %vm348, %v250, 0
      %352 = vmatprep.subr.mxu0 0.0
      %353 = vmatpush1.msra.mxu0 %v350
      %354 = vmatprep.subr.mxu0 0.0
      %355 = vmatpush1.msra.mxu0 0.0
      %356 = vmatprep.subr.mxu0 0.0
      %357 = vmatpush1.msra.mxu0 0.0
      %358 = vmatprep.subr.mxu0 0.0
      %359 = vmatpush1.msra.mxu0 0.0
      %360 = vmatprep.subr.mxu0 0.0
      %361 = vmatpush1.msra.mxu0 0.0
      %362 = vmatprep.subr.mxu0 0.0
      %363 = vmatpush1.msra.mxu0 0.0
      %364 = vmatprep.subr.mxu0 0.0
      %365 = vmatpush1.msra.mxu0 0.0
      %366 = vmatprep.subr.mxu0 0.0
      %367 = vmatpush1.msra.mxu0 0.0
      %368 = vmatprep.subr.mxu0 0.0
      %369 = vmatpush1.msra.mxu0 0.0
      %370 = vmatprep.subr.mxu0 0.0
      %371 = vmatpush1.msra.mxu0 0.0
      %372 = vmatprep.subr.mxu0 0.0
      %373 = vmatpush1.msra.mxu0 0.0
      %374 = vmatprep.subr.mxu0 0.0
      %375 = vmatpush1.msra.mxu0 0.0
      %376 = vmatprep.subr.mxu0 0.0
      %377 = vmatpush1.msra.mxu0 0.0
      %378 = vmatprep.subr.mxu0 0.0
      %379 = vmatpush1.msra.mxu0 0.0
      %380 = vmatprep.subr.mxu0 0.0
      %381 = vmatpush1.msra.mxu0 0.0
      %382 = vmatprep.subr.mxu0 0.0
      %383 = vmatpush1.msra.mxu0 0.0
      %384 = vmatprep.subr.mxu0 0.0
      %385 = vmatpush1.msra.mxu0 0.0
      %386 = vmatprep.subr.mxu0 0.0
      %387 = vmatpush1.msra.mxu0 0.0
      %388 = vmatprep.subr.mxu0 0.0
      %389 = vmatpush1.msra.mxu0 0.0
      %390 = vmatprep.subr.mxu0 0.0
      %391 = vmatpush1.msra.mxu0 0.0
      %392 = vmatprep.subr.mxu0 0.0
      %393 = vmatpush1.msra.mxu0 0.0
      %394 = vmatprep.subr.mxu0 0.0
      %395 = vmatpush1.msra.mxu0 0.0
      %396 = vmatprep.subr.mxu0 0.0
      %397 = vmatpush1.msra.mxu0 0.0
      %398 = vmatprep.subr.mxu0 0.0
      %399 = vmatpush1.msra.mxu0 0.0
      %400 = vmatprep.subr.mxu0 0.0
      %401 = vmatpush1.msra.mxu0 0.0
      %402 = vmatprep.subr.mxu0 0.0
      %403 = vmatpush1.msra.mxu0 0.0
      %404 = vmatprep.subr.mxu0 0.0
      %405 = vmatpush1.msra.mxu0 0.0
      %406 = vmatprep.subr.mxu0 0.0
      %407 = vmatpush1.msra.mxu0 0.0
      %408 = vmatprep.subr.mxu0 0.0
      %409 = vmatpush1.msra.mxu0 0.0
      %410 = vmatprep.subr.mxu0 0.0
      %411 = vmatpush1.msra.mxu0 0.0
      %412 = vmatprep.subr.mxu0 0.0
      %413 = vmatpush1.msra.mxu0 0.0
      %414 = vmatprep.subr.mxu0 0.0
      %415 = vmatpush1.msra.mxu0 0.0
      %416 = vmatprep.mubr.f32.mxu0 0.0
      %417 = vmatmul.mubr.f32.gmra.mrb[0].mxu0 %v253
      %v418 = vpop.f32.mrb[0].mxu0
      %v419 = vadd.f32 0.0, %v418
      %v420 = vpop.f32.mrb[0].mxu0
      %421 = vmatprep.mubr.f32.mxu0 0.0
      %422 = vmatmul.mubr.f32.gmra.mrb[0].mxu0 %v256
      %v423 = vpop.f32.mrb[0].mxu0
      %v424 = vadd.f32 0.0, %v423
      %v425 = vpop.f32.mrb[0].mxu0
      %426 = vmatprep.mubr.f32.mxu0 0.0
      %427 = vmatmul.mubr.f32.gmra.mrb[0].mxu0 %v259
      %v428 = vpop.f32.mrb[0].mxu0
      %v429 = vadd.f32 0.0, %v428
      %v430 = vpop.f32.mrb[0].mxu0
      %431 = vmatprep.mubr.f32.mxu0 0.0
      %432 = vmatmul.mubr.f32.gmra.mrb[0].mxu0 %v262
      %v433 = vpop.f32.mrb[0].mxu0
      %v434 = vadd.f32 0.0, %v433
      %v435 = vpop.f32.mrb[0].mxu0
      %436 = vmatprep.mubr.f32.mxu0 0.0
      %437 = vmatmul.mubr.f32.gmra.mrb[0].mxu0 %v265
      %v438 = vpop.f32.mrb[0].mxu0
      %v439 = vadd.f32 0.0, %v438
      %v440 = vpop.f32.mrb[0].mxu0
      %441 = vmatprep.mubr.f32.mxu0 0.0
      %442 = vmatmul.mubr.f32.gmra.mrb[0].mxu0 %v268
      %v443 = vpop.f32.mrb[0].mxu0
      %v444 = vadd.f32 0.0, %v443
      %v445 = vpop.f32.mrb[0].mxu0
      %446 = vmatprep.mubr.f32.mxu0 0.0
      %447 = vmatmul.mubr.f32.gmra.mrb[0].mxu0 %v271
      %v448 = vpop.f32.mrb[0].mxu0
      %v449 = vadd.f32 0.0, %v448
      %v450 = vpop.f32.mrb[0].mxu0
      %451 = vmatprep.mubr.f32.mxu0 0.0
      %452 = vmatmul.mubr.f32.gmra.mrb[0].mxu0 %v274
      %v453 = vpop.f32.mrb[0].mxu0
      %v454 = vadd.f32 0.0, %v453
      %v455 = vpop.f32.mrb[0].mxu0
      %456 = vmatprep.mubr.f32.mxu0 0.0
      %457 = vmatmul.mubr.f32.gmra.mrb[0].mxu0 %v277
      %v458 = vpop.f32.mrb[0].mxu0
      %v459 = vadd.f32 0.0, %v458
      %v460 = vpop.f32.mrb[0].mxu0
      %461 = vmatprep.mubr.f32.mxu0 0.0
      %462 = vmatmul.mubr.f32.gmra.mrb[0].mxu0 %v280
      %v463 = vpop.f32.mrb[0].mxu0
      %v464 = vadd.f32 0.0, %v463
      %v465 = vpop.f32.mrb[0].mxu0
      %466 = vmatprep.mubr.f32.mxu0 0.0
      %467 = vmatmul.mubr.f32.gmra.mrb[0].mxu0 %v283
      %v468 = vpop.f32.mrb[0].mxu0
      %v469 = vadd.f32 0.0, %v468
      %v470 = vpop.f32.mrb[0].mxu0
      %471 = vmatprep.mubr.f32.mxu0 0.0
      %472 = vmatmul.mubr.f32.gmra.mrb[0].mxu0 %v286
      %v473 = vpop.f32.mrb[0].mxu0
      %v474 = vadd.f32 0.0, %v473
      %v475 = vpop.f32.mrb[0].mxu0
      %476 = vmatprep.mubr.f32.mxu0 0.0
      %477 = vmatmul.mubr.f32.gmra.mrb[0].mxu0 %v289
      %v478 = vpop.f32.mrb[0].mxu0
      %v479 = vadd.f32 0.0, %v478
      %v480 = vpop.f32.mrb[0].mxu0
      %481 = vmatprep.mubr.f32.mxu0 0.0
      %482 = vmatmul.mubr.f32.gmra.mrb[0].mxu0 %v292
      %v483 = vpop.f32.mrb[0].mxu0
      %v484 = vadd.f32 0.0, %v483
      %v485 = vpop.f32.mrb[0].mxu0
      %486 = vmatprep.mubr.f32.mxu0 0.0
      %487 = vmatmul.mubr.f32.gmra.mrb[0].mxu0 %v295
      %v488 = vpop.f32.mrb[0].mxu0
      %v489 = vadd.f32 0.0, %v488
      %v490 = vpop.f32.mrb[0].mxu0
      %491 = vmatprep.mubr.f32.mxu0 0.0
      %492 = vmatmul.mubr.f32.gmra.mrb[0].mxu0 %v298
      %v493 = vpop.f32.mrb[0].mxu0
      %v494 = vadd.f32 0.0, %v493
      %v495 = vpop.f32.mrb[0].mxu0
      %496 = vmatprep.mubr.f32.mxu0 0.0
      %497 = vmatmul.mubr.f32.gmra.mrb[0].mxu0 %v301
      %v498 = vpop.f32.mrb[0].mxu0
      %v499 = vadd.f32 0.0, %v498
      %v500 = vpop.f32.mrb[0].mxu0
      %501 = vmatprep.mubr.f32.mxu0 0.0
      %502 = vmatmul.mubr.f32.gmra.mrb[0].mxu0 %v304
      %v503 = vpop.f32.mrb[0].mxu0
      %v504 = vadd.f32 0.0, %v503
      %v505 = vpop.f32.mrb[0].mxu0
      %506 = vmatprep.mubr.f32.mxu0 0.0
      %507 = vmatmul.mubr.f32.gmra.mrb[0].mxu0 %v307
      %v508 = vpop.f32.mrb[0].mxu0
      %v509 = vadd.f32 0.0, %v508
      %v510 = vpop.f32.mrb[0].mxu0
      %511 = vmatprep.mubr.f32.mxu0 0.0
      %512 = vmatmul.mubr.f32.gmra.mrb[0].mxu0 %v310
      %v513 = vpop.f32.mrb[0].mxu0
      %v514 = vadd.f32 0.0, %v513
      %v515 = vpop.f32.mrb[0].mxu0
      %516 = vmatprep.mubr.f32.mxu0 0.0
      %517 = vmatmul.mubr.f32.gmra.mrb[0].mxu0 %v313
      %v518 = vpop.f32.mrb[0].mxu0
      %v519 = vadd.f32 0.0, %v518
      %v520 = vpop.f32.mrb[0].mxu0
      %521 = vmatprep.mubr.f32.mxu0 0.0
      %522 = vmatmul.mubr.f32.gmra.mrb[0].mxu0 %v316
      %v523 = vpop.f32.mrb[0].mxu0
      %v524 = vadd.f32 0.0, %v523
      %v525 = vpop.f32.mrb[0].mxu0
      %526 = vmatprep.mubr.f32.mxu0 0.0
      %527 = vmatmul.mubr.f32.gmra.mrb[0].mxu0 %v319
      %v528 = vpop.f32.mrb[0].mxu0
      %v529 = vadd.f32 0.0, %v528
      %v530 = vpop.f32.mrb[0].mxu0
      %531 = vmatprep.mubr.f32.mxu0 0.0
      %532 = vmatmul.mubr.f32.gmra.mrb[0].mxu0 %v322
      %v533 = vpop.f32.mrb[0].mxu0
      %v534 = vadd.f32 0.0, %v533
      %v535 = vpop.f32.mrb[0].mxu0
      %536 = vmatprep.mubr.f32.mxu0 0.0
      %537 = vmatmul.mubr.f32.gmra.mrb[0].mxu0 %v325
      %v538 = vpop.f32.mrb[0].mxu0
      %v539 = vadd.f32 0.0, %v538
      %v540 = vpop.f32.mrb[0].mxu0
      %541 = vmatprep.mubr.f32.mxu0 0.0
      %542 = vmatmul.mubr.f32.gmra.mrb[0].mxu0 %v328
      %v543 = vpop.f32.mrb[0].mxu0
      %v544 = vadd.f32 0.0, %v543
      %v545 = vpop.f32.mrb[0].mxu0
      %546 = vmatprep.mubr.f32.mxu0 0.0
      %547 = vmatmul.mubr.f32.gmra.mrb[0].mxu0 %v331
      %v548 = vpop.f32.mrb[0].mxu0
      %v549 = vadd.f32 0.0, %v548
      %v550 = vpop.f32.mrb[0].mxu0
      %551 = vmatprep.mubr.f32.mxu0 0.0
      %552 = vmatmul.mubr.f32.gmra.mrb[0].mxu0 %v334
      %v553 = vpop.f32.mrb[0].mxu0
      %v554 = vadd.f32 0.0, %v553
      %v555 = vpop.f32.mrb[0].mxu0
      %556 = vmatprep.mubr.f32.mxu0 0.0
      %557 = vmatmul.mubr.f32.gmra.mrb[0].mxu0 %v337
      %v558 = vpop.f32.mrb[0].mxu0
      %v559 = vadd.f32 0.0, %v558
      %v560 = vpop.f32.mrb[0].mxu0
      %561 = vmatprep.mubr.f32.mxu0 0.0
      %562 = vmatmul.mubr.f32.gmra.mrb[0].mxu0 %v340
      %v563 = vpop.f32.mrb[0].mxu0
      %v564 = vadd.f32 0.0, %v563
      %v565 = vpop.f32.mrb[0].mxu0
      %566 = vmatprep.mubr.f32.mxu0 0.0
      %567 = vmatmul.mubr.f32.gmra.mrb[0].mxu0 %v343
      %v568 = vpop.f32.mrb[0].mxu0
      %v569 = vadd.f32 0.0, %v568
      %v570 = vpop.f32.mrb[0].mxu0
      %571 = vmatprep.mubr.f32.mxu0 0.0
      %572 = vmatmul.mubr.f32.gmra.mrb[0].mxu0 %v346
      %v573 = vpop.f32.mrb[0].mxu0
      %v574 = vadd.f32 0.0, %v573
      %v575 = vpop.f32.mrb[0].mxu0
      %576 = vdwg.mxu0
      %v578 = vsel %vm251, %v184, 0
      %v581 = vsel %vm251, %v185, 0
      %v584 = vsel %vm251, %v186, 0
      %v587 = vsel %vm251, %v187, 0
      %v590 = vsel %vm251, %v188, 0
      %v593 = vsel %vm251, %v189, 0
      %v596 = vsel %vm251, %v190, 0
      %v599 = vsel %vm251, %v191, 0
      %v602 = vsel %vm251, %v192, 0
      %v605 = vsel %vm251, %v193, 0
      %v608 = vsel %vm251, %v194, 0
      %v611 = vsel %vm251, %v195, 0
      %v614 = vsel %vm251, %v196, 0
      %v617 = vsel %vm251, %v197, 0
      %v620 = vsel %vm251, %v198, 0
      %v623 = vsel %vm251, %v199, 0
      %v626 = vsel %vm251, %v200, 0
      %v629 = vsel %vm251, %v201, 0
      %v632 = vsel %vm251, %v202, 0
      %v635 = vsel %vm251, %v203, 0
      %v638 = vsel %vm251, %v204, 0
      %v641 = vsel %vm251, %v205, 0
      %v644 = vsel %vm251, %v206, 0
      %v647 = vsel %vm251, %v207, 0
      %v650 = vsel %vm251, %v208, 0
      %v653 = vsel %vm251, %v209, 0
      %v656 = vsel %vm251, %v210, 0
      %v659 = vsel %vm251, %v211, 0
      %v662 = vsel %vm251, %v212, 0
      %v665 = vsel %vm251, %v213, 0
      %v668 = vsel %vm251, %v214, 0
      %v671 = vsel %vm251, %v215, 0
      %v674 = vsel %vm348, %v216, 0
      %676 = vmatprep.subr.mxu0 0.0
      %677 = vmatpush1.msra.mxu0 %v674
      %678 = vmatprep.subr.mxu0 0.0
      %679 = vmatpush1.msra.mxu0 0.0
      %680 = vmatprep.subr.mxu0 0.0
      %681 = vmatpush1.msra.mxu0 0.0
      %682 = vmatprep.subr.mxu0 0.0
      %683 = vmatpush1.msra.mxu0 0.0
      %684 = vmatprep.subr.mxu0 0.0
      %685 = vmatpush1.msra.mxu0 0.0
      %686 = vmatprep.subr.mxu0 0.0
      %687 = vmatpush1.msra.mxu0 0.0
      %688 = vmatprep.subr.mxu0 0.0
      %689 = vmatpush1.msra.mxu0 0.0
      %690 = vmatprep.subr.mxu0 0.0
      %691 = vmatpush1.msra.mxu0 0.0
      %692 = vmatprep.subr.mxu0 0.0
      %693 = vmatpush1.msra.mxu0 0.0
      %694 = vmatprep.subr.mxu0 0.0
      %695 = vmatpush1.msra.mxu0 0.0
      %696 = vmatprep.subr.mxu0 0.0
      %697 = vmatpush1.msra.mxu0 0.0
      %698 = vmatprep.subr.mxu0 0.0
      %699 = vmatpush1.msra.mxu0 0.0
      %700 = vmatprep.subr.mxu0 0.0
      %701 = vmatpush1.msra.mxu0 0.0
      %702 = vmatprep.subr.mxu0 0.0
      %703 = vmatpush1.msra.mxu0 0.0
      %704 = vmatprep.subr.mxu0 0.0
      %705 = vmatpush1.msra.mxu0 0.0
      %706 = vmatprep.subr.mxu0 0.0
      %707 = vmatpush1.msra.mxu0 0.0
      %708 = vmatprep.subr.mxu0 0.0
      %709 = vmatpush1.msra.mxu0 0.0
      %710 = vmatprep.subr.mxu0 0.0
      %711 = vmatpush1.msra.mxu0 0.0
      %712 = vmatprep.subr.mxu0 0.0
      %713 = vmatpush1.msra.mxu0 0.0
      %714 = vmatprep.subr.mxu0 0.0
      %715 = vmatpush1.msra.mxu0 0.0
      %716 = vmatprep.subr.mxu0 0.0
      %717 = vmatpush1.msra.mxu0 0.0
      %718 = vmatprep.subr.mxu0 0.0
      %719 = vmatpush1.msra.mxu0 0.0
      %720 = vmatprep.subr.mxu0 0.0
      %721 = vmatpush1.msra.mxu0 0.0
      %722 = vmatprep.subr.mxu0 0.0
      %723 = vmatpush1.msra.mxu0 0.0
      %724 = vmatprep.subr.mxu0 0.0
      %725 = vmatpush1.msra.mxu0 0.0
      %726 = vmatprep.subr.mxu0 0.0
      %727 = vmatpush1.msra.mxu0 0.0
      %728 = vmatprep.subr.mxu0 0.0
      %729 = vmatpush1.msra.mxu0 0.0
      %730 = vmatprep.subr.mxu0 0.0
      %731 = vmatpush1.msra.mxu0 0.0
      %732 = vmatprep.subr.mxu0 0.0
      %733 = vmatpush1.msra.mxu0 0.0
      %734 = vmatprep.subr.mxu0 0.0
      %735 = vmatpush1.msra.mxu0 0.0
      %736 = vmatprep.subr.mxu0 0.0
      %737 = vmatpush1.msra.mxu0 0.0
      %738 = vmatprep.subr.mxu0 0.0
      %739 = vmatpush1.msra.mxu0 0.0
      %740 = vmatprep.mubr.f32.mxu0 0.0
      %741 = vmatmul.mubr.f32.gmra.mrb[0].mxu0 %v578
      %v742 = vpop.f32.mrb[0].mxu0
      %v743 = vadd.f32 %v419, %v742
      %v744 = vpop.f32.mrb[0].mxu0
      %745 = vmatprep.mubr.f32.mxu0 0.0
      %746 = vmatmul.mubr.f32.gmra.mrb[0].mxu0 %v581
      %v747 = vpop.f32.mrb[0].mxu0
      %v748 = vadd.f32 %v424, %v747
      %v749 = vpop.f32.mrb[0].mxu0
      %750 = vmatprep.mubr.f32.mxu0 0.0
      %751 = vmatmul.mubr.f32.gmra.mrb[0].mxu0 %v584
      %v752 = vpop.f32.mrb[0].mxu0
      %v753 = vadd.f32 %v429, %v752
      %v754 = vpop.f32.mrb[0].mxu0
      %755 = vmatprep.mubr.f32.mxu0 0.0
      %756 = vmatmul.mubr.f32.gmra.mrb[0].mxu0 %v587
      %v757 = vpop.f32.mrb[0].mxu0
      %v758 = vadd.f32 %v434, %v757
      %v759 = vpop.f32.mrb[0].mxu0
      %760 = vmatprep.mubr.f32.mxu0 0.0
      %761 = vmatmul.mubr.f32.gmra.mrb[0].mxu0 %v590
      %v762 = vpop.f32.mrb[0].mxu0
      %v763 = vadd.f32 %v439, %v762
      %v764 = vpop.f32.mrb[0].mxu0
      %765 = vmatprep.mubr.f32.mxu0 0.0
      %766 = vmatmul.mubr.f32.gmra.mrb[0].mxu0 %v593
      %v767 = vpop.f32.mrb[0].mxu0
      %v768 = vadd.f32 %v444, %v767
      %v769 = vpop.f32.mrb[0].mxu0
      %770 = vmatprep.mubr.f32.mxu0 0.0
      %771 = vmatmul.mubr.f32.gmra.mrb[0].mxu0 %v596
      %v772 = vpop.f32.mrb[0].mxu0
      %v773 = vadd.f32 %v449, %v772
      %v774 = vpop.f32.mrb[0].mxu0
      %775 = vmatprep.mubr.f32.mxu0 0.0
      %776 = vmatmul.mubr.f32.gmra.mrb[0].mxu0 %v599
      %v777 = vpop.f32.mrb[0].mxu0
      %v778 = vadd.f32 %v454, %v777
      %v779 = vpop.f32.mrb[0].mxu0
      %780 = vmatprep.mubr.f32.mxu0 0.0
      %781 = vmatmul.mubr.f32.gmra.mrb[0].mxu0 %v602
      %v782 = vpop.f32.mrb[0].mxu0
      %v783 = vadd.f32 %v459, %v782
      %v784 = vpop.f32.mrb[0].mxu0
      %785 = vmatprep.mubr.f32.mxu0 0.0
      %786 = vmatmul.mubr.f32.gmra.mrb[0].mxu0 %v605
      %v787 = vpop.f32.mrb[0].mxu0
      %v788 = vadd.f32 %v464, %v787
      %v789 = vpop.f32.mrb[0].mxu0
      %790 = vmatprep.mubr.f32.mxu0 0.0
      %791 = vmatmul.mubr.f32.gmra.mrb[0].mxu0 %v608
      %v792 = vpop.f32.mrb[0].mxu0
      %v793 = vadd.f32 %v469, %v792
      %v794 = vpop.f32.mrb[0].mxu0
      %795 = vmatprep.mubr.f32.mxu0 0.0
      %796 = vmatmul.mubr.f32.gmra.mrb[0].mxu0 %v611
      %v797 = vpop.f32.mrb[0].mxu0
      %v798 = vadd.f32 %v474, %v797
      %v799 = vpop.f32.mrb[0].mxu0
      %800 = vmatprep.mubr.f32.mxu0 0.0
      %801 = vmatmul.mubr.f32.gmra.mrb[0].mxu0 %v614
      %v802 = vpop.f32.mrb[0].mxu0
      %v803 = vadd.f32 %v479, %v802
      %v804 = vpop.f32.mrb[0].mxu0
      %805 = vmatprep.mubr.f32.mxu0 0.0
      %806 = vmatmul.mubr.f32.gmra.mrb[0].mxu0 %v617
      %v807 = vpop.f32.mrb[0].mxu0
      %v808 = vadd.f32 %v484, %v807
      %v809 = vpop.f32.mrb[0].mxu0
      %810 = vmatprep.mubr.f32.mxu0 0.0
      %811 = vmatmul.mubr.f32.gmra.mrb[0].mxu0 %v620
      %v812 = vpop.f32.mrb[0].mxu0
      %v813 = vadd.f32 %v489, %v812
      %v814 = vpop.f32.mrb[0].mxu0
      %815 = vmatprep.mubr.f32.mxu0 0.0
      %816 = vmatmul.mubr.f32.gmra.mrb[0].mxu0 %v623
      %v817 = vpop.f32.mrb[0].mxu0
      %v818 = vadd.f32 %v494, %v817
      %v819 = vpop.f32.mrb[0].mxu0
      %820 = vmatprep.mubr.f32.mxu0 0.0
      %821 = vmatmul.mubr.f32.gmra.mrb[0].mxu0 %v626
      %v822 = vpop.f32.mrb[0].mxu0
      %v823 = vadd.f32 %v499, %v822
      %v824 = vpop.f32.mrb[0].mxu0
      %825 = vmatprep.mubr.f32.mxu0 0.0
      %826 = vmatmul.mubr.f32.gmra.mrb[0].mxu0 %v629
      %v827 = vpop.f32.mrb[0].mxu0
      %v828 = vadd.f32 %v504, %v827
      %v829 = vpop.f32.mrb[0].mxu0
      %830 = vmatprep.mubr.f32.mxu0 0.0
      %831 = vmatmul.mubr.f32.gmra.mrb[0].mxu0 %v632
      %v832 = vpop.f32.mrb[0].mxu0
      %v833 = vadd.f32 %v509, %v832
      %v834 = vpop.f32.mrb[0].mxu0
      %835 = vmatprep.mubr.f32.mxu0 0.0
      %836 = vmatmul.mubr.f32.gmra.mrb[0].mxu0 %v635
      %v837 = vpop.f32.mrb[0].mxu0
      %v838 = vadd.f32 %v514, %v837
      %v839 = vpop.f32.mrb[0].mxu0
      %840 = vmatprep.mubr.f32.mxu0 0.0
      %841 = vmatmul.mubr.f32.gmra.mrb[0].mxu0 %v638
      %v842 = vpop.f32.mrb[0].mxu0
      %v843 = vadd.f32 %v519, %v842
      %v844 = vpop.f32.mrb[0].mxu0
      %845 = vmatprep.mubr.f32.mxu0 0.0
      %846 = vmatmul.mubr.f32.gmra.mrb[0].mxu0 %v641
      %v847 = vpop.f32.mrb[0].mxu0
      %v848 = vadd.f32 %v524, %v847
      %v849 = vpop.f32.mrb[0].mxu0
      %850 = vmatprep.mubr.f32.mxu0 0.0
      %851 = vmatmul.mubr.f32.gmra.mrb[0].mxu0 %v644
      %v852 = vpop.f32.mrb[0].mxu0
      %v853 = vadd.f32 %v529, %v852
      %v854 = vpop.f32.mrb[0].mxu0
      %855 = vmatprep.mubr.f32.mxu0 0.0
      %856 = vmatmul.mubr.f32.gmra.mrb[0].mxu0 %v647
      %v857 = vpop.f32.mrb[0].mxu0
      %v858 = vadd.f32 %v534, %v857
      %v859 = vpop.f32.mrb[0].mxu0
      %860 = vmatprep.mubr.f32.mxu0 0.0
      %861 = vmatmul.mubr.f32.gmra.mrb[0].mxu0 %v650
      %v862 = vpop.f32.mrb[0].mxu0
      %v863 = vadd.f32 %v539, %v862
      %v864 = vpop.f32.mrb[0].mxu0
      %865 = vmatprep.mubr.f32.mxu0 0.0
      %866 = vmatmul.mubr.f32.gmra.mrb[0].mxu0 %v653
      %v867 = vpop.f32.mrb[0].mxu0
      %v868 = vadd.f32 %v544, %v867
      %v869 = vpop.f32.mrb[0].mxu0
      %870 = vmatprep.mubr.f32.mxu0 0.0
      %871 = vmatmul.mubr.f32.gmra.mrb[0].mxu0 %v656
      %v872 = vpop.f32.mrb[0].mxu0
      %v873 = vadd.f32 %v549, %v872
      %v874 = vpop.f32.mrb[0].mxu0
      %875 = vmatprep.mubr.f32.mxu0 0.0
      %876 = vmatmul.mubr.f32.gmra.mrb[0].mxu0 %v659
      %v877 = vpop.f32.mrb[0].mxu0
      %v878 = vadd.f32 %v554, %v877
      %v879 = vpop.f32.mrb[0].mxu0
      %880 = vmatprep.mubr.f32.mxu0 0.0
      %881 = vmatmul.mubr.f32.gmra.mrb[0].mxu0 %v662
      %v882 = vpop.f32.mrb[0].mxu0
      %v883 = vadd.f32 %v559, %v882
      %v884 = vpop.f32.mrb[0].mxu0
      %885 = vmatprep.mubr.f32.mxu0 0.0
      %886 = vmatmul.mubr.f32.gmra.mrb[0].mxu0 %v665
      %v887 = vpop.f32.mrb[0].mxu0
      %v888 = vadd.f32 %v564, %v887
      %v889 = vpop.f32.mrb[0].mxu0
      %890 = vmatprep.mubr.f32.mxu0 0.0
      %891 = vmatmul.mubr.f32.gmra.mrb[0].mxu0 %v668
      %v892 = vpop.f32.mrb[0].mxu0
      %v893 = vadd.f32 %v569, %v892
      %v894 = vpop.f32.mrb[0].mxu0
      %895 = vmatprep.mubr.f32.mxu0 0.0
      %896 = vmatmul.mubr.f32.gmra.mrb[0].mxu0 %v671
      %v897 = vpop.f32.mrb[0].mxu0
      %v898 = vadd.f32 %v574, %v897
      %v899 = vpop.f32.mrb[0].mxu0
      %900 = vdwg.mxu0
      %v901 = vld [vmem:[%s173 + $0x2] sm:$0xff]
      %v902 = vld [vmem:[%s173 + $0xa] sm:$0xff]
      %v903 = vld [vmem:[%s173 + $0x1a] sm:$0xff]
      %v904 = vld [vmem:[%s173 + $0x22] sm:$0xff]
      %v905 = vld [vmem:[%s173 + $0x32] sm:$0xff]
      %v906 = vld [vmem:[%s173 + $0x3a] sm:$0xff]
      %v907 = vld [vmem:[%s173 + $0x4a] sm:$0xff]
      %v908 = vld [vmem:[%s173 + $0x52] sm:$0xff]
      %v909 = vld [vmem:[%s173 + $0x62] sm:$0xff]
      %v910 = vld [vmem:[%s173 + $0x6a] sm:$0xff]
      %v911 = vld [vmem:[%s173 + $0x7a] sm:$0xff]
      %v912 = vld [vmem:[%s173 + $0x82] sm:$0xff]
      %v913 = vld [vmem:[%s173 + $0x92] sm:$0xff]
      %v914 = vld [vmem:[%s173 + $0x9a] sm:$0xff]
      %v915 = vld [vmem:[%s173 + $0xaa] sm:$0xff]
      %v916 = vld [vmem:[%s173 + $0xb2] sm:$0xff]
      %v917 = vld [vmem:[%s173 + $0xc2] sm:$0xff]
      %v918 = vld [vmem:[%s173 + $0xca] sm:$0xff]
      %v919 = vld [vmem:[%s173 + $0xda] sm:$0xff]
      %v920 = vld [vmem:[%s173 + $0xe2] sm:$0xff]
      %v921 = vld [vmem:[%s173 + $0xf2] sm:$0xff]
      %v922 = vld [vmem:[%s173 + $0xfa] sm:$0xff]
      %v923 = vld [vmem:[%s173 + $0x10a] sm:$0xff]
      %v924 = vld [vmem:[%s173 + $0x112] sm:$0xff]
      %v925 = vld [vmem:[%s173 + $0x122] sm:$0xff]
      %v926 = vld [vmem:[%s173 + $0x12a] sm:$0xff]
      %v927 = vld [vmem:[%s173 + $0x13a] sm:$0xff]
      %v928 = vld [vmem:[%s173 + $0x142] sm:$0xff]
      %v929 = vld [vmem:[%s173 + $0x152] sm:$0xff]
      %v930 = vld [vmem:[%s173 + $0x15a] sm:$0xff]
      %v931 = vld [vmem:[%s173 + $0x16a] sm:$0xff]
      %v932 = vld [vmem:[%s173 + $0x172] sm:$0xff]
      %s933 = scalar_lea.vmem %s1, 8
      %v934 = vld [vmem:[%s933] sm:$0xf]
      %v936 = vsel %vm251, %v901, 0
      %v939 = vsel %vm251, %v902, 0
      %v942 = vsel %vm251, %v903, 0
      %v945 = vsel %vm251, %v904, 0
      %v948 = vsel %vm251, %v905, 0
      %v951 = vsel %vm251, %v906, 0
      %v954 = vsel %vm251, %v907, 0
      %v957 = vsel %vm251, %v908, 0
      %v960 = vsel %vm251, %v909, 0
      %v963 = vsel %vm251, %v910, 0
      %v966 = vsel %vm251, %v911, 0
      %v969 = vsel %vm251, %v912, 0
      %v972 = vsel %vm251, %v913, 0
      %v975 = vsel %vm251, %v914, 0
      %v978 = vsel %vm251, %v915, 0
      %v981 = vsel %vm251, %v916, 0
      %v984 = vsel %vm251, %v917, 0
      %v987 = vsel %vm251, %v918, 0
      %v990 = vsel %vm251, %v919, 0
      %v993 = vsel %vm251, %v920, 0
      %v996 = vsel %vm251, %v921, 0
      %v999 = vsel %vm251, %v922, 0
      %v1002 = vsel %vm251, %v923, 0
      %v1005 = vsel %vm251, %v924, 0
      %v1008 = vsel %vm251, %v925, 0
      %v1011 = vsel %vm251, %v926, 0
      %v1014 = vsel %vm251, %v927, 0
      %v1017 = vsel %vm251, %v928, 0
      %v1020 = vsel %vm251, %v929, 0
      %v1023 = vsel %vm251, %v930, 0
      %v1026 = vsel %vm251, %v931, 0
      %v1029 = vsel %vm251, %v932, 0
      %v1032 = vsel %vm348, %v934, 0
      %1034 = vmatprep.subr.mxu0 0.0
      %1035 = vmatpush1.msra.mxu0 %v1032
      %1036 = vmatprep.subr.mxu0 0.0
      %1037 = vmatpush1.msra.mxu0 0.0
      %1038 = vmatprep.subr.mxu0 0.0
      %1039 = vmatpush1.msra.mxu0 0.0
      %1040 = vmatprep.subr.mxu0 0.0
      %1041 = vmatpush1.msra.mxu0 0.0
      %1042 = vmatprep.subr.mxu0 0.0
      %1043 = vmatpush1.msra.mxu0 0.0
      %1044 = vmatprep.subr.mxu0 0.0
      %1045 = vmatpush1.msra.mxu0 0.0
      %1046 = vmatprep.subr.mxu0 0.0
      %1047 = vmatpush1.msra.mxu0 0.0
      %1048 = vmatprep.subr.mxu0 0.0
      %1049 = vmatpush1.msra.mxu0 0.0
      %1050 = vmatprep.subr.mxu0 0.0
      %1051 = vmatpush1.msra.mxu0 0.0
      %1052 = vmatprep.subr.mxu0 0.0
      %1053 = vmatpush1.msra.mxu0 0.0
      %1054 = vmatprep.subr.mxu0 0.0
      %1055 = vmatpush1.msra.mxu0 0.0
      %1056 = vmatprep.subr.mxu0 0.0
      %1057 = vmatpush1.msra.mxu0 0.0
      %1058 = vmatprep.subr.mxu0 0.0
      %1059 = vmatpush1.msra.mxu0 0.0
      %1060 = vmatprep.subr.mxu0 0.0
      %1061 = vmatpush1.msra.mxu0 0.0
      %1062 = vmatprep.subr.mxu0 0.0
      %1063 = vmatpush1.msra.mxu0 0.0
      %1064 = vmatprep.subr.mxu0 0.0
      %1065 = vmatpush1.msra.mxu0 0.0
      %1066 = vmatprep.subr.mxu0 0.0
      %1067 = vmatpush1.msra.mxu0 0.0
      %1068 = vmatprep.subr.mxu0 0.0
      %1069 = vmatpush1.msra.mxu0 0.0
      %1070 = vmatprep.subr.mxu0 0.0
      %1071 = vmatpush1.msra.mxu0 0.0
      %1072 = vmatprep.subr.mxu0 0.0
      %1073 = vmatpush1.msra.mxu0 0.0
      %1074 = vmatprep.subr.mxu0 0.0
      %1075 = vmatpush1.msra.mxu0 0.0
      %1076 = vmatprep.subr.mxu0 0.0
      %1077 = vmatpush1.msra.mxu0 0.0
      %1078 = vmatprep.subr.mxu0 0.0
      %1079 = vmatpush1.msra.mxu0 0.0
      %1080 = vmatprep.subr.mxu0 0.0
      %1081 = vmatpush1.msra.mxu0 0.0
      %1082 = vmatprep.subr.mxu0 0.0
      %1083 = vmatpush1.msra.mxu0 0.0
      %1084 = vmatprep.subr.mxu0 0.0
      %1085 = vmatpush1.msra.mxu0 0.0
      %1086 = vmatprep.subr.mxu0 0.0
      %1087 = vmatpush1.msra.mxu0 0.0
      %1088 = vmatprep.subr.mxu0 0.0
      %1089 = vmatpush1.msra.mxu0 0.0
      %1090 = vmatprep.subr.mxu0 0.0
      %1091 = vmatpush1.msra.mxu0 0.0
      %1092 = vmatprep.subr.mxu0 0.0
      %1093 = vmatpush1.msra.mxu0 0.0
      %1094 = vmatprep.subr.mxu0 0.0
      %1095 = vmatpush1.msra.mxu0 0.0
      %1096 = vmatprep.subr.mxu0 0.0
      %1097 = vmatpush1.msra.mxu0 0.0
      %1098 = vmatprep.mubr.f32.mxu0 0.0
      %1099 = vmatmul.mubr.f32.gmra.mrb[0].mxu0 %v936
      %v1100 = vpop.f32.mrb[0].mxu0
      %v1101 = vadd.f32 0.0, %v1100
      %v1102 = vpop.f32.mrb[0].mxu0
      %1103 = vmatprep.mubr.f32.mxu0 0.0
      %1104 = vmatmul.mubr.f32.gmra.mrb[0].mxu0 %v939
      %v1105 = vpop.f32.mrb[0].mxu0
      %v1106 = vadd.f32 0.0, %v1105
      %v1107 = vpop.f32.mrb[0].mxu0
      %1108 = vmatprep.mubr.f32.mxu0 0.0
      %1109 = vmatmul.mubr.f32.gmra.mrb[0].mxu0 %v942
      %v1110 = vpop.f32.mrb[0].mxu0
      %v1111 = vadd.f32 0.0, %v1110
      %v1112 = vpop.f32.mrb[0].mxu0
      %1113 = vmatprep.mubr.f32.mxu0 0.0
      %1114 = vmatmul.mubr.f32.gmra.mrb[0].mxu0 %v945
      %v1115 = vpop.f32.mrb[0].mxu0
      %v1116 = vadd.f32 0.0, %v1115
      %v1117 = vpop.f32.mrb[0].mxu0
      %1118 = vmatprep.mubr.f32.mxu0 0.0
      %1119 = vmatmul.mubr.f32.gmra.mrb[0].mxu0 %v948
      %v1120 = vpop.f32.mrb[0].mxu0
      %v1121 = vadd.f32 0.0, %v1120
      %v1122 = vpop.f32.mrb[0].mxu0
      %1123 = vmatprep.mubr.f32.mxu0 0.0
      %1124 = vmatmul.mubr.f32.gmra.mrb[0].mxu0 %v951
      %v1125 = vpop.f32.mrb[0].mxu0
      %v1126 = vadd.f32 0.0, %v1125
      %v1127 = vpop.f32.mrb[0].mxu0
      %1128 = vmatprep.mubr.f32.mxu0 0.0
      %1129 = vmatmul.mubr.f32.gmra.mrb[0].mxu0 %v954
      %v1130 = vpop.f32.mrb[0].mxu0
      %v1131 = vadd.f32 0.0, %v1130
      %v1132 = vpop.f32.mrb[0].mxu0
      %1133 = vmatprep.mubr.f32.mxu0 0.0
      %1134 = vmatmul.mubr.f32.gmra.mrb[0].mxu0 %v957
      %v1135 = vpop.f32.mrb[0].mxu0
      %v1136 = vadd.f32 0.0, %v1135
      %v1137 = vpop.f32.mrb[0].mxu0
      %1138 = vmatprep.mubr.f32.mxu0 0.0
      %1139 = vmatmul.mubr.f32.gmra.mrb[0].mxu0 %v960
      %v1140 = vpop.f32.mrb[0].mxu0
      %v1141 = vadd.f32 0.0, %v1140
      %v1142 = vpop.f32.mrb[0].mxu0
      %1143 = vmatprep.mubr.f32.mxu0 0.0
      %1144 = vmatmul.mubr.f32.gmra.mrb[0].mxu0 %v963
      %v1145 = vpop.f32.mrb[0].mxu0
      %v1146 = vadd.f32 0.0, %v1145
      %v1147 = vpop.f32.mrb[0].mxu0
      %1148 = vmatprep.mubr.f32.mxu0 0.0
      %1149 = vmatmul.mubr.f32.gmra.mrb[0].mxu0 %v966
      %v1150 = vpop.f32.mrb[0].mxu0
      %v1151 = vadd.f32 0.0, %v1150
      %v1152 = vpop.f32.mrb[0].mxu0
      %1153 = vmatprep.mubr.f32.mxu0 0.0
      %1154 = vmatmul.mubr.f32.gmra.mrb[0].mxu0 %v969
      %v1155 = vpop.f32.mrb[0].mxu0
      %v1156 = vadd.f32 0.0, %v1155
      %v1157 = vpop.f32.mrb[0].mxu0
      %1158 = vmatprep.mubr.f32.mxu0 0.0
      %1159 = vmatmul.mubr.f32.gmra.mrb[0].mxu0 %v972
      %v1160 = vpop.f32.mrb[0].mxu0
      %v1161 = vadd.f32 0.0, %v1160
      %v1162 = vpop.f32.mrb[0].mxu0
      %1163 = vmatprep.mubr.f32.mxu0 0.0
      %1164 = vmatmul.mubr.f32.gmra.mrb[0].mxu0 %v975
      %v1165 = vpop.f32.mrb[0].mxu0
      %v1166 = vadd.f32 0.0, %v1165
      %v1167 = vpop.f32.mrb[0].mxu0
      %1168 = vmatprep.mubr.f32.mxu0 0.0
      %1169 = vmatmul.mubr.f32.gmra.mrb[0].mxu0 %v978
      %v1170 = vpop.f32.mrb[0].mxu0
      %v1171 = vadd.f32 0.0, %v1170
      %v1172 = vpop.f32.mrb[0].mxu0
      %1173 = vmatprep.mubr.f32.mxu0 0.0
      %1174 = vmatmul.mubr.f32.gmra.mrb[0].mxu0 %v981
      %v1175 = vpop.f32.mrb[0].mxu0
      %v1176 = vadd.f32 0.0, %v1175
      %v1177 = vpop.f32.mrb[0].mxu0
      %1178 = vmatprep.mubr.f32.mxu0 0.0
      %1179 = vmatmul.mubr.f32.gmra.mrb[0].mxu0 %v984
      %v1180 = vpop.f32.mrb[0].mxu0
      %v1181 = vadd.f32 0.0, %v1180
      %v1182 = vpop.f32.mrb[0].mxu0
      %1183 = vmatprep.mubr.f32.mxu0 0.0
      %1184 = vmatmul.mubr.f32.gmra.mrb[0].mxu0 %v987
      %v1185 = vpop.f32.mrb[0].mxu0
      %v1186 = vadd.f32 0.0, %v1185
      %v1187 = vpop.f32.mrb[0].mxu0
      %1188 = vmatprep.mubr.f32.mxu0 0.0
      %1189 = vmatmul.mubr.f32.gmra.mrb[0].mxu0 %v990
      %v1190 = vpop.f32.mrb[0].mxu0
      %v1191 = vadd.f32 0.0, %v1190
      %v1192 = vpop.f32.mrb[0].mxu0
      %1193 = vmatprep.mubr.f32.mxu0 0.0
      %1194 = vmatmul.mubr.f32.gmra.mrb[0].mxu0 %v993
      %v1195 = vpop.f32.mrb[0].mxu0
      %v1196 = vadd.f32 0.0, %v1195
      %v1197 = vpop.f32.mrb[0].mxu0
      %1198 = vmatprep.mubr.f32.mxu0 0.0
      %1199 = vmatmul.mubr.f32.gmra.mrb[0].mxu0 %v996
      %v1200 = vpop.f32.mrb[0].mxu0
      %v1201 = vadd.f32 0.0, %v1200
      %v1202 = vpop.f32.mrb[0].mxu0
      %1203 = vmatprep.mubr.f32.mxu0 0.0
      %1204 = vmatmul.mubr.f32.gmra.mrb[0].mxu0 %v999
      %v1205 = vpop.f32.mrb[0].mxu0
      %v1206 = vadd.f32 0.0, %v1205
      %v1207 = vpop.f32.mrb[0].mxu0
      %1208 = vmatprep.mubr.f32.mxu0 0.0
      %1209 = vmatmul.mubr.f32.gmra.mrb[0].mxu0 %v1002
      %v1210 = vpop.f32.mrb[0].mxu0
      %v1211 = vadd.f32 0.0, %v1210
      %v1212 = vpop.f32.mrb[0].mxu0
      %1213 = vmatprep.mubr.f32.mxu0 0.0
      %1214 = vmatmul.mubr.f32.gmra.mrb[0].mxu0 %v1005
      %v1215 = vpop.f32.mrb[0].mxu0
      %v1216 = vadd.f32 0.0, %v1215
      %v1217 = vpop.f32.mrb[0].mxu0
      %1218 = vmatprep.mubr.f32.mxu0 0.0
      %1219 = vmatmul.mubr.f32.gmra.mrb[0].mxu0 %v1008
      %v1220 = vpop.f32.mrb[0].mxu0
      %v1221 = vadd.f32 0.0, %v1220
      %v1222 = vpop.f32.mrb[0].mxu0
      %1223 = vmatprep.mubr.f32.mxu0 0.0
      %1224 = vmatmul.mubr.f32.gmra.mrb[0].mxu0 %v1011
      %v1225 = vpop.f32.mrb[0].mxu0
      %v1226 = vadd.f32 0.0, %v1225
      %v1227 = vpop.f32.mrb[0].mxu0
      %1228 = vmatprep.mubr.f32.mxu0 0.0
      %1229 = vmatmul.mubr.f32.gmra.mrb[0].mxu0 %v1014
      %v1230 = vpop.f32.mrb[0].mxu0
      %v1231 = vadd.f32 0.0, %v1230
      %v1232 = vpop.f32.mrb[0].mxu0
      %1233 = vmatprep.mubr.f32.mxu0 0.0
      %1234 = vmatmul.mubr.f32.gmra.mrb[0].mxu0 %v1017
      %v1235 = vpop.f32.mrb[0].mxu0
      %v1236 = vadd.f32 0.0, %v1235
      %v1237 = vpop.f32.mrb[0].mxu0
      %1238 = vmatprep.mubr.f32.mxu0 0.0
      %1239 = vmatmul.mubr.f32.gmra.mrb[0].mxu0 %v1020
      %v1240 = vpop.f32.mrb[0].mxu0
      %v1241 = vadd.f32 0.0, %v1240
      %v1242 = vpop.f32.mrb[0].mxu0
      %1243 = vmatprep.mubr.f32.mxu0 0.0
      %1244 = vmatmul.mubr.f32.gmra.mrb[0].mxu0 %v1023
      %v1245 = vpop.f32.mrb[0].mxu0
      %v1246 = vadd.f32 0.0, %v1245
      %v1247 = vpop.f32.mrb[0].mxu0
      %1248 = vmatprep.mubr.f32.mxu0 0.0
      %1249 = vmatmul.mubr.f32.gmra.mrb[0].mxu0 %v1026
      %v1250 = vpop.f32.mrb[0].mxu0
      %v1251 = vadd.f32 0.0, %v1250
      %v1252 = vpop.f32.mrb[0].mxu0
      %1253 = vmatprep.mubr.f32.mxu0 0.0
      %1254 = vmatmul.mubr.f32.gmra.mrb[0].mxu0 %v1029
      %v1255 = vpop.f32.mrb[0].mxu0
      %v1256 = vadd.f32 0.0, %v1255
      %v1257 = vpop.f32.mrb[0].mxu0
      %1258 = vdwg.mxu0
      %v1259 = vadd.f32 %v743, %v1101
      %v1260 = vadd.f32 %v748, %v1106
      %v1261 = vadd.f32 %v753, %v1111
      %v1262 = vadd.f32 %v758, %v1116
      %v1263 = vadd.f32 %v763, %v1121
      %v1264 = vadd.f32 %v768, %v1126
      %v1265 = vadd.f32 %v773, %v1131
      %v1266 = vadd.f32 %v778, %v1136
      %v1267 = vadd.f32 %v783, %v1141
      %v1268 = vadd.f32 %v788, %v1146
      %v1269 = vadd.f32 %v793, %v1151
      %v1270 = vadd.f32 %v798, %v1156
      %v1271 = vadd.f32 %v803, %v1161
      %v1272 = vadd.f32 %v808, %v1166
      %v1273 = vadd.f32 %v813, %v1171
      %v1274 = vadd.f32 %v818, %v1176
      %v1275 = vadd.f32 %v823, %v1181
      %v1276 = vadd.f32 %v828, %v1186
      %v1277 = vadd.f32 %v833, %v1191
      %v1278 = vadd.f32 %v838, %v1196
      %v1279 = vadd.f32 %v843, %v1201
      %v1280 = vadd.f32 %v848, %v1206
      %v1281 = vadd.f32 %v853, %v1211
      %v1282 = vadd.f32 %v858, %v1216
      %v1283 = vadd.f32 %v863, %v1221
      %v1284 = vadd.f32 %v868, %v1226
      %v1285 = vadd.f32 %v873, %v1231
      %v1286 = vadd.f32 %v878, %v1236
      %v1287 = vadd.f32 %v883, %v1241
      %v1288 = vadd.f32 %v888, %v1246
      %v1289 = vadd.f32 %v893, %v1251
      %v1290 = vadd.f32 %v898, %v1256
      %s1291 = scalar_lea.vmem %s173, 24
      %v1292 = vld [vmem:[%s1291] sm:$0xff]
      %v1293 = vld [vmem:[%s1291 + $0x8] sm:$0xff]
      %v1294 = vld [vmem:[%s1291 + $0x18] sm:$0xff]
      %v1295 = vld [vmem:[%s1291 + $0x20] sm:$0xff]
      %v1296 = vld [vmem:[%s1291 + $0x30] sm:$0xff]
      %v1297 = vld [vmem:[%s1291 + $0x38] sm:$0xff]
      %v1298 = vld [vmem:[%s1291 + $0x48] sm:$0xff]
      %v1299 = vld [vmem:[%s1291 + $0x50] sm:$0xff]
      %v1300 = vld [vmem:[%s1291 + $0x60] sm:$0xff]
      %v1301 = vld [vmem:[%s1291 + $0x68] sm:$0xff]
      %v1302 = vld [vmem:[%s1291 + $0x78] sm:$0xff]
      %v1303 = vld [vmem:[%s1291 + $0x80] sm:$0xff]
      %v1304 = vld [vmem:[%s1291 + $0x90] sm:$0xff]
      %v1305 = vld [vmem:[%s1291 + $0x98] sm:$0xff]
      %v1306 = vld [vmem:[%s1291 + $0xa8] sm:$0xff]
      %v1307 = vld [vmem:[%s1291 + $0xb0] sm:$0xff]
      %v1308 = vld [vmem:[%s1291 + $0xc0] sm:$0xff]
      %v1309 = vld [vmem:[%s1291 + $0xc8] sm:$0xff]
      %v1310 = vld [vmem:[%s1291 + $0xd8] sm:$0xff]
      %v1311 = vld [vmem:[%s1291 + $0xe0] sm:$0xff]
      %v1312 = vld [vmem:[%s1291 + $0xf0] sm:$0xff]
      %v1313 = vld [vmem:[%s1291 + $0xf8] sm:$0xff]
      %v1314 = vld [vmem:[%s1291 + $0x108] sm:$0xff]
      %v1315 = vld [vmem:[%s1291 + $0x110] sm:$0xff]
      %v1316 = vld [vmem:[%s1291 + $0x120] sm:$0xff]
      %v1317 = vld [vmem:[%s1291 + $0x128] sm:$0xff]
      %v1318 = vld [vmem:[%s1291 + $0x138] sm:$0xff]
      %v1319 = vld [vmem:[%s1291 + $0x140] sm:$0xff]
      %v1320 = vld [vmem:[%s1291 + $0x150] sm:$0xff]
      %v1321 = vld [vmem:[%s1291 + $0x158] sm:$0xff]
      %v1322 = vld [vmem:[%s1291 + $0x168] sm:$0xff]
      %v1323 = vld [vmem:[%s1291 + $0x170] sm:$0xff]
      %s1324 = scalar_lea.vmem %s1, 12
      %v1325 = vld [vmem:[%s1324] sm:$0xf]
      %v1327 = vsel %vm251, %v1292, 0
      %v1330 = vsel %vm251, %v1293, 0
      %v1333 = vsel %vm251, %v1294, 0
      %v1336 = vsel %vm251, %v1295, 0
      %v1339 = vsel %vm251, %v1296, 0
      %v1342 = vsel %vm251, %v1297, 0
      %v1345 = vsel %vm251, %v1298, 0
      %v1348 = vsel %vm251, %v1299, 0
      %v1351 = vsel %vm251, %v1300, 0
      %v1354 = vsel %vm251, %v1301, 0
      %v1357 = vsel %vm251, %v1302, 0
      %v1360 = vsel %vm251, %v1303, 0
      %v1363 = vsel %vm251, %v1304, 0
      %v1366 = vsel %vm251, %v1305, 0
      %v1369 = vsel %vm251, %v1306, 0
      %v1372 = vsel %vm251, %v1307, 0
      %v1375 = vsel %vm251, %v1308, 0
      %v1378 = vsel %vm251, %v1309, 0
      %v1381 = vsel %vm251, %v1310, 0
      %v1384 = vsel %vm251, %v1311, 0
      %v1387 = vsel %vm251, %v1312, 0
      %v1390 = vsel %vm251, %v1313, 0
      %v1393 = vsel %vm251, %v1314, 0
      %v1396 = vsel %vm251, %v1315, 0
      %v1399 = vsel %vm251, %v1316, 0
      %v1402 = vsel %vm251, %v1317, 0
      %v1405 = vsel %vm251, %v1318, 0
      %v1408 = vsel %vm251, %v1319, 0
      %v1411 = vsel %vm251, %v1320, 0
      %v1414 = vsel %vm251, %v1321, 0
      %v1417 = vsel %vm251, %v1322, 0
      %v1420 = vsel %vm251, %v1323, 0
      %v1423 = vsel %vm348, %v1325, 0
      %1425 = vmatprep.subr.mxu0 0.0
      %1426 = vmatpush1.msra.mxu0 %v1423
      %1427 = vmatprep.subr.mxu0 0.0
      %1428 = vmatpush1.msra.mxu0 0.0
      %1429 = vmatprep.subr.mxu0 0.0
      %1430 = vmatpush1.msra.mxu0 0.0
      %1431 = vmatprep.subr.mxu0 0.0
      %1432 = vmatpush1.msra.mxu0 0.0
      %1433 = vmatprep.subr.mxu0 0.0
      %1434 = vmatpush1.msra.mxu0 0.0
      %1435 = vmatprep.subr.mxu0 0.0
      %1436 = vmatpush1.msra.mxu0 0.0
      %1437 = vmatprep.subr.mxu0 0.0
      %1438 = vmatpush1.msra.mxu0 0.0
      %1439 = vmatprep.subr.mxu0 0.0
      %1440 = vmatpush1.msra.mxu0 0.0
      %1441 = vmatprep.subr.mxu0 0.0
      %1442 = vmatpush1.msra.mxu0 0.0
      %1443 = vmatprep.subr.mxu0 0.0
      %1444 = vmatpush1.msra.mxu0 0.0
      %1445 = vmatprep.subr.mxu0 0.0
      %1446 = vmatpush1.msra.mxu0 0.0
      %1447 = vmatprep.subr.mxu0 0.0
      %1448 = vmatpush1.msra.mxu0 0.0
      %1449 = vmatprep.subr.mxu0 0.0
      %1450 = vmatpush1.msra.mxu0 0.0
      %1451 = vmatprep.subr.mxu0 0.0
      %1452 = vmatpush1.msra.mxu0 0.0
      %1453 = vmatprep.subr.mxu0 0.0
      %1454 = vmatpush1.msra.mxu0 0.0
      %1455 = vmatprep.subr.mxu0 0.0
      %1456 = vmatpush1.msra.mxu0 0.0
      %1457 = vmatprep.subr.mxu0 0.0
      %1458 = vmatpush1.msra.mxu0 0.0
      %1459 = vmatprep.subr.mxu0 0.0
      %1460 = vmatpush1.msra.mxu0 0.0
      %1461 = vmatprep.subr.mxu0 0.0
      %1462 = vmatpush1.msra.mxu0 0.0
      %1463 = vmatprep.subr.mxu0 0.0
      %1464 = vmatpush1.msra.mxu0 0.0
      %1465 = vmatprep.subr.mxu0 0.0
      %1466 = vmatpush1.msra.mxu0 0.0
      %1467 = vmatprep.subr.mxu0 0.0
      %1468 = vmatpush1.msra.mxu0 0.0
      %1469 = vmatprep.subr.mxu0 0.0
      %1470 = vmatpush1.msra.mxu0 0.0
      %1471 = vmatprep.subr.mxu0 0.0
      %1472 = vmatpush1.msra.mxu0 0.0
      %1473 = vmatprep.subr.mxu0 0.0
      %1474 = vmatpush1.msra.mxu0 0.0
      %1475 = vmatprep.subr.mxu0 0.0
      %1476 = vmatpush1.msra.mxu0 0.0
      %1477 = vmatprep.subr.mxu0 0.0
      %1478 = vmatpush1.msra.mxu0 0.0
      %1479 = vmatprep.subr.mxu0 0.0
      %1480 = vmatpush1.msra.mxu0 0.0
      %1481 = vmatprep.subr.mxu0 0.0
      %1482 = vmatpush1.msra.mxu0 0.0
      %1483 = vmatprep.subr.mxu0 0.0
      %1484 = vmatpush1.msra.mxu0 0.0
      %1485 = vmatprep.subr.mxu0 0.0
      %1486 = vmatpush1.msra.mxu0 0.0
      %1487 = vmatprep.subr.mxu0 0.0
      %1488 = vmatpush1.msra.mxu0 0.0
      %1489 = vmatprep.mubr.f32.mxu0 0.0
      %1490 = vmatmul.mubr.f32.gmra.mrb[0].mxu0 %v1327
      %v1491 = vpop.f32.mrb[0].mxu0
      %v1492 = vadd.f32 0.0, %v1491
      %v1493 = vpop.f32.mrb[0].mxu0
      %1494 = vmatprep.mubr.f32.mxu0 0.0
      %1495 = vmatmul.mubr.f32.gmra.mrb[0].mxu0 %v1330
      %v1496 = vpop.f32.mrb[0].mxu0
      %v1497 = vadd.f32 0.0, %v1496
      %v1498 = vpop.f32.mrb[0].mxu0
      %1499 = vmatprep.mubr.f32.mxu0 0.0
      %1500 = vmatmul.mubr.f32.gmra.mrb[0].mxu0 %v1333
      %v1501 = vpop.f32.mrb[0].mxu0
      %v1502 = vadd.f32 0.0, %v1501
      %v1503 = vpop.f32.mrb[0].mxu0
      %1504 = vmatprep.mubr.f32.mxu0 0.0
      %1505 = vmatmul.mubr.f32.gmra.mrb[0].mxu0 %v1336
      %v1506 = vpop.f32.mrb[0].mxu0
      %v1507 = vadd.f32 0.0, %v1506
      %v1508 = vpop.f32.mrb[0].mxu0
      %1509 = vmatprep.mubr.f32.mxu0 0.0
      %1510 = vmatmul.mubr.f32.gmra.mrb[0].mxu0 %v1339
      %v1511 = vpop.f32.mrb[0].mxu0
      %v1512 = vadd.f32 0.0, %v1511
      %v1513 = vpop.f32.mrb[0].mxu0
      %1514 = vmatprep.mubr.f32.mxu0 0.0
      %1515 = vmatmul.mubr.f32.gmra.mrb[0].mxu0 %v1342
      %v1516 = vpop.f32.mrb[0].mxu0
      %v1517 = vadd.f32 0.0, %v1516
      %v1518 = vpop.f32.mrb[0].mxu0
      %1519 = vmatprep.mubr.f32.mxu0 0.0
      %1520 = vmatmul.mubr.f32.gmra.mrb[0].mxu0 %v1345
      %v1521 = vpop.f32.mrb[0].mxu0
      %v1522 = vadd.f32 0.0, %v1521
      %v1523 = vpop.f32.mrb[0].mxu0
      %1524 = vmatprep.mubr.f32.mxu0 0.0
      %1525 = vmatmul.mubr.f32.gmra.mrb[0].mxu0 %v1348
      %v1526 = vpop.f32.mrb[0].mxu0
      %v1527 = vadd.f32 0.0, %v1526
      %v1528 = vpop.f32.mrb[0].mxu0
      %1529 = vmatprep.mubr.f32.mxu0 0.0
      %1530 = vmatmul.mubr.f32.gmra.mrb[0].mxu0 %v1351
      %v1531 = vpop.f32.mrb[0].mxu0
      %v1532 = vadd.f32 0.0, %v1531
      %v1533 = vpop.f32.mrb[0].mxu0
      %1534 = vmatprep.mubr.f32.mxu0 0.0
      %1535 = vmatmul.mubr.f32.gmra.mrb[0].mxu0 %v1354
      %v1536 = vpop.f32.mrb[0].mxu0
      %v1537 = vadd.f32 0.0, %v1536
      %v1538 = vpop.f32.mrb[0].mxu0
      %1539 = vmatprep.mubr.f32.mxu0 0.0
      %1540 = vmatmul.mubr.f32.gmra.mrb[0].mxu0 %v1357
      %v1541 = vpop.f32.mrb[0].mxu0
      %v1542 = vadd.f32 0.0, %v1541
      %v1543 = vpop.f32.mrb[0].mxu0
      %1544 = vmatprep.mubr.f32.mxu0 0.0
      %1545 = vmatmul.mubr.f32.gmra.mrb[0].mxu0 %v1360
      %v1546 = vpop.f32.mrb[0].mxu0
      %v1547 = vadd.f32 0.0, %v1546
      %v1548 = vpop.f32.mrb[0].mxu0
      %1549 = vmatprep.mubr.f32.mxu0 0.0
      %1550 = vmatmul.mubr.f32.gmra.mrb[0].mxu0 %v1363
      %v1551 = vpop.f32.mrb[0].mxu0
      %v1552 = vadd.f32 0.0, %v1551
      %v1553 = vpop.f32.mrb[0].mxu0
      %1554 = vmatprep.mubr.f32.mxu0 0.0
      %1555 = vmatmul.mubr.f32.gmra.mrb[0].mxu0 %v1366
      %v1556 = vpop.f32.mrb[0].mxu0
      %v1557 = vadd.f32 0.0, %v1556
      %v1558 = vpop.f32.mrb[0].mxu0
      %1559 = vmatprep.mubr.f32.mxu0 0.0
      %1560 = vmatmul.mubr.f32.gmra.mrb[0].mxu0 %v1369
      %v1561 = vpop.f32.mrb[0].mxu0
      %v1562 = vadd.f32 0.0, %v1561
      %v1563 = vpop.f32.mrb[0].mxu0
      %1564 = vmatprep.mubr.f32.mxu0 0.0
      %1565 = vmatmul.mubr.f32.gmra.mrb[0].mxu0 %v1372
      %v1566 = vpop.f32.mrb[0].mxu0
      %v1567 = vadd.f32 0.0, %v1566
      %v1568 = vpop.f32.mrb[0].mxu0
      %1569 = vmatprep.mubr.f32.mxu0 0.0
      %1570 = vmatmul.mubr.f32.gmra.mrb[0].mxu0 %v1375
      %v1571 = vpop.f32.mrb[0].mxu0
      %v1572 = vadd.f32 0.0, %v1571
      %v1573 = vpop.f32.mrb[0].mxu0
      %1574 = vmatprep.mubr.f32.mxu0 0.0
      %1575 = vmatmul.mubr.f32.gmra.mrb[0].mxu0 %v1378
      %v1576 = vpop.f32.mrb[0].mxu0
      %v1577 = vadd.f32 0.0, %v1576
      %v1578 = vpop.f32.mrb[0].mxu0
      %1579 = vmatprep.mubr.f32.mxu0 0.0
      %1580 = vmatmul.mubr.f32.gmra.mrb[0].mxu0 %v1381
      %v1581 = vpop.f32.mrb[0].mxu0
      %v1582 = vadd.f32 0.0, %v1581
      %v1583 = vpop.f32.mrb[0].mxu0
      %1584 = vmatprep.mubr.f32.mxu0 0.0
      %1585 = vmatmul.mubr.f32.gmra.mrb[0].mxu0 %v1384
      %v1586 = vpop.f32.mrb[0].mxu0
      %v1587 = vadd.f32 0.0, %v1586
      %v1588 = vpop.f32.mrb[0].mxu0
      %1589 = vmatprep.mubr.f32.mxu0 0.0
      %1590 = vmatmul.mubr.f32.gmra.mrb[0].mxu0 %v1387
      %v1591 = vpop.f32.mrb[0].mxu0
      %v1592 = vadd.f32 0.0, %v1591
      %v1593 = vpop.f32.mrb[0].mxu0
      %1594 = vmatprep.mubr.f32.mxu0 0.0
      %1595 = vmatmul.mubr.f32.gmra.mrb[0].mxu0 %v1390
      %v1596 = vpop.f32.mrb[0].mxu0
      %v1597 = vadd.f32 0.0, %v1596
      %v1598 = vpop.f32.mrb[0].mxu0
      %1599 = vmatprep.mubr.f32.mxu0 0.0
      %1600 = vmatmul.mubr.f32.gmra.mrb[0].mxu0 %v1393
      %v1601 = vpop.f32.mrb[0].mxu0
      %v1602 = vadd.f32 0.0, %v1601
      %v1603 = vpop.f32.mrb[0].mxu0
      %1604 = vmatprep.mubr.f32.mxu0 0.0
      %1605 = vmatmul.mubr.f32.gmra.mrb[0].mxu0 %v1396
      %v1606 = vpop.f32.mrb[0].mxu0
      %v1607 = vadd.f32 0.0, %v1606
      %v1608 = vpop.f32.mrb[0].mxu0
      %1609 = vmatprep.mubr.f32.mxu0 0.0
      %1610 = vmatmul.mubr.f32.gmra.mrb[0].mxu0 %v1399
      %v1611 = vpop.f32.mrb[0].mxu0
      %v1612 = vadd.f32 0.0, %v1611
      %v1613 = vpop.f32.mrb[0].mxu0
      %1614 = vmatprep.mubr.f32.mxu0 0.0
      %1615 = vmatmul.mubr.f32.gmra.mrb[0].mxu0 %v1402
      %v1616 = vpop.f32.mrb[0].mxu0
      %v1617 = vadd.f32 0.0, %v1616
      %v1618 = vpop.f32.mrb[0].mxu0
      %1619 = vmatprep.mubr.f32.mxu0 0.0
      %1620 = vmatmul.mubr.f32.gmra.mrb[0].mxu0 %v1405
      %v1621 = vpop.f32.mrb[0].mxu0
      %v1622 = vadd.f32 0.0, %v1621
      %v1623 = vpop.f32.mrb[0].mxu0
      %1624 = vmatprep.mubr.f32.mxu0 0.0
      %1625 = vmatmul.mubr.f32.gmra.mrb[0].mxu0 %v1408
      %v1626 = vpop.f32.mrb[0].mxu0
      %v1627 = vadd.f32 0.0, %v1626
      %v1628 = vpop.f32.mrb[0].mxu0
      %1629 = vmatprep.mubr.f32.mxu0 0.0
      %1630 = vmatmul.mubr.f32.gmra.mrb[0].mxu0 %v1411
      %v1631 = vpop.f32.mrb[0].mxu0
      %v1632 = vadd.f32 0.0, %v1631
      %v1633 = vpop.f32.mrb[0].mxu0
      %1634 = vmatprep.mubr.f32.mxu0 0.0
      %1635 = vmatmul.mubr.f32.gmra.mrb[0].mxu0 %v1414
      %v1636 = vpop.f32.mrb[0].mxu0
      %v1637 = vadd.f32 0.0, %v1636
      %v1638 = vpop.f32.mrb[0].mxu0
      %1639 = vmatprep.mubr.f32.mxu0 0.0
      %1640 = vmatmul.mubr.f32.gmra.mrb[0].mxu0 %v1417
      %v1641 = vpop.f32.mrb[0].mxu0
      %v1642 = vadd.f32 0.0, %v1641
      %v1643 = vpop.f32.mrb[0].mxu0
      %1644 = vmatprep.mubr.f32.mxu0 0.0
      %1645 = vmatmul.mubr.f32.gmra.mrb[0].mxu0 %v1420
      %v1646 = vpop.f32.mrb[0].mxu0
      %v1647 = vadd.f32 0.0, %v1646
      %v1648 = vpop.f32.mrb[0].mxu0
      %1649 = vdwg.mxu0
      %v1650 = vadd.f32 %v1259, %v1492
      %v1651 = vadd.f32 %v1260, %v1497
      %v1652 = vadd.f32 %v1261, %v1502
      %v1653 = vadd.f32 %v1262, %v1507
      %v1654 = vadd.f32 %v1263, %v1512
      %v1655 = vadd.f32 %v1264, %v1517
      %v1656 = vadd.f32 %v1265, %v1522
      %v1657 = vadd.f32 %v1266, %v1527
      %v1658 = vadd.f32 %v1267, %v1532
      %v1659 = vadd.f32 %v1268, %v1537
      %v1660 = vadd.f32 %v1269, %v1542
      %v1661 = vadd.f32 %v1270, %v1547
      %v1662 = vadd.f32 %v1271, %v1552
      %v1663 = vadd.f32 %v1272, %v1557
      %v1664 = vadd.f32 %v1273, %v1562
      %v1665 = vadd.f32 %v1274, %v1567
      %v1666 = vadd.f32 %v1275, %v1572
      %v1667 = vadd.f32 %v1276, %v1577
      %v1668 = vadd.f32 %v1277, %v1582
      %v1669 = vadd.f32 %v1278, %v1587
      %v1670 = vadd.f32 %v1279, %v1592
      %v1671 = vadd.f32 %v1280, %v1597
      %v1672 = vadd.f32 %v1281, %v1602
      %v1673 = vadd.f32 %v1282, %v1607
      %v1674 = vadd.f32 %v1283, %v1612
      %v1675 = vadd.f32 %v1284, %v1617
      %v1676 = vadd.f32 %v1285, %v1622
      %v1677 = vadd.f32 %v1286, %v1627
      %v1678 = vadd.f32 %v1287, %v1632
      %v1679 = vadd.f32 %v1288, %v1637
      %v1680 = vadd.f32 %v1289, %v1642
      %v1681 = vadd.f32 %v1290, %v1647
      %v1682 = vld [vmem:[%s1291 + $0x1] sm:$0xff]
      %v1683 = vld [vmem:[%s1291 + $0x9] sm:$0xff]
      %v1684 = vld [vmem:[%s1291 + $0x19] sm:$0xff]
      %v1685 = vld [vmem:[%s1291 + $0x21] sm:$0xff]
      %v1686 = vld [vmem:[%s1291 + $0x31] sm:$0xff]
      %v1687 = vld [vmem:[%s1291 + $0x39] sm:$0xff]
      %v1688 = vld [vmem:[%s1291 + $0x49] sm:$0xff]
      %v1689 = vld [vmem:[%s1291 + $0x51] sm:$0xff]
      %v1690 = vld [vmem:[%s1291 + $0x61] sm:$0xff]
      %v1691 = vld [vmem:[%s1291 + $0x69] sm:$0xff]
      %v1692 = vld [vmem:[%s1291 + $0x79] sm:$0xff]
      %v1693 = vld [vmem:[%s1291 + $0x81] sm:$0xff]
      %v1694 = vld [vmem:[%s1291 + $0x91] sm:$0xff]
      %v1695 = vld [vmem:[%s1291 + $0x99] sm:$0xff]
      %v1696 = vld [vmem:[%s1291 + $0xa9] sm:$0xff]
      %v1697 = vld [vmem:[%s1291 + $0xb1] sm:$0xff]
      %v1698 = vld [vmem:[%s1291 + $0xc1] sm:$0xff]
      %v1699 = vld [vmem:[%s1291 + $0xc9] sm:$0xff]
      %v1700 = vld [vmem:[%s1291 + $0xd9] sm:$0xff]
      %v1701 = vld [vmem:[%s1291 + $0xe1] sm:$0xff]
      %v1702 = vld [vmem:[%s1291 + $0xf1] sm:$0xff]
      %v1703 = vld [vmem:[%s1291 + $0xf9] sm:$0xff]
      %v1704 = vld [vmem:[%s1291 + $0x109] sm:$0xff]
      %v1705 = vld [vmem:[%s1291 + $0x111] sm:$0xff]
      %v1706 = vld [vmem:[%s1291 + $0x121] sm:$0xff]
      %v1707 = vld [vmem:[%s1291 + $0x129] sm:$0xff]
      %v1708 = vld [vmem:[%s1291 + $0x139] sm:$0xff]
      %v1709 = vld [vmem:[%s1291 + $0x141] sm:$0xff]
      %v1710 = vld [vmem:[%s1291 + $0x151] sm:$0xff]
      %v1711 = vld [vmem:[%s1291 + $0x159] sm:$0xff]
      %v1712 = vld [vmem:[%s1291 + $0x169] sm:$0xff]
      %v1713 = vld [vmem:[%s1291 + $0x171] sm:$0xff]
      %s1714 = scalar_lea.vmem %s1, 16
      %v1715 = vld [vmem:[%s1714] sm:$0xf]
      %v1717 = vsel %vm251, %v1682, 0
      %v1720 = vsel %vm251, %v1683, 0
      %v1723 = vsel %vm251, %v1684, 0
      %v1726 = vsel %vm251, %v1685, 0
      %v1729 = vsel %vm251, %v1686, 0
      %v1732 = vsel %vm251, %v1687, 0
      %v1735 = vsel %vm251, %v1688, 0
      %v1738 = vsel %vm251, %v1689, 0
      %v1741 = vsel %vm251, %v1690, 0
      %v1744 = vsel %vm251, %v1691, 0
      %v1747 = vsel %vm251, %v1692, 0
      %v1750 = vsel %vm251, %v1693, 0
      %v1753 = vsel %vm251, %v1694, 0
      %v1756 = vsel %vm251, %v1695, 0
      %v1759 = vsel %vm251, %v1696, 0
      %v1762 = vsel %vm251, %v1697, 0
      %v1765 = vsel %vm251, %v1698, 0
      %v1768 = vsel %vm251, %v1699, 0
      %v1771 = vsel %vm251, %v1700, 0
      %v1774 = vsel %vm251, %v1701, 0
      %v1777 = vsel %vm251, %v1702, 0
      %v1780 = vsel %vm251, %v1703, 0
      %v1783 = vsel %vm251, %v1704, 0
      %v1786 = vsel %vm251, %v1705, 0
      %v1789 = vsel %vm251, %v1706, 0
      %v1792 = vsel %vm251, %v1707, 0
      %v1795 = vsel %vm251, %v1708, 0
      %v1798 = vsel %vm251, %v1709, 0
      %v1801 = vsel %vm251, %v1710, 0
      %v1804 = vsel %vm251, %v1711, 0
      %v1807 = vsel %vm251, %v1712, 0
      %v1810 = vsel %vm251, %v1713, 0
      %v1813 = vsel %vm348, %v1715, 0
      %1815 = vmatprep.subr.mxu0 0.0
      %1816 = vmatpush1.msra.mxu0 %v1813
      %1817 = vmatprep.subr.mxu0 0.0
      %1818 = vmatpush1.msra.mxu0 0.0
      %1819 = vmatprep.subr.mxu0 0.0
      %1820 = vmatpush1.msra.mxu0 0.0
      %1821 = vmatprep.subr.mxu0 0.0
      %1822 = vmatpush1.msra.mxu0 0.0
      %1823 = vmatprep.subr.mxu0 0.0
      %1824 = vmatpush1.msra.mxu0 0.0
      %1825 = vmatprep.subr.mxu0 0.0
      %1826 = vmatpush1.msra.mxu0 0.0
      %1827 = vmatprep.subr.mxu0 0.0
      %1828 = vmatpush1.msra.mxu0 0.0
      %1829 = vmatprep.subr.mxu0 0.0
      %1830 = vmatpush1.msra.mxu0 0.0
      %1831 = vmatprep.subr.mxu0 0.0
      %1832 = vmatpush1.msra.mxu0 0.0
      %1833 = vmatprep.subr.mxu0 0.0
      %1834 = vmatpush1.msra.mxu0 0.0
      %1835 = vmatprep.subr.mxu0 0.0
      %1836 = vmatpush1.msra.mxu0 0.0
      %1837 = vmatprep.subr.mxu0 0.0
      %1838 = vmatpush1.msra.mxu0 0.0
      %1839 = vmatprep.subr.mxu0 0.0
      %1840 = vmatpush1.msra.mxu0 0.0
      %1841 = vmatprep.subr.mxu0 0.0
      %1842 = vmatpush1.msra.mxu0 0.0
      %1843 = vmatprep.subr.mxu0 0.0
      %1844 = vmatpush1.msra.mxu0 0.0
      %1845 = vmatprep.subr.mxu0 0.0
      %1846 = vmatpush1.msra.mxu0 0.0
      %1847 = vmatprep.subr.mxu0 0.0
      %1848 = vmatpush1.msra.mxu0 0.0
      %1849 = vmatprep.subr.mxu0 0.0
      %1850 = vmatpush1.msra.mxu0 0.0
      %1851 = vmatprep.subr.mxu0 0.0
      %1852 = vmatpush1.msra.mxu0 0.0
      %1853 = vmatprep.subr.mxu0 0.0
      %1854 = vmatpush1.msra.mxu0 0.0
      %1855 = vmatprep.subr.mxu0 0.0
      %1856 = vmatpush1.msra.mxu0 0.0
      %1857 = vmatprep.subr.mxu0 0.0
      %1858 = vmatpush1.msra.mxu0 0.0
      %1859 = vmatprep.subr.mxu0 0.0
      %1860 = vmatpush1.msra.mxu0 0.0
      %1861 = vmatprep.subr.mxu0 0.0
      %1862 = vmatpush1.msra.mxu0 0.0
      %1863 = vmatprep.subr.mxu0 0.0
      %1864 = vmatpush1.msra.mxu0 0.0
      %1865 = vmatprep.subr.mxu0 0.0
      %1866 = vmatpush1.msra.mxu0 0.0
      %1867 = vmatprep.subr.mxu0 0.0
      %1868 = vmatpush1.msra.mxu0 0.0
      %1869 = vmatprep.subr.mxu0 0.0
      %1870 = vmatpush1.msra.mxu0 0.0
      %1871 = vmatprep.subr.mxu0 0.0
      %1872 = vmatpush1.msra.mxu0 0.0
      %1873 = vmatprep.subr.mxu0 0.0
      %1874 = vmatpush1.msra.mxu0 0.0
      %1875 = vmatprep.subr.mxu0 0.0
      %1876 = vmatpush1.msra.mxu0 0.0
      %1877 = vmatprep.subr.mxu0 0.0
      %1878 = vmatpush1.msra.mxu0 0.0
      %1879 = vmatprep.mubr.f32.mxu0 0.0
      %1880 = vmatmul.mubr.f32.gmra.mrb[0].mxu0 %v1717
      %v1881 = vpop.f32.mrb[0].mxu0
      %v1882 = vadd.f32 0.0, %v1881
      %v1883 = vpop.f32.mrb[0].mxu0
      %1884 = vmatprep.mubr.f32.mxu0 0.0
      %1885 = vmatmul.mubr.f32.gmra.mrb[0].mxu0 %v1720
      %v1886 = vpop.f32.mrb[0].mxu0
      %v1887 = vadd.f32 0.0, %v1886
      %v1888 = vpop.f32.mrb[0].mxu0
      %1889 = vmatprep.mubr.f32.mxu0 0.0
      %1890 = vmatmul.mubr.f32.gmra.mrb[0].mxu0 %v1723
      %v1891 = vpop.f32.mrb[0].mxu0
      %v1892 = vadd.f32 0.0, %v1891
      %v1893 = vpop.f32.mrb[0].mxu0
      %1894 = vmatprep.mubr.f32.mxu0 0.0
      %1895 = vmatmul.mubr.f32.gmra.mrb[0].mxu0 %v1726
      %v1896 = vpop.f32.mrb[0].mxu0
      %v1897 = vadd.f32 0.0, %v1896
      %v1898 = vpop.f32.mrb[0].mxu0
      %1899 = vmatprep.mubr.f32.mxu0 0.0
      %1900 = vmatmul.mubr.f32.gmra.mrb[0].mxu0 %v1729
      %v1901 = vpop.f32.mrb[0].mxu0
      %v1902 = vadd.f32 0.0, %v1901
      %v1903 = vpop.f32.mrb[0].mxu0
      %1904 = vmatprep.mubr.f32.mxu0 0.0
      %1905 = vmatmul.mubr.f32.gmra.mrb[0].mxu0 %v1732
      %v1906 = vpop.f32.mrb[0].mxu0
      %v1907 = vadd.f32 0.0, %v1906
      %v1908 = vpop.f32.mrb[0].mxu0
      %1909 = vmatprep.mubr.f32.mxu0 0.0
      %1910 = vmatmul.mubr.f32.gmra.mrb[0].mxu0 %v1735
      %v1911 = vpop.f32.mrb[0].mxu0
      %v1912 = vadd.f32 0.0, %v1911
      %v1913 = vpop.f32.mrb[0].mxu0
      %1914 = vmatprep.mubr.f32.mxu0 0.0
      %1915 = vmatmul.mubr.f32.gmra.mrb[0].mxu0 %v1738
      %v1916 = vpop.f32.mrb[0].mxu0
      %v1917 = vadd.f32 0.0, %v1916
      %v1918 = vpop.f32.mrb[0].mxu0
      %1919 = vmatprep.mubr.f32.mxu0 0.0
      %1920 = vmatmul.mubr.f32.gmra.mrb[0].mxu0 %v1741
      %v1921 = vpop.f32.mrb[0].mxu0
      %v1922 = vadd.f32 0.0, %v1921
      %v1923 = vpop.f32.mrb[0].mxu0
      %1924 = vmatprep.mubr.f32.mxu0 0.0
      %1925 = vmatmul.mubr.f32.gmra.mrb[0].mxu0 %v1744
      %v1926 = vpop.f32.mrb[0].mxu0
      %v1927 = vadd.f32 0.0, %v1926
      %v1928 = vpop.f32.mrb[0].mxu0
      %1929 = vmatprep.mubr.f32.mxu0 0.0
      %1930 = vmatmul.mubr.f32.gmra.mrb[0].mxu0 %v1747
      %v1931 = vpop.f32.mrb[0].mxu0
      %v1932 = vadd.f32 0.0, %v1931
      %v1933 = vpop.f32.mrb[0].mxu0
      %1934 = vmatprep.mubr.f32.mxu0 0.0
      %1935 = vmatmul.mubr.f32.gmra.mrb[0].mxu0 %v1750
      %v1936 = vpop.f32.mrb[0].mxu0
      %v1937 = vadd.f32 0.0, %v1936
      %v1938 = vpop.f32.mrb[0].mxu0
      %1939 = vmatprep.mubr.f32.mxu0 0.0
      %1940 = vmatmul.mubr.f32.gmra.mrb[0].mxu0 %v1753
      %v1941 = vpop.f32.mrb[0].mxu0
      %v1942 = vadd.f32 0.0, %v1941
      %v1943 = vpop.f32.mrb[0].mxu0
      %1944 = vmatprep.mubr.f32.mxu0 0.0
      %1945 = vmatmul.mubr.f32.gmra.mrb[0].mxu0 %v1756
      %v1946 = vpop.f32.mrb[0].mxu0
      %v1947 = vadd.f32 0.0, %v1946
      %v1948 = vpop.f32.mrb[0].mxu0
      %1949 = vmatprep.mubr.f32.mxu0 0.0
      %1950 = vmatmul.mubr.f32.gmra.mrb[0].mxu0 %v1759
      %v1951 = vpop.f32.mrb[0].mxu0
      %v1952 = vadd.f32 0.0, %v1951
      %v1953 = vpop.f32.mrb[0].mxu0
      %1954 = vmatprep.mubr.f32.mxu0 0.0
      %1955 = vmatmul.mubr.f32.gmra.mrb[0].mxu0 %v1762
      %v1956 = vpop.f32.mrb[0].mxu0
      %v1957 = vadd.f32 0.0, %v1956
      %v1958 = vpop.f32.mrb[0].mxu0
      %1959 = vmatprep.mubr.f32.mxu0 0.0
      %1960 = vmatmul.mubr.f32.gmra.mrb[0].mxu0 %v1765
      %v1961 = vpop.f32.mrb[0].mxu0
      %v1962 = vadd.f32 0.0, %v1961
      %v1963 = vpop.f32.mrb[0].mxu0
      %1964 = vmatprep.mubr.f32.mxu0 0.0
      %1965 = vmatmul.mubr.f32.gmra.mrb[0].mxu0 %v1768
      %v1966 = vpop.f32.mrb[0].mxu0
      %v1967 = vadd.f32 0.0, %v1966
      %v1968 = vpop.f32.mrb[0].mxu0
      %1969 = vmatprep.mubr.f32.mxu0 0.0
      %1970 = vmatmul.mubr.f32.gmra.mrb[0].mxu0 %v1771
      %v1971 = vpop.f32.mrb[0].mxu0
      %v1972 = vadd.f32 0.0, %v1971
      %v1973 = vpop.f32.mrb[0].mxu0
      %1974 = vmatprep.mubr.f32.mxu0 0.0
      %1975 = vmatmul.mubr.f32.gmra.mrb[0].mxu0 %v1774
      %v1976 = vpop.f32.mrb[0].mxu0
      %v1977 = vadd.f32 0.0, %v1976
      %v1978 = vpop.f32.mrb[0].mxu0
      %1979 = vmatprep.mubr.f32.mxu0 0.0
      %1980 = vmatmul.mubr.f32.gmra.mrb[0].mxu0 %v1777
      %v1981 = vpop.f32.mrb[0].mxu0
      %v1982 = vadd.f32 0.0, %v1981
      %v1983 = vpop.f32.mrb[0].mxu0
      %1984 = vmatprep.mubr.f32.mxu0 0.0
      %1985 = vmatmul.mubr.f32.gmra.mrb[0].mxu0 %v1780
      %v1986 = vpop.f32.mrb[0].mxu0
      %v1987 = vadd.f32 0.0, %v1986
      %v1988 = vpop.f32.mrb[0].mxu0
      %1989 = vmatprep.mubr.f32.mxu0 0.0
      %1990 = vmatmul.mubr.f32.gmra.mrb[0].mxu0 %v1783
      %v1991 = vpop.f32.mrb[0].mxu0
      %v1992 = vadd.f32 0.0, %v1991
      %v1993 = vpop.f32.mrb[0].mxu0
      %1994 = vmatprep.mubr.f32.mxu0 0.0
      %1995 = vmatmul.mubr.f32.gmra.mrb[0].mxu0 %v1786
      %v1996 = vpop.f32.mrb[0].mxu0
      %v1997 = vadd.f32 0.0, %v1996
      %v1998 = vpop.f32.mrb[0].mxu0
      %1999 = vmatprep.mubr.f32.mxu0 0.0
      %2000 = vmatmul.mubr.f32.gmra.mrb[0].mxu0 %v1789
      %v2001 = vpop.f32.mrb[0].mxu0
      %v2002 = vadd.f32 0.0, %v2001
      %v2003 = vpop.f32.mrb[0].mxu0
      %2004 = vmatprep.mubr.f32.mxu0 0.0
      %2005 = vmatmul.mubr.f32.gmra.mrb[0].mxu0 %v1792
      %v2006 = vpop.f32.mrb[0].mxu0
      %v2007 = vadd.f32 0.0, %v2006
      %v2008 = vpop.f32.mrb[0].mxu0
      %2009 = vmatprep.mubr.f32.mxu0 0.0
      %2010 = vmatmul.mubr.f32.gmra.mrb[0].mxu0 %v1795
      %v2011 = vpop.f32.mrb[0].mxu0
      %v2012 = vadd.f32 0.0, %v2011
      %v2013 = vpop.f32.mrb[0].mxu0
      %2014 = vmatprep.mubr.f32.mxu0 0.0
      %2015 = vmatmul.mubr.f32.gmra.mrb[0].mxu0 %v1798
      %v2016 = vpop.f32.mrb[0].mxu0
      %v2017 = vadd.f32 0.0, %v2016
      %v2018 = vpop.f32.mrb[0].mxu0
      %2019 = vmatprep.mubr.f32.mxu0 0.0
      %2020 = vmatmul.mubr.f32.gmra.mrb[0].mxu0 %v1801
      %v2021 = vpop.f32.mrb[0].mxu0
      %v2022 = vadd.f32 0.0, %v2021
      %v2023 = vpop.f32.mrb[0].mxu0
      %2024 = vmatprep.mubr.f32.mxu0 0.0
      %2025 = vmatmul.mubr.f32.gmra.mrb[0].mxu0 %v1804
      %v2026 = vpop.f32.mrb[0].mxu0
      %v2027 = vadd.f32 0.0, %v2026
      %v2028 = vpop.f32.mrb[0].mxu0
      %2029 = vmatprep.mubr.f32.mxu0 0.0
      %2030 = vmatmul.mubr.f32.gmra.mrb[0].mxu0 %v1807
      %v2031 = vpop.f32.mrb[0].mxu0
      %v2032 = vadd.f32 0.0, %v2031
      %v2033 = vpop.f32.mrb[0].mxu0
      %2034 = vmatprep.mubr.f32.mxu0 0.0
      %2035 = vmatmul.mubr.f32.gmra.mrb[0].mxu0 %v1810
      %v2036 = vpop.f32.mrb[0].mxu0
      %v2037 = vadd.f32 0.0, %v2036
      %v2038 = vpop.f32.mrb[0].mxu0
      %2039 = vdwg.mxu0
      %v2040 = vadd.f32 %v1650, %v1882
      %v2041 = vadd.f32 %v1651, %v1887
      %v2042 = vadd.f32 %v1652, %v1892
      %v2043 = vadd.f32 %v1653, %v1897
      %v2044 = vadd.f32 %v1654, %v1902
      %v2045 = vadd.f32 %v1655, %v1907
      %v2046 = vadd.f32 %v1656, %v1912
      %v2047 = vadd.f32 %v1657, %v1917
      %v2048 = vadd.f32 %v1658, %v1922
      %v2049 = vadd.f32 %v1659, %v1927
      %v2050 = vadd.f32 %v1660, %v1932
      %v2051 = vadd.f32 %v1661, %v1937
      %v2052 = vadd.f32 %v1662, %v1942
      %v2053 = vadd.f32 %v1663, %v1947
      %v2054 = vadd.f32 %v1664, %v1952
      %v2055 = vadd.f32 %v1665, %v1957
      %v2056 = vadd.f32 %v1666, %v1962
      %v2057 = vadd.f32 %v1667, %v1967
      %v2058 = vadd.f32 %v1668, %v1972
      %v2059 = vadd.f32 %v1669, %v1977
      %v2060 = vadd.f32 %v1670, %v1982
      %v2061 = vadd.f32 %v1671, %v1987
      %v2062 = vadd.f32 %v1672, %v1992
      %v2063 = vadd.f32 %v1673, %v1997
      %v2064 = vadd.f32 %v1674, %v2002
      %v2065 = vadd.f32 %v1675, %v2007
      %v2066 = vadd.f32 %v1676, %v2012
      %v2067 = vadd.f32 %v1677, %v2017
      %v2068 = vadd.f32 %v1678, %v2022
      %v2069 = vadd.f32 %v1679, %v2027
      %v2070 = vadd.f32 %v1680, %v2032
      %v2071 = vadd.f32 %v1681, %v2037
      %v2072 = vld [vmem:[%s1291 + $0x2] sm:$0xff]
      %v2073 = vld [vmem:[%s1291 + $0xa] sm:$0xff]
      %v2074 = vld [vmem:[%s1291 + $0x1a] sm:$0xff]
      %v2075 = vld [vmem:[%s1291 + $0x22] sm:$0xff]
      %v2076 = vld [vmem:[%s1291 + $0x32] sm:$0xff]
      %v2077 = vld [vmem:[%s1291 + $0x3a] sm:$0xff]
      %v2078 = vld [vmem:[%s1291 + $0x4a] sm:$0xff]
      %v2079 = vld [vmem:[%s1291 + $0x52] sm:$0xff]
      %v2080 = vld [vmem:[%s1291 + $0x62] sm:$0xff]
      %v2081 = vld [vmem:[%s1291 + $0x6a] sm:$0xff]
      %v2082 = vld [vmem:[%s1291 + $0x7a] sm:$0xff]
      %v2083 = vld [vmem:[%s1291 + $0x82] sm:$0xff]
      %v2084 = vld [vmem:[%s1291 + $0x92] sm:$0xff]
      %v2085 = vld [vmem:[%s1291 + $0x9a] sm:$0xff]
      %v2086 = vld [vmem:[%s1291 + $0xaa] sm:$0xff]
      %v2087 = vld [vmem:[%s1291 + $0xb2] sm:$0xff]
      %v2088 = vld [vmem:[%s1291 + $0xc2] sm:$0xff]
      %v2089 = vld [vmem:[%s1291 + $0xca] sm:$0xff]
      %v2090 = vld [vmem:[%s1291 + $0xda] sm:$0xff]
      %v2091 = vld [vmem:[%s1291 + $0xe2] sm:$0xff]
      %v2092 = vld [vmem:[%s1291 + $0xf2] sm:$0xff]
      %v2093 = vld [vmem:[%s1291 + $0xfa] sm:$0xff]
      %v2094 = vld [vmem:[%s1291 + $0x10a] sm:$0xff]
      %v2095 = vld [vmem:[%s1291 + $0x112] sm:$0xff]
      %v2096 = vld [vmem:[%s1291 + $0x122] sm:$0xff]
      %v2097 = vld [vmem:[%s1291 + $0x12a] sm:$0xff]
      %v2098 = vld [vmem:[%s1291 + $0x13a] sm:$0xff]
      %v2099 = vld [vmem:[%s1291 + $0x142] sm:$0xff]
      %v2100 = vld [vmem:[%s1291 + $0x152] sm:$0xff]
      %v2101 = vld [vmem:[%s1291 + $0x15a] sm:$0xff]
      %v2102 = vld [vmem:[%s1291 + $0x16a] sm:$0xff]
      %v2103 = vld [vmem:[%s1291 + $0x172] sm:$0xff]
      %s2104 = scalar_lea.vmem %s1, 20
      %v2105 = vld [vmem:[%s2104] sm:$0xf]
      %v2107 = vsel %vm251, %v2072, 0
      %v2110 = vsel %vm251, %v2073, 0
      %v2113 = vsel %vm251, %v2074, 0
      %v2116 = vsel %vm251, %v2075, 0
      %v2119 = vsel %vm251, %v2076, 0
      %v2122 = vsel %vm251, %v2077, 0
      %v2125 = vsel %vm251, %v2078, 0
      %v2128 = vsel %vm251, %v2079, 0
      %v2131 = vsel %vm251, %v2080, 0
      %v2134 = vsel %vm251, %v2081, 0
      %v2137 = vsel %vm251, %v2082, 0
      %v2140 = vsel %vm251, %v2083, 0
      %v2143 = vsel %vm251, %v2084, 0
      %v2146 = vsel %vm251, %v2085, 0
      %v2149 = vsel %vm251, %v2086, 0
      %v2152 = vsel %vm251, %v2087, 0
      %v2155 = vsel %vm251, %v2088, 0
      %v2158 = vsel %vm251, %v2089, 0
      %v2161 = vsel %vm251, %v2090, 0
      %v2164 = vsel %vm251, %v2091, 0
      %v2167 = vsel %vm251, %v2092, 0
      %v2170 = vsel %vm251, %v2093, 0
      %v2173 = vsel %vm251, %v2094, 0
      %v2176 = vsel %vm251, %v2095, 0
      %v2179 = vsel %vm251, %v2096, 0
      %v2182 = vsel %vm251, %v2097, 0
      %v2185 = vsel %vm251, %v2098, 0
      %v2188 = vsel %vm251, %v2099, 0
      %v2191 = vsel %vm251, %v2100, 0
      %v2194 = vsel %vm251, %v2101, 0
      %v2197 = vsel %vm251, %v2102, 0
      %v2200 = vsel %vm251, %v2103, 0
      %v2203 = vsel %vm348, %v2105, 0
      %2205 = vmatprep.subr.mxu0 0.0
      %2206 = vmatpush1.msra.mxu0 %v2203
      %2207 = vmatprep.subr.mxu0 0.0
      %2208 = vmatpush1.msra.mxu0 0.0
      %2209 = vmatprep.subr.mxu0 0.0
      %2210 = vmatpush1.msra.mxu0 0.0
      %2211 = vmatprep.subr.mxu0 0.0
      %2212 = vmatpush1.msra.mxu0 0.0
      %2213 = vmatprep.subr.mxu0 0.0
      %2214 = vmatpush1.msra.mxu0 0.0
      %2215 = vmatprep.subr.mxu0 0.0
      %2216 = vmatpush1.msra.mxu0 0.0
      %2217 = vmatprep.subr.mxu0 0.0
      %2218 = vmatpush1.msra.mxu0 0.0
      %2219 = vmatprep.subr.mxu0 0.0
      %2220 = vmatpush1.msra.mxu0 0.0
      %2221 = vmatprep.subr.mxu0 0.0
      %2222 = vmatpush1.msra.mxu0 0.0
      %2223 = vmatprep.subr.mxu0 0.0
      %2224 = vmatpush1.msra.mxu0 0.0
      %2225 = vmatprep.subr.mxu0 0.0
      %2226 = vmatpush1.msra.mxu0 0.0
      %2227 = vmatprep.subr.mxu0 0.0
      %2228 = vmatpush1.msra.mxu0 0.0
      %2229 = vmatprep.subr.mxu0 0.0
      %2230 = vmatpush1.msra.mxu0 0.0
      %2231 = vmatprep.subr.mxu0 0.0
      %2232 = vmatpush1.msra.mxu0 0.0
      %2233 = vmatprep.subr.mxu0 0.0
      %2234 = vmatpush1.msra.mxu0 0.0
      %2235 = vmatprep.subr.mxu0 0.0
      %2236 = vmatpush1.msra.mxu0 0.0
      %2237 = vmatprep.subr.mxu0 0.0
      %2238 = vmatpush1.msra.mxu0 0.0
      %2239 = vmatprep.subr.mxu0 0.0
      %2240 = vmatpush1.msra.mxu0 0.0
      %2241 = vmatprep.subr.mxu0 0.0
      %2242 = vmatpush1.msra.mxu0 0.0
      %2243 = vmatprep.subr.mxu0 0.0
      %2244 = vmatpush1.msra.mxu0 0.0
      %2245 = vmatprep.subr.mxu0 0.0
      %2246 = vmatpush1.msra.mxu0 0.0
      %2247 = vmatprep.subr.mxu0 0.0
      %2248 = vmatpush1.msra.mxu0 0.0
      %2249 = vmatprep.subr.mxu0 0.0
      %2250 = vmatpush1.msra.mxu0 0.0
      %2251 = vmatprep.subr.mxu0 0.0
      %2252 = vmatpush1.msra.mxu0 0.0
      %2253 = vmatprep.subr.mxu0 0.0
      %2254 = vmatpush1.msra.mxu0 0.0
      %2255 = vmatprep.subr.mxu0 0.0
      %2256 = vmatpush1.msra.mxu0 0.0
      %2257 = vmatprep.subr.mxu0 0.0
      %2258 = vmatpush1.msra.mxu0 0.0
      %2259 = vmatprep.subr.mxu0 0.0
      %2260 = vmatpush1.msra.mxu0 0.0
      %2261 = vmatprep.subr.mxu0 0.0
      %2262 = vmatpush1.msra.mxu0 0.0
      %2263 = vmatprep.subr.mxu0 0.0
      %2264 = vmatpush1.msra.mxu0 0.0
      %2265 = vmatprep.subr.mxu0 0.0
      %2266 = vmatpush1.msra.mxu0 0.0
      %2267 = vmatprep.subr.mxu0 0.0
      %2268 = vmatpush1.msra.mxu0 0.0
      %2269 = vmatprep.mubr.f32.mxu0 0.0
      %2270 = vmatmul.mubr.f32.gmra.mrb[0].mxu0 %v2107
      %v2271 = vpop.f32.mrb[0].mxu0
      %v2272 = vadd.f32 0.0, %v2271
      %v2273 = vpop.f32.mrb[0].mxu0
      %2274 = vmatprep.mubr.f32.mxu0 0.0
      %2275 = vmatmul.mubr.f32.gmra.mrb[0].mxu0 %v2110
      %v2276 = vpop.f32.mrb[0].mxu0
      %v2277 = vadd.f32 0.0, %v2276
      %v2278 = vpop.f32.mrb[0].mxu0
      %2279 = vmatprep.mubr.f32.mxu0 0.0
      %2280 = vmatmul.mubr.f32.gmra.mrb[0].mxu0 %v2113
      %v2281 = vpop.f32.mrb[0].mxu0
      %v2282 = vadd.f32 0.0, %v2281
      %v2283 = vpop.f32.mrb[0].mxu0
      %2284 = vmatprep.mubr.f32.mxu0 0.0
      %2285 = vmatmul.mubr.f32.gmra.mrb[0].mxu0 %v2116
      %v2286 = vpop.f32.mrb[0].mxu0
      %v2287 = vadd.f32 0.0, %v2286
      %v2288 = vpop.f32.mrb[0].mxu0
      %2289 = vmatprep.mubr.f32.mxu0 0.0
      %2290 = vmatmul.mubr.f32.gmra.mrb[0].mxu0 %v2119
      %v2291 = vpop.f32.mrb[0].mxu0
      %v2292 = vadd.f32 0.0, %v2291
      %v2293 = vpop.f32.mrb[0].mxu0
      %2294 = vmatprep.mubr.f32.mxu0 0.0
      %2295 = vmatmul.mubr.f32.gmra.mrb[0].mxu0 %v2122
      %v2296 = vpop.f32.mrb[0].mxu0
      %v2297 = vadd.f32 0.0, %v2296
      %v2298 = vpop.f32.mrb[0].mxu0
      %2299 = vmatprep.mubr.f32.mxu0 0.0
      %2300 = vmatmul.mubr.f32.gmra.mrb[0].mxu0 %v2125
      %v2301 = vpop.f32.mrb[0].mxu0
      %v2302 = vadd.f32 0.0, %v2301
      %v2303 = vpop.f32.mrb[0].mxu0
      %2304 = vmatprep.mubr.f32.mxu0 0.0
      %2305 = vmatmul.mubr.f32.gmra.mrb[0].mxu0 %v2128
      %v2306 = vpop.f32.mrb[0].mxu0
      %v2307 = vadd.f32 0.0, %v2306
      %v2308 = vpop.f32.mrb[0].mxu0
      %2309 = vmatprep.mubr.f32.mxu0 0.0
      %2310 = vmatmul.mubr.f32.gmra.mrb[0].mxu0 %v2131
      %v2311 = vpop.f32.mrb[0].mxu0
      %v2312 = vadd.f32 0.0, %v2311
      %v2313 = vpop.f32.mrb[0].mxu0
      %2314 = vmatprep.mubr.f32.mxu0 0.0
      %2315 = vmatmul.mubr.f32.gmra.mrb[0].mxu0 %v2134
      %v2316 = vpop.f32.mrb[0].mxu0
      %v2317 = vadd.f32 0.0, %v2316
      %v2318 = vpop.f32.mrb[0].mxu0
      %2319 = vmatprep.mubr.f32.mxu0 0.0
      %2320 = vmatmul.mubr.f32.gmra.mrb[0].mxu0 %v2137
      %v2321 = vpop.f32.mrb[0].mxu0
      %v2322 = vadd.f32 0.0, %v2321
      %v2323 = vpop.f32.mrb[0].mxu0
      %2324 = vmatprep.mubr.f32.mxu0 0.0
      %2325 = vmatmul.mubr.f32.gmra.mrb[0].mxu0 %v2140
      %v2326 = vpop.f32.mrb[0].mxu0
      %v2327 = vadd.f32 0.0, %v2326
      %v2328 = vpop.f32.mrb[0].mxu0
      %2329 = vmatprep.mubr.f32.mxu0 0.0
      %2330 = vmatmul.mubr.f32.gmra.mrb[0].mxu0 %v2143
      %v2331 = vpop.f32.mrb[0].mxu0
      %v2332 = vadd.f32 0.0, %v2331
      %v2333 = vpop.f32.mrb[0].mxu0
      %2334 = vmatprep.mubr.f32.mxu0 0.0
      %2335 = vmatmul.mubr.f32.gmra.mrb[0].mxu0 %v2146
      %v2336 = vpop.f32.mrb[0].mxu0
      %v2337 = vadd.f32 0.0, %v2336
      %v2338 = vpop.f32.mrb[0].mxu0
      %2339 = vmatprep.mubr.f32.mxu0 0.0
      %2340 = vmatmul.mubr.f32.gmra.mrb[0].mxu0 %v2149
      %v2341 = vpop.f32.mrb[0].mxu0
      %v2342 = vadd.f32 0.0, %v2341
      %v2343 = vpop.f32.mrb[0].mxu0
      %2344 = vmatprep.mubr.f32.mxu0 0.0
      %2345 = vmatmul.mubr.f32.gmra.mrb[0].mxu0 %v2152
      %v2346 = vpop.f32.mrb[0].mxu0
      %v2347 = vadd.f32 0.0, %v2346
      %v2348 = vpop.f32.mrb[0].mxu0
      %2349 = vmatprep.mubr.f32.mxu0 0.0
      %2350 = vmatmul.mubr.f32.gmra.mrb[0].mxu0 %v2155
      %v2351 = vpop.f32.mrb[0].mxu0
      %v2352 = vadd.f32 0.0, %v2351
      %v2353 = vpop.f32.mrb[0].mxu0
      %2354 = vmatprep.mubr.f32.mxu0 0.0
      %2355 = vmatmul.mubr.f32.gmra.mrb[0].mxu0 %v2158
      %v2356 = vpop.f32.mrb[0].mxu0
      %v2357 = vadd.f32 0.0, %v2356
      %v2358 = vpop.f32.mrb[0].mxu0
      %2359 = vmatprep.mubr.f32.mxu0 0.0
      %2360 = vmatmul.mubr.f32.gmra.mrb[0].mxu0 %v2161
      %v2361 = vpop.f32.mrb[0].mxu0
      %v2362 = vadd.f32 0.0, %v2361
      %v2363 = vpop.f32.mrb[0].mxu0
      %2364 = vmatprep.mubr.f32.mxu0 0.0
      %2365 = vmatmul.mubr.f32.gmra.mrb[0].mxu0 %v2164
      %v2366 = vpop.f32.mrb[0].mxu0
      %v2367 = vadd.f32 0.0, %v2366
      %v2368 = vpop.f32.mrb[0].mxu0
      %2369 = vmatprep.mubr.f32.mxu0 0.0
      %2370 = vmatmul.mubr.f32.gmra.mrb[0].mxu0 %v2167
      %v2371 = vpop.f32.mrb[0].mxu0
      %v2372 = vadd.f32 0.0, %v2371
      %v2373 = vpop.f32.mrb[0].mxu0
      %2374 = vmatprep.mubr.f32.mxu0 0.0
      %2375 = vmatmul.mubr.f32.gmra.mrb[0].mxu0 %v2170
      %v2376 = vpop.f32.mrb[0].mxu0
      %v2377 = vadd.f32 0.0, %v2376
      %v2378 = vpop.f32.mrb[0].mxu0
      %2379 = vmatprep.mubr.f32.mxu0 0.0
      %2380 = vmatmul.mubr.f32.gmra.mrb[0].mxu0 %v2173
      %v2381 = vpop.f32.mrb[0].mxu0
      %v2382 = vadd.f32 0.0, %v2381
      %v2383 = vpop.f32.mrb[0].mxu0
      %2384 = vmatprep.mubr.f32.mxu0 0.0
      %2385 = vmatmul.mubr.f32.gmra.mrb[0].mxu0 %v2176
      %v2386 = vpop.f32.mrb[0].mxu0
      %v2387 = vadd.f32 0.0, %v2386
      %v2388 = vpop.f32.mrb[0].mxu0
      %2389 = vmatprep.mubr.f32.mxu0 0.0
      %2390 = vmatmul.mubr.f32.gmra.mrb[0].mxu0 %v2179
      %v2391 = vpop.f32.mrb[0].mxu0
      %v2392 = vadd.f32 0.0, %v2391
      %v2393 = vpop.f32.mrb[0].mxu0
      %2394 = vmatprep.mubr.f32.mxu0 0.0
      %2395 = vmatmul.mubr.f32.gmra.mrb[0].mxu0 %v2182
      %v2396 = vpop.f32.mrb[0].mxu0
      %v2397 = vadd.f32 0.0, %v2396
      %v2398 = vpop.f32.mrb[0].mxu0
      %2399 = vmatprep.mubr.f32.mxu0 0.0
      %2400 = vmatmul.mubr.f32.gmra.mrb[0].mxu0 %v2185
      %v2401 = vpop.f32.mrb[0].mxu0
      %v2402 = vadd.f32 0.0, %v2401
      %v2403 = vpop.f32.mrb[0].mxu0
      %2404 = vmatprep.mubr.f32.mxu0 0.0
      %2405 = vmatmul.mubr.f32.gmra.mrb[0].mxu0 %v2188
      %v2406 = vpop.f32.mrb[0].mxu0
      %v2407 = vadd.f32 0.0, %v2406
      %v2408 = vpop.f32.mrb[0].mxu0
      %2409 = vmatprep.mubr.f32.mxu0 0.0
      %2410 = vmatmul.mubr.f32.gmra.mrb[0].mxu0 %v2191
      %v2411 = vpop.f32.mrb[0].mxu0
      %v2412 = vadd.f32 0.0, %v2411
      %v2413 = vpop.f32.mrb[0].mxu0
      %2414 = vmatprep.mubr.f32.mxu0 0.0
      %2415 = vmatmul.mubr.f32.gmra.mrb[0].mxu0 %v2194
      %v2416 = vpop.f32.mrb[0].mxu0
      %v2417 = vadd.f32 0.0, %v2416
      %v2418 = vpop.f32.mrb[0].mxu0
      %2419 = vmatprep.mubr.f32.mxu0 0.0
      %2420 = vmatmul.mubr.f32.gmra.mrb[0].mxu0 %v2197
      %v2421 = vpop.f32.mrb[0].mxu0
      %v2422 = vadd.f32 0.0, %v2421
      %v2423 = vpop.f32.mrb[0].mxu0
      %2424 = vmatprep.mubr.f32.mxu0 0.0
      %2425 = vmatmul.mubr.f32.gmra.mrb[0].mxu0 %v2200
      %v2426 = vpop.f32.mrb[0].mxu0
      %v2427 = vadd.f32 0.0, %v2426
      %v2428 = vpop.f32.mrb[0].mxu0
      %2429 = vdwg.mxu0
      %v2430 = vadd.f32 %v2040, %v2272
      %v2431 = vadd.f32 %v2041, %v2277
      %v2432 = vadd.f32 %v2042, %v2282
      %v2433 = vadd.f32 %v2043, %v2287
      %v2434 = vadd.f32 %v2044, %v2292
      %v2435 = vadd.f32 %v2045, %v2297
      %v2436 = vadd.f32 %v2046, %v2302
      %v2437 = vadd.f32 %v2047, %v2307
      %v2438 = vadd.f32 %v2048, %v2312
      %v2439 = vadd.f32 %v2049, %v2317
      %v2440 = vadd.f32 %v2050, %v2322
      %v2441 = vadd.f32 %v2051, %v2327
      %v2442 = vadd.f32 %v2052, %v2332
      %v2443 = vadd.f32 %v2053, %v2337
      %v2444 = vadd.f32 %v2054, %v2342
      %v2445 = vadd.f32 %v2055, %v2347
      %v2446 = vadd.f32 %v2056, %v2352
      %v2447 = vadd.f32 %v2057, %v2357
      %v2448 = vadd.f32 %v2058, %v2362
      %v2449 = vadd.f32 %v2059, %v2367
      %v2450 = vadd.f32 %v2060, %v2372
      %v2451 = vadd.f32 %v2061, %v2377
      %v2452 = vadd.f32 %v2062, %v2382
      %v2453 = vadd.f32 %v2063, %v2387
      %v2454 = vadd.f32 %v2064, %v2392
      %v2455 = vadd.f32 %v2065, %v2397
      %v2456 = vadd.f32 %v2066, %v2402
      %v2457 = vadd.f32 %v2067, %v2407
      %v2458 = vadd.f32 %v2068, %v2412
      %v2459 = vadd.f32 %v2069, %v2417
      %v2460 = vadd.f32 %v2070, %v2422
      %v2461 = vadd.f32 %v2071, %v2427
      %s2462 = scalar_lea.vmem %s173, 48
      %v2463 = vld [vmem:[%s2462] sm:$0xff]
      %v2464 = vld [vmem:[%s2462 + $0x8] sm:$0xff]
      %v2465 = vld [vmem:[%s2462 + $0x18] sm:$0xff]
      %v2466 = vld [vmem:[%s2462 + $0x20] sm:$0xff]
      %v2467 = vld [vmem:[%s2462 + $0x30] sm:$0xff]
      %v2468 = vld [vmem:[%s2462 + $0x38] sm:$0xff]
      %v2469 = vld [vmem:[%s2462 + $0x48] sm:$0xff]
      %v2470 = vld [vmem:[%s2462 + $0x50] sm:$0xff]
      %v2471 = vld [vmem:[%s2462 + $0x60] sm:$0xff]
      %v2472 = vld [vmem:[%s2462 + $0x68] sm:$0xff]
      %v2473 = vld [vmem:[%s2462 + $0x78] sm:$0xff]
      %v2474 = vld [vmem:[%s2462 + $0x80] sm:$0xff]
      %v2475 = vld [vmem:[%s2462 + $0x90] sm:$0xff]
      %v2476 = vld [vmem:[%s2462 + $0x98] sm:$0xff]
      %v2477 = vld [vmem:[%s2462 + $0xa8] sm:$0xff]
      %v2478 = vld [vmem:[%s2462 + $0xb0] sm:$0xff]
      %v2479 = vld [vmem:[%s2462 + $0xc0] sm:$0xff]
      %v2480 = vld [vmem:[%s2462 + $0xc8] sm:$0xff]
      %v2481 = vld [vmem:[%s2462 + $0xd8] sm:$0xff]
      %v2482 = vld [vmem:[%s2462 + $0xe0] sm:$0xff]
      %v2483 = vld [vmem:[%s2462 + $0xf0] sm:$0xff]
      %v2484 = vld [vmem:[%s2462 + $0xf8] sm:$0xff]
      %v2485 = vld [vmem:[%s2462 + $0x108] sm:$0xff]
      %v2486 = vld [vmem:[%s2462 + $0x110] sm:$0xff]
      %v2487 = vld [vmem:[%s2462 + $0x120] sm:$0xff]
      %v2488 = vld [vmem:[%s2462 + $0x128] sm:$0xff]
      %v2489 = vld [vmem:[%s2462 + $0x138] sm:$0xff]
      %v2490 = vld [vmem:[%s2462 + $0x140] sm:$0xff]
      %v2491 = vld [vmem:[%s2462 + $0x150] sm:$0xff]
      %v2492 = vld [vmem:[%s2462 + $0x158] sm:$0xff]
      %v2493 = vld [vmem:[%s2462 + $0x168] sm:$0xff]
      %v2494 = vld [vmem:[%s2462 + $0x170] sm:$0xff]
      %s2495 = scalar_lea.vmem %s1, 24
      %v2496 = vld [vmem:[%s2495] sm:$0xf]
      %v2498 = vsel %vm251, %v2463, 0
      %v2501 = vsel %vm251, %v2464, 0
      %v2504 = vsel %vm251, %v2465, 0
      %v2507 = vsel %vm251, %v2466, 0
      %v2510 = vsel %vm251, %v2467, 0
      %v2513 = vsel %vm251, %v2468, 0
      %v2516 = vsel %vm251, %v2469, 0
      %v2519 = vsel %vm251, %v2470, 0
      %v2522 = vsel %vm251, %v2471, 0
      %v2525 = vsel %vm251, %v2472, 0
      %v2528 = vsel %vm251, %v2473, 0
      %v2531 = vsel %vm251, %v2474, 0
      %v2534 = vsel %vm251, %v2475, 0
      %v2537 = vsel %vm251, %v2476, 0
      %v2540 = vsel %vm251, %v2477, 0
      %v2543 = vsel %vm251, %v2478, 0
      %v2546 = vsel %vm251, %v2479, 0
      %v2549 = vsel %vm251, %v2480, 0
      %v2552 = vsel %vm251, %v2481, 0
      %v2555 = vsel %vm251, %v2482, 0
      %v2558 = vsel %vm251, %v2483, 0
      %v2561 = vsel %vm251, %v2484, 0
      %v2564 = vsel %vm251, %v2485, 0
      %v2567 = vsel %vm251, %v2486, 0
      %v2570 = vsel %vm251, %v2487, 0
      %v2573 = vsel %vm251, %v2488, 0
      %v2576 = vsel %vm251, %v2489, 0
      %v2579 = vsel %vm251, %v2490, 0
      %v2582 = vsel %vm251, %v2491, 0
      %v2585 = vsel %vm251, %v2492, 0
      %v2588 = vsel %vm251, %v2493, 0
      %v2591 = vsel %vm251, %v2494, 0
      %v2594 = vsel %vm348, %v2496, 0
      %2596 = vmatprep.subr.mxu0 0.0
      %2597 = vmatpush1.msra.mxu0 %v2594
      %2598 = vmatprep.subr.mxu0 0.0
      %2599 = vmatpush1.msra.mxu0 0.0
      %2600 = vmatprep.subr.mxu0 0.0
      %2601 = vmatpush1.msra.mxu0 0.0
      %2602 = vmatprep.subr.mxu0 0.0
      %2603 = vmatpush1.msra.mxu0 0.0
      %2604 = vmatprep.subr.mxu0 0.0
      %2605 = vmatpush1.msra.mxu0 0.0
      %2606 = vmatprep.subr.mxu0 0.0
      %2607 = vmatpush1.msra.mxu0 0.0
      %2608 = vmatprep.subr.mxu0 0.0
      %2609 = vmatpush1.msra.mxu0 0.0
      %2610 = vmatprep.subr.mxu0 0.0
      %2611 = vmatpush1.msra.mxu0 0.0
      %2612 = vmatprep.subr.mxu0 0.0
      %2613 = vmatpush1.msra.mxu0 0.0
      %2614 = vmatprep.subr.mxu0 0.0
      %2615 = vmatpush1.msra.mxu0 0.0
      %2616 = vmatprep.subr.mxu0 0.0
      %2617 = vmatpush1.msra.mxu0 0.0
      %2618 = vmatprep.subr.mxu0 0.0
      %2619 = vmatpush1.msra.mxu0 0.0
      %2620 = vmatprep.subr.mxu0 0.0
      %2621 = vmatpush1.msra.mxu0 0.0
      %2622 = vmatprep.subr.mxu0 0.0
      %2623 = vmatpush1.msra.mxu0 0.0
      %2624 = vmatprep.subr.mxu0 0.0
      %2625 = vmatpush1.msra.mxu0 0.0
      %2626 = vmatprep.subr.mxu0 0.0
      %2627 = vmatpush1.msra.mxu0 0.0
      %2628 = vmatprep.subr.mxu0 0.0
      %2629 = vmatpush1.msra.mxu0 0.0
      %2630 = vmatprep.subr.mxu0 0.0
      %2631 = vmatpush1.msra.mxu0 0.0
      %2632 = vmatprep.subr.mxu0 0.0
      %2633 = vmatpush1.msra.mxu0 0.0
      %2634 = vmatprep.subr.mxu0 0.0
      %2635 = vmatpush1.msra.mxu0 0.0
      %2636 = vmatprep.subr.mxu0 0.0
      %2637 = vmatpush1.msra.mxu0 0.0
      %2638 = vmatprep.subr.mxu0 0.0
      %2639 = vmatpush1.msra.mxu0 0.0
      %2640 = vmatprep.subr.mxu0 0.0
      %2641 = vmatpush1.msra.mxu0 0.0
      %2642 = vmatprep.subr.mxu0 0.0
      %2643 = vmatpush1.msra.mxu0 0.0
      %2644 = vmatprep.subr.mxu0 0.0
      %2645 = vmatpush1.msra.mxu0 0.0
      %2646 = vmatprep.subr.mxu0 0.0
      %2647 = vmatpush1.msra.mxu0 0.0
      %2648 = vmatprep.subr.mxu0 0.0
      %2649 = vmatpush1.msra.mxu0 0.0
      %2650 = vmatprep.subr.mxu0 0.0
      %2651 = vmatpush1.msra.mxu0 0.0
      %2652 = vmatprep.subr.mxu0 0.0
      %2653 = vmatpush1.msra.mxu0 0.0
      %2654 = vmatprep.subr.mxu0 0.0
      %2655 = vmatpush1.msra.mxu0 0.0
      %2656 = vmatprep.subr.mxu0 0.0
      %2657 = vmatpush1.msra.mxu0 0.0
      %2658 = vmatprep.subr.mxu0 0.0
      %2659 = vmatpush1.msra.mxu0 0.0
      %2660 = vmatprep.mubr.f32.mxu0 0.0
      %2661 = vmatmul.mubr.f32.gmra.mrb[0].mxu0 %v2498
      %v2662 = vpop.f32.mrb[0].mxu0
      %v2663 = vadd.f32 0.0, %v2662
      %v2664 = vpop.f32.mrb[0].mxu0
      %2665 = vmatprep.mubr.f32.mxu0 0.0
      %2666 = vmatmul.mubr.f32.gmra.mrb[0].mxu0 %v2501
      %v2667 = vpop.f32.mrb[0].mxu0
      %v2668 = vadd.f32 0.0, %v2667
      %v2669 = vpop.f32.mrb[0].mxu0
      %2670 = vmatprep.mubr.f32.mxu0 0.0
      %2671 = vmatmul.mubr.f32.gmra.mrb[0].mxu0 %v2504
      %v2672 = vpop.f32.mrb[0].mxu0
      %v2673 = vadd.f32 0.0, %v2672
      %v2674 = vpop.f32.mrb[0].mxu0
      %2675 = vmatprep.mubr.f32.mxu0 0.0
      %2676 = vmatmul.mubr.f32.gmra.mrb[0].mxu0 %v2507
      %v2677 = vpop.f32.mrb[0].mxu0
      %v2678 = vadd.f32 0.0, %v2677
      %v2679 = vpop.f32.mrb[0].mxu0
      %2680 = vmatprep.mubr.f32.mxu0 0.0
      %2681 = vmatmul.mubr.f32.gmra.mrb[0].mxu0 %v2510
      %v2682 = vpop.f32.mrb[0].mxu0
      %v2683 = vadd.f32 0.0, %v2682
      %v2684 = vpop.f32.mrb[0].mxu0
      %2685 = vmatprep.mubr.f32.mxu0 0.0
      %2686 = vmatmul.mubr.f32.gmra.mrb[0].mxu0 %v2513
      %v2687 = vpop.f32.mrb[0].mxu0
      %v2688 = vadd.f32 0.0, %v2687
      %v2689 = vpop.f32.mrb[0].mxu0
      %2690 = vmatprep.mubr.f32.mxu0 0.0
      %2691 = vmatmul.mubr.f32.gmra.mrb[0].mxu0 %v2516
      %v2692 = vpop.f32.mrb[0].mxu0
      %v2693 = vadd.f32 0.0, %v2692
      %v2694 = vpop.f32.mrb[0].mxu0
      %2695 = vmatprep.mubr.f32.mxu0 0.0
      %2696 = vmatmul.mubr.f32.gmra.mrb[0].mxu0 %v2519
      %v2697 = vpop.f32.mrb[0].mxu0
      %v2698 = vadd.f32 0.0, %v2697
      %v2699 = vpop.f32.mrb[0].mxu0
      %2700 = vmatprep.mubr.f32.mxu0 0.0
      %2701 = vmatmul.mubr.f32.gmra.mrb[0].mxu0 %v2522
      %v2702 = vpop.f32.mrb[0].mxu0
      %v2703 = vadd.f32 0.0, %v2702
      %v2704 = vpop.f32.mrb[0].mxu0
      %2705 = vmatprep.mubr.f32.mxu0 0.0
      %2706 = vmatmul.mubr.f32.gmra.mrb[0].mxu0 %v2525
      %v2707 = vpop.f32.mrb[0].mxu0
      %v2708 = vadd.f32 0.0, %v2707
      %v2709 = vpop.f32.mrb[0].mxu0
      %2710 = vmatprep.mubr.f32.mxu0 0.0
      %2711 = vmatmul.mubr.f32.gmra.mrb[0].mxu0 %v2528
      %v2712 = vpop.f32.mrb[0].mxu0
      %v2713 = vadd.f32 0.0, %v2712
      %v2714 = vpop.f32.mrb[0].mxu0
      %2715 = vmatprep.mubr.f32.mxu0 0.0
      %2716 = vmatmul.mubr.f32.gmra.mrb[0].mxu0 %v2531
      %v2717 = vpop.f32.mrb[0].mxu0
      %v2718 = vadd.f32 0.0, %v2717
      %v2719 = vpop.f32.mrb[0].mxu0
      %2720 = vmatprep.mubr.f32.mxu0 0.0
      %2721 = vmatmul.mubr.f32.gmra.mrb[0].mxu0 %v2534
      %v2722 = vpop.f32.mrb[0].mxu0
      %v2723 = vadd.f32 0.0, %v2722
      %v2724 = vpop.f32.mrb[0].mxu0
      %2725 = vmatprep.mubr.f32.mxu0 0.0
      %2726 = vmatmul.mubr.f32.gmra.mrb[0].mxu0 %v2537
      %v2727 = vpop.f32.mrb[0].mxu0
      %v2728 = vadd.f32 0.0, %v2727
      %v2729 = vpop.f32.mrb[0].mxu0
      %2730 = vmatprep.mubr.f32.mxu0 0.0
      %2731 = vmatmul.mubr.f32.gmra.mrb[0].mxu0 %v2540
      %v2732 = vpop.f32.mrb[0].mxu0
      %v2733 = vadd.f32 0.0, %v2732
      %v2734 = vpop.f32.mrb[0].mxu0
      %2735 = vmatprep.mubr.f32.mxu0 0.0
      %2736 = vmatmul.mubr.f32.gmra.mrb[0].mxu0 %v2543
      %v2737 = vpop.f32.mrb[0].mxu0
      %v2738 = vadd.f32 0.0, %v2737
      %v2739 = vpop.f32.mrb[0].mxu0
      %2740 = vmatprep.mubr.f32.mxu0 0.0
      %2741 = vmatmul.mubr.f32.gmra.mrb[0].mxu0 %v2546
      %v2742 = vpop.f32.mrb[0].mxu0
      %v2743 = vadd.f32 0.0, %v2742
      %v2744 = vpop.f32.mrb[0].mxu0
      %2745 = vmatprep.mubr.f32.mxu0 0.0
      %2746 = vmatmul.mubr.f32.gmra.mrb[0].mxu0 %v2549
      %v2747 = vpop.f32.mrb[0].mxu0
      %v2748 = vadd.f32 0.0, %v2747
      %v2749 = vpop.f32.mrb[0].mxu0
      %2750 = vmatprep.mubr.f32.mxu0 0.0
      %2751 = vmatmul.mubr.f32.gmra.mrb[0].mxu0 %v2552
      %v2752 = vpop.f32.mrb[0].mxu0
      %v2753 = vadd.f32 0.0, %v2752
      %v2754 = vpop.f32.mrb[0].mxu0
      %2755 = vmatprep.mubr.f32.mxu0 0.0
      %2756 = vmatmul.mubr.f32.gmra.mrb[0].mxu0 %v2555
      %v2757 = vpop.f32.mrb[0].mxu0
      %v2758 = vadd.f32 0.0, %v2757
      %v2759 = vpop.f32.mrb[0].mxu0
      %2760 = vmatprep.mubr.f32.mxu0 0.0
      %2761 = vmatmul.mubr.f32.gmra.mrb[0].mxu0 %v2558
      %v2762 = vpop.f32.mrb[0].mxu0
      %v2763 = vadd.f32 0.0, %v2762
      %v2764 = vpop.f32.mrb[0].mxu0
      %2765 = vmatprep.mubr.f32.mxu0 0.0
      %2766 = vmatmul.mubr.f32.gmra.mrb[0].mxu0 %v2561
      %v2767 = vpop.f32.mrb[0].mxu0
      %v2768 = vadd.f32 0.0, %v2767
      %v2769 = vpop.f32.mrb[0].mxu0
      %2770 = vmatprep.mubr.f32.mxu0 0.0
      %2771 = vmatmul.mubr.f32.gmra.mrb[0].mxu0 %v2564
      %v2772 = vpop.f32.mrb[0].mxu0
      %v2773 = vadd.f32 0.0, %v2772
      %v2774 = vpop.f32.mrb[0].mxu0
      %2775 = vmatprep.mubr.f32.mxu0 0.0
      %2776 = vmatmul.mubr.f32.gmra.mrb[0].mxu0 %v2567
      %v2777 = vpop.f32.mrb[0].mxu0
      %v2778 = vadd.f32 0.0, %v2777
      %v2779 = vpop.f32.mrb[0].mxu0
      %2780 = vmatprep.mubr.f32.mxu0 0.0
      %2781 = vmatmul.mubr.f32.gmra.mrb[0].mxu0 %v2570
      %v2782 = vpop.f32.mrb[0].mxu0
      %v2783 = vadd.f32 0.0, %v2782
      %v2784 = vpop.f32.mrb[0].mxu0
      %2785 = vmatprep.mubr.f32.mxu0 0.0
      %2786 = vmatmul.mubr.f32.gmra.mrb[0].mxu0 %v2573
      %v2787 = vpop.f32.mrb[0].mxu0
      %v2788 = vadd.f32 0.0, %v2787
      %v2789 = vpop.f32.mrb[0].mxu0
      %2790 = vmatprep.mubr.f32.mxu0 0.0
      %2791 = vmatmul.mubr.f32.gmra.mrb[0].mxu0 %v2576
      %v2792 = vpop.f32.mrb[0].mxu0
      %v2793 = vadd.f32 0.0, %v2792
      %v2794 = vpop.f32.mrb[0].mxu0
      %2795 = vmatprep.mubr.f32.mxu0 0.0
      %2796 = vmatmul.mubr.f32.gmra.mrb[0].mxu0 %v2579
      %v2797 = vpop.f32.mrb[0].mxu0
      %v2798 = vadd.f32 0.0, %v2797
      %v2799 = vpop.f32.mrb[0].mxu0
      %2800 = vmatprep.mubr.f32.mxu0 0.0
      %2801 = vmatmul.mubr.f32.gmra.mrb[0].mxu0 %v2582
      %v2802 = vpop.f32.mrb[0].mxu0
      %v2803 = vadd.f32 0.0, %v2802
      %v2804 = vpop.f32.mrb[0].mxu0
      %2805 = vmatprep.mubr.f32.mxu0 0.0
      %2806 = vmatmul.mubr.f32.gmra.mrb[0].mxu0 %v2585
      %v2807 = vpop.f32.mrb[0].mxu0
      %v2808 = vadd.f32 0.0, %v2807
      %v2809 = vpop.f32.mrb[0].mxu0
      %2810 = vmatprep.mubr.f32.mxu0 0.0
      %2811 = vmatmul.mubr.f32.gmra.mrb[0].mxu0 %v2588
      %v2812 = vpop.f32.mrb[0].mxu0
      %v2813 = vadd.f32 0.0, %v2812
      %v2814 = vpop.f32.mrb[0].mxu0
      %2815 = vmatprep.mubr.f32.mxu0 0.0
      %2816 = vmatmul.mubr.f32.gmra.mrb[0].mxu0 %v2591
      %v2817 = vpop.f32.mrb[0].mxu0
      %v2818 = vadd.f32 0.0, %v2817
      %v2819 = vpop.f32.mrb[0].mxu0
      %2820 = vdwg.mxu0
      %v2821 = vadd.f32 %v2430, %v2663
      %v2822 = vadd.f32 %v2431, %v2668
      %v2823 = vadd.f32 %v2432, %v2673
      %v2824 = vadd.f32 %v2433, %v2678
      %v2825 = vadd.f32 %v2434, %v2683
      %v2826 = vadd.f32 %v2435, %v2688
      %v2827 = vadd.f32 %v2436, %v2693
      %v2828 = vadd.f32 %v2437, %v2698
      %v2829 = vadd.f32 %v2438, %v2703
      %v2830 = vadd.f32 %v2439, %v2708
      %v2831 = vadd.f32 %v2440, %v2713
      %v2832 = vadd.f32 %v2441, %v2718
      %v2833 = vadd.f32 %v2442, %v2723
      %v2834 = vadd.f32 %v2443, %v2728
      %v2835 = vadd.f32 %v2444, %v2733
      %v2836 = vadd.f32 %v2445, %v2738
      %v2837 = vadd.f32 %v2446, %v2743
      %v2838 = vadd.f32 %v2447, %v2748
      %v2839 = vadd.f32 %v2448, %v2753
      %v2840 = vadd.f32 %v2449, %v2758
      %v2841 = vadd.f32 %v2450, %v2763
      %v2842 = vadd.f32 %v2451, %v2768
      %v2843 = vadd.f32 %v2452, %v2773
      %v2844 = vadd.f32 %v2453, %v2778
      %v2845 = vadd.f32 %v2454, %v2783
      %v2846 = vadd.f32 %v2455, %v2788
      %v2847 = vadd.f32 %v2456, %v2793
      %v2848 = vadd.f32 %v2457, %v2798
      %v2849 = vadd.f32 %v2458, %v2803
      %v2850 = vadd.f32 %v2459, %v2808
      %v2851 = vadd.f32 %v2460, %v2813
      %v2852 = vadd.f32 %v2461, %v2818
      %v2853 = vld [vmem:[%s2462 + $0x1] sm:$0xff]
      %v2854 = vld [vmem:[%s2462 + $0x9] sm:$0xff]
      %v2855 = vld [vmem:[%s2462 + $0x19] sm:$0xff]
      %v2856 = vld [vmem:[%s2462 + $0x21] sm:$0xff]
      %v2857 = vld [vmem:[%s2462 + $0x31] sm:$0xff]
      %v2858 = vld [vmem:[%s2462 + $0x39] sm:$0xff]
      %v2859 = vld [vmem:[%s2462 + $0x49] sm:$0xff]
      %v2860 = vld [vmem:[%s2462 + $0x51] sm:$0xff]
      %v2861 = vld [vmem:[%s2462 + $0x61] sm:$0xff]
      %v2862 = vld [vmem:[%s2462 + $0x69] sm:$0xff]
      %v2863 = vld [vmem:[%s2462 + $0x79] sm:$0xff]
      %v2864 = vld [vmem:[%s2462 + $0x81] sm:$0xff]
      %v2865 = vld [vmem:[%s2462 + $0x91] sm:$0xff]
      %v2866 = vld [vmem:[%s2462 + $0x99] sm:$0xff]
      %v2867 = vld [vmem:[%s2462 + $0xa9] sm:$0xff]
      %v2868 = vld [vmem:[%s2462 + $0xb1] sm:$0xff]
      %v2869 = vld [vmem:[%s2462 + $0xc1] sm:$0xff]
      %v2870 = vld [vmem:[%s2462 + $0xc9] sm:$0xff]
      %v2871 = vld [vmem:[%s2462 + $0xd9] sm:$0xff]
      %v2872 = vld [vmem:[%s2462 + $0xe1] sm:$0xff]
      %v2873 = vld [vmem:[%s2462 + $0xf1] sm:$0xff]
      %v2874 = vld [vmem:[%s2462 + $0xf9] sm:$0xff]
      %v2875 = vld [vmem:[%s2462 + $0x109] sm:$0xff]
      %v2876 = vld [vmem:[%s2462 + $0x111] sm:$0xff]
      %v2877 = vld [vmem:[%s2462 + $0x121] sm:$0xff]
      %v2878 = vld [vmem:[%s2462 + $0x129] sm:$0xff]
      %v2879 = vld [vmem:[%s2462 + $0x139] sm:$0xff]
      %v2880 = vld [vmem:[%s2462 + $0x141] sm:$0xff]
      %v2881 = vld [vmem:[%s2462 + $0x151] sm:$0xff]
      %v2882 = vld [vmem:[%s2462 + $0x159] sm:$0xff]
      %v2883 = vld [vmem:[%s2462 + $0x169] sm:$0xff]
      %v2884 = vld [vmem:[%s2462 + $0x171] sm:$0xff]
      %s2885 = scalar_lea.vmem %s1, 28
      %v2886 = vld [vmem:[%s2885] sm:$0xf]
      %v2888 = vsel %vm251, %v2853, 0
      %v2891 = vsel %vm251, %v2854, 0
      %v2894 = vsel %vm251, %v2855, 0
      %v2897 = vsel %vm251, %v2856, 0
      %v2900 = vsel %vm251, %v2857, 0
      %v2903 = vsel %vm251, %v2858, 0
      %v2906 = vsel %vm251, %v2859, 0
      %v2909 = vsel %vm251, %v2860, 0
      %v2912 = vsel %vm251, %v2861, 0
      %v2915 = vsel %vm251, %v2862, 0
      %v2918 = vsel %vm251, %v2863, 0
      %v2921 = vsel %vm251, %v2864, 0
      %v2924 = vsel %vm251, %v2865, 0
      %v2927 = vsel %vm251, %v2866, 0
      %v2930 = vsel %vm251, %v2867, 0
      %v2933 = vsel %vm251, %v2868, 0
      %v2936 = vsel %vm251, %v2869, 0
      %v2939 = vsel %vm251, %v2870, 0
      %v2942 = vsel %vm251, %v2871, 0
      %v2945 = vsel %vm251, %v2872, 0
      %v2948 = vsel %vm251, %v2873, 0
      %v2951 = vsel %vm251, %v2874, 0
      %v2954 = vsel %vm251, %v2875, 0
      %v2957 = vsel %vm251, %v2876, 0
      %v2960 = vsel %vm251, %v2877, 0
      %v2963 = vsel %vm251, %v2878, 0
      %v2966 = vsel %vm251, %v2879, 0
      %v2969 = vsel %vm251, %v2880, 0
      %v2972 = vsel %vm251, %v2881, 0
      %v2975 = vsel %vm251, %v2882, 0
      %v2978 = vsel %vm251, %v2883, 0
      %v2981 = vsel %vm251, %v2884, 0
      %v2984 = vsel %vm348, %v2886, 0
      %2986 = vmatprep.subr.mxu0 0.0
      %2987 = vmatpush1.msra.mxu0 %v2984
      %2988 = vmatprep.subr.mxu0 0.0
      %2989 = vmatpush1.msra.mxu0 0.0
      %2990 = vmatprep.subr.mxu0 0.0
      %2991 = vmatpush1.msra.mxu0 0.0
      %2992 = vmatprep.subr.mxu0 0.0
      %2993 = vmatpush1.msra.mxu0 0.0
      %2994 = vmatprep.subr.mxu0 0.0
      %2995 = vmatpush1.msra.mxu0 0.0
      %2996 = vmatprep.subr.mxu0 0.0
      %2997 = vmatpush1.msra.mxu0 0.0
      %2998 = vmatprep.subr.mxu0 0.0
      %2999 = vmatpush1.msra.mxu0 0.0
      %3000 = vmatprep.subr.mxu0 0.0
      %3001 = vmatpush1.msra.mxu0 0.0
      %3002 = vmatprep.subr.mxu0 0.0
      %3003 = vmatpush1.msra.mxu0 0.0
      %3004 = vmatprep.subr.mxu0 0.0
      %3005 = vmatpush1.msra.mxu0 0.0
      %3006 = vmatprep.subr.mxu0 0.0
      %3007 = vmatpush1.msra.mxu0 0.0
      %3008 = vmatprep.subr.mxu0 0.0
      %3009 = vmatpush1.msra.mxu0 0.0
      %3010 = vmatprep.subr.mxu0 0.0
      %3011 = vmatpush1.msra.mxu0 0.0
      %3012 = vmatprep.subr.mxu0 0.0
      %3013 = vmatpush1.msra.mxu0 0.0
      %3014 = vmatprep.subr.mxu0 0.0
      %3015 = vmatpush1.msra.mxu0 0.0
      %3016 = vmatprep.subr.mxu0 0.0
      %3017 = vmatpush1.msra.mxu0 0.0
      %3018 = vmatprep.subr.mxu0 0.0
      %3019 = vmatpush1.msra.mxu0 0.0
      %3020 = vmatprep.subr.mxu0 0.0
      %3021 = vmatpush1.msra.mxu0 0.0
      %3022 = vmatprep.subr.mxu0 0.0
      %3023 = vmatpush1.msra.mxu0 0.0
      %3024 = vmatprep.subr.mxu0 0.0
      %3025 = vmatpush1.msra.mxu0 0.0
      %3026 = vmatprep.subr.mxu0 0.0
      %3027 = vmatpush1.msra.mxu0 0.0
      %3028 = vmatprep.subr.mxu0 0.0
      %3029 = vmatpush1.msra.mxu0 0.0
      %3030 = vmatprep.subr.mxu0 0.0
      %3031 = vmatpush1.msra.mxu0 0.0
      %3032 = vmatprep.subr.mxu0 0.0
      %3033 = vmatpush1.msra.mxu0 0.0
      %3034 = vmatprep.subr.mxu0 0.0
      %3035 = vmatpush1.msra.mxu0 0.0
      %3036 = vmatprep.subr.mxu0 0.0
      %3037 = vmatpush1.msra.mxu0 0.0
      %3038 = vmatprep.subr.mxu0 0.0
      %3039 = vmatpush1.msra.mxu0 0.0
      %3040 = vmatprep.subr.mxu0 0.0
      %3041 = vmatpush1.msra.mxu0 0.0
      %3042 = vmatprep.subr.mxu0 0.0
      %3043 = vmatpush1.msra.mxu0 0.0
      %3044 = vmatprep.subr.mxu0 0.0
      %3045 = vmatpush1.msra.mxu0 0.0
      %3046 = vmatprep.subr.mxu0 0.0
      %3047 = vmatpush1.msra.mxu0 0.0
      %3048 = vmatprep.subr.mxu0 0.0
      %3049 = vmatpush1.msra.mxu0 0.0
      %3050 = vmatprep.mubr.f32.mxu0 0.0
      %3051 = vmatmul.mubr.f32.gmra.mrb[0].mxu0 %v2888
      %v3052 = vpop.f32.mrb[0].mxu0
      %v3053 = vadd.f32 0.0, %v3052
      %v3054 = vpop.f32.mrb[0].mxu0
      %3055 = vmatprep.mubr.f32.mxu0 0.0
      %3056 = vmatmul.mubr.f32.gmra.mrb[0].mxu0 %v2891
      %v3057 = vpop.f32.mrb[0].mxu0
      %v3058 = vadd.f32 0.0, %v3057
      %v3059 = vpop.f32.mrb[0].mxu0
      %3060 = vmatprep.mubr.f32.mxu0 0.0
      %3061 = vmatmul.mubr.f32.gmra.mrb[0].mxu0 %v2894
      %v3062 = vpop.f32.mrb[0].mxu0
      %v3063 = vadd.f32 0.0, %v3062
      %v3064 = vpop.f32.mrb[0].mxu0
      %3065 = vmatprep.mubr.f32.mxu0 0.0
      %3066 = vmatmul.mubr.f32.gmra.mrb[0].mxu0 %v2897
      %v3067 = vpop.f32.mrb[0].mxu0
      %v3068 = vadd.f32 0.0, %v3067
      %v3069 = vpop.f32.mrb[0].mxu0
      %3070 = vmatprep.mubr.f32.mxu0 0.0
      %3071 = vmatmul.mubr.f32.gmra.mrb[0].mxu0 %v2900
      %v3072 = vpop.f32.mrb[0].mxu0
      %v3073 = vadd.f32 0.0, %v3072
      %v3074 = vpop.f32.mrb[0].mxu0
      %3075 = vmatprep.mubr.f32.mxu0 0.0
      %3076 = vmatmul.mubr.f32.gmra.mrb[0].mxu0 %v2903
      %v3077 = vpop.f32.mrb[0].mxu0
      %v3078 = vadd.f32 0.0, %v3077
      %v3079 = vpop.f32.mrb[0].mxu0
      %3080 = vmatprep.mubr.f32.mxu0 0.0
      %3081 = vmatmul.mubr.f32.gmra.mrb[0].mxu0 %v2906
      %v3082 = vpop.f32.mrb[0].mxu0
      %v3083 = vadd.f32 0.0, %v3082
      %v3084 = vpop.f32.mrb[0].mxu0
      %3085 = vmatprep.mubr.f32.mxu0 0.0
      %3086 = vmatmul.mubr.f32.gmra.mrb[0].mxu0 %v2909
      %v3087 = vpop.f32.mrb[0].mxu0
      %v3088 = vadd.f32 0.0, %v3087
      %v3089 = vpop.f32.mrb[0].mxu0
      %3090 = vmatprep.mubr.f32.mxu0 0.0
      %3091 = vmatmul.mubr.f32.gmra.mrb[0].mxu0 %v2912
      %v3092 = vpop.f32.mrb[0].mxu0
      %v3093 = vadd.f32 0.0, %v3092
      %v3094 = vpop.f32.mrb[0].mxu0
      %3095 = vmatprep.mubr.f32.mxu0 0.0
      %3096 = vmatmul.mubr.f32.gmra.mrb[0].mxu0 %v2915
      %v3097 = vpop.f32.mrb[0].mxu0
      %v3098 = vadd.f32 0.0, %v3097
      %v3099 = vpop.f32.mrb[0].mxu0
      %3100 = vmatprep.mubr.f32.mxu0 0.0
      %3101 = vmatmul.mubr.f32.gmra.mrb[0].mxu0 %v2918
      %v3102 = vpop.f32.mrb[0].mxu0
      %v3103 = vadd.f32 0.0, %v3102
      %v3104 = vpop.f32.mrb[0].mxu0
      %3105 = vmatprep.mubr.f32.mxu0 0.0
      %3106 = vmatmul.mubr.f32.gmra.mrb[0].mxu0 %v2921
      %v3107 = vpop.f32.mrb[0].mxu0
      %v3108 = vadd.f32 0.0, %v3107
      %v3109 = vpop.f32.mrb[0].mxu0
      %3110 = vmatprep.mubr.f32.mxu0 0.0
      %3111 = vmatmul.mubr.f32.gmra.mrb[0].mxu0 %v2924
      %v3112 = vpop.f32.mrb[0].mxu0
      %v3113 = vadd.f32 0.0, %v3112
      %v3114 = vpop.f32.mrb[0].mxu0
      %3115 = vmatprep.mubr.f32.mxu0 0.0
      %3116 = vmatmul.mubr.f32.gmra.mrb[0].mxu0 %v2927
      %v3117 = vpop.f32.mrb[0].mxu0
      %v3118 = vadd.f32 0.0, %v3117
      %v3119 = vpop.f32.mrb[0].mxu0
      %3120 = vmatprep.mubr.f32.mxu0 0.0
      %3121 = vmatmul.mubr.f32.gmra.mrb[0].mxu0 %v2930
      %v3122 = vpop.f32.mrb[0].mxu0
      %v3123 = vadd.f32 0.0, %v3122
      %v3124 = vpop.f32.mrb[0].mxu0
      %3125 = vmatprep.mubr.f32.mxu0 0.0
      %3126 = vmatmul.mubr.f32.gmra.mrb[0].mxu0 %v2933
      %v3127 = vpop.f32.mrb[0].mxu0
      %v3128 = vadd.f32 0.0, %v3127
      %v3129 = vpop.f32.mrb[0].mxu0
      %3130 = vmatprep.mubr.f32.mxu0 0.0
      %3131 = vmatmul.mubr.f32.gmra.mrb[0].mxu0 %v2936
      %v3132 = vpop.f32.mrb[0].mxu0
      %v3133 = vadd.f32 0.0, %v3132
      %v3134 = vpop.f32.mrb[0].mxu0
      %3135 = vmatprep.mubr.f32.mxu0 0.0
      %3136 = vmatmul.mubr.f32.gmra.mrb[0].mxu0 %v2939
      %v3137 = vpop.f32.mrb[0].mxu0
      %v3138 = vadd.f32 0.0, %v3137
      %v3139 = vpop.f32.mrb[0].mxu0
      %3140 = vmatprep.mubr.f32.mxu0 0.0
      %3141 = vmatmul.mubr.f32.gmra.mrb[0].mxu0 %v2942
      %v3142 = vpop.f32.mrb[0].mxu0
      %v3143 = vadd.f32 0.0, %v3142
      %v3144 = vpop.f32.mrb[0].mxu0
      %3145 = vmatprep.mubr.f32.mxu0 0.0
      %3146 = vmatmul.mubr.f32.gmra.mrb[0].mxu0 %v2945
      %v3147 = vpop.f32.mrb[0].mxu0
      %v3148 = vadd.f32 0.0, %v3147
      %v3149 = vpop.f32.mrb[0].mxu0
      %3150 = vmatprep.mubr.f32.mxu0 0.0
      %3151 = vmatmul.mubr.f32.gmra.mrb[0].mxu0 %v2948
      %v3152 = vpop.f32.mrb[0].mxu0
      %v3153 = vadd.f32 0.0, %v3152
      %v3154 = vpop.f32.mrb[0].mxu0
      %3155 = vmatprep.mubr.f32.mxu0 0.0
      %3156 = vmatmul.mubr.f32.gmra.mrb[0].mxu0 %v2951
      %v3157 = vpop.f32.mrb[0].mxu0
      %v3158 = vadd.f32 0.0, %v3157
      %v3159 = vpop.f32.mrb[0].mxu0
      %3160 = vmatprep.mubr.f32.mxu0 0.0
      %3161 = vmatmul.mubr.f32.gmra.mrb[0].mxu0 %v2954
      %v3162 = vpop.f32.mrb[0].mxu0
      %v3163 = vadd.f32 0.0, %v3162
      %v3164 = vpop.f32.mrb[0].mxu0
      %3165 = vmatprep.mubr.f32.mxu0 0.0
      %3166 = vmatmul.mubr.f32.gmra.mrb[0].mxu0 %v2957
      %v3167 = vpop.f32.mrb[0].mxu0
      %v3168 = vadd.f32 0.0, %v3167
      %v3169 = vpop.f32.mrb[0].mxu0
      %3170 = vmatprep.mubr.f32.mxu0 0.0
      %3171 = vmatmul.mubr.f32.gmra.mrb[0].mxu0 %v2960
      %v3172 = vpop.f32.mrb[0].mxu0
      %v3173 = vadd.f32 0.0, %v3172
      %v3174 = vpop.f32.mrb[0].mxu0
      %3175 = vmatprep.mubr.f32.mxu0 0.0
      %3176 = vmatmul.mubr.f32.gmra.mrb[0].mxu0 %v2963
      %v3177 = vpop.f32.mrb[0].mxu0
      %v3178 = vadd.f32 0.0, %v3177
      %v3179 = vpop.f32.mrb[0].mxu0
      %3180 = vmatprep.mubr.f32.mxu0 0.0
      %3181 = vmatmul.mubr.f32.gmra.mrb[0].mxu0 %v2966
      %v3182 = vpop.f32.mrb[0].mxu0
      %v3183 = vadd.f32 0.0, %v3182
      %v3184 = vpop.f32.mrb[0].mxu0
      %3185 = vmatprep.mubr.f32.mxu0 0.0
      %3186 = vmatmul.mubr.f32.gmra.mrb[0].mxu0 %v2969
      %v3187 = vpop.f32.mrb[0].mxu0
      %v3188 = vadd.f32 0.0, %v3187
      %v3189 = vpop.f32.mrb[0].mxu0
      %3190 = vmatprep.mubr.f32.mxu0 0.0
      %3191 = vmatmul.mubr.f32.gmra.mrb[0].mxu0 %v2972
      %v3192 = vpop.f32.mrb[0].mxu0
      %v3193 = vadd.f32 0.0, %v3192
      %v3194 = vpop.f32.mrb[0].mxu0
      %3195 = vmatprep.mubr.f32.mxu0 0.0
      %3196 = vmatmul.mubr.f32.gmra.mrb[0].mxu0 %v2975
      %v3197 = vpop.f32.mrb[0].mxu0
      %v3198 = vadd.f32 0.0, %v3197
      %v3199 = vpop.f32.mrb[0].mxu0
      %3200 = vmatprep.mubr.f32.mxu0 0.0
      %3201 = vmatmul.mubr.f32.gmra.mrb[0].mxu0 %v2978
      %v3202 = vpop.f32.mrb[0].mxu0
      %v3203 = vadd.f32 0.0, %v3202
      %v3204 = vpop.f32.mrb[0].mxu0
      %3205 = vmatprep.mubr.f32.mxu0 0.0
      %3206 = vmatmul.mubr.f32.gmra.mrb[0].mxu0 %v2981
      %v3207 = vpop.f32.mrb[0].mxu0
      %v3208 = vadd.f32 0.0, %v3207
      %v3209 = vpop.f32.mrb[0].mxu0
      %3210 = vdwg.mxu0
      %v3211 = vadd.f32 %v2821, %v3053
      %v3212 = vadd.f32 %v2822, %v3058
      %v3213 = vadd.f32 %v2823, %v3063
      %v3214 = vadd.f32 %v2824, %v3068
      %v3215 = vadd.f32 %v2825, %v3073
      %v3216 = vadd.f32 %v2826, %v3078
      %v3217 = vadd.f32 %v2827, %v3083
      %v3218 = vadd.f32 %v2828, %v3088
      %v3219 = vadd.f32 %v2829, %v3093
      %v3220 = vadd.f32 %v2830, %v3098
      %v3221 = vadd.f32 %v2831, %v3103
      %v3222 = vadd.f32 %v2832, %v3108
      %v3223 = vadd.f32 %v2833, %v3113
      %v3224 = vadd.f32 %v2834, %v3118
      %v3225 = vadd.f32 %v2835, %v3123
      %v3226 = vadd.f32 %v2836, %v3128
      %v3227 = vadd.f32 %v2837, %v3133
      %v3228 = vadd.f32 %v2838, %v3138
      %v3229 = vadd.f32 %v2839, %v3143
      %v3230 = vadd.f32 %v2840, %v3148
      %v3231 = vadd.f32 %v2841, %v3153
      %v3232 = vadd.f32 %v2842, %v3158
      %v3233 = vadd.f32 %v2843, %v3163
      %v3234 = vadd.f32 %v2844, %v3168
      %v3235 = vadd.f32 %v2845, %v3173
      %v3236 = vadd.f32 %v2846, %v3178
      %v3237 = vadd.f32 %v2847, %v3183
      %v3238 = vadd.f32 %v2848, %v3188
      %v3239 = vadd.f32 %v2849, %v3193
      %v3240 = vadd.f32 %v2850, %v3198
      %v3241 = vadd.f32 %v2851, %v3203
      %v3242 = vadd.f32 %v2852, %v3208
      %v3243 = vld [vmem:[%s2462 + $0x2] sm:$0xff]
      %v3244 = vld [vmem:[%s2462 + $0xa] sm:$0xff]
      %v3245 = vld [vmem:[%s2462 + $0x1a] sm:$0xff]
      %v3246 = vld [vmem:[%s2462 + $0x22] sm:$0xff]
      %v3247 = vld [vmem:[%s2462 + $0x32] sm:$0xff]
      %v3248 = vld [vmem:[%s2462 + $0x3a] sm:$0xff]
      %v3249 = vld [vmem:[%s2462 + $0x4a] sm:$0xff]
      %v3250 = vld [vmem:[%s2462 + $0x52] sm:$0xff]
      %v3251 = vld [vmem:[%s2462 + $0x62] sm:$0xff]
      %v3252 = vld [vmem:[%s2462 + $0x6a] sm:$0xff]
      %v3253 = vld [vmem:[%s2462 + $0x7a] sm:$0xff]
      %v3254 = vld [vmem:[%s2462 + $0x82] sm:$0xff]
      %v3255 = vld [vmem:[%s2462 + $0x92] sm:$0xff]
      %v3256 = vld [vmem:[%s2462 + $0x9a] sm:$0xff]
      %v3257 = vld [vmem:[%s2462 + $0xaa] sm:$0xff]
      %v3258 = vld [vmem:[%s2462 + $0xb2] sm:$0xff]
      %v3259 = vld [vmem:[%s2462 + $0xc2] sm:$0xff]
      %v3260 = vld [vmem:[%s2462 + $0xca] sm:$0xff]
      %v3261 = vld [vmem:[%s2462 + $0xda] sm:$0xff]
      %v3262 = vld [vmem:[%s2462 + $0xe2] sm:$0xff]
      %v3263 = vld [vmem:[%s2462 + $0xf2] sm:$0xff]
      %v3264 = vld [vmem:[%s2462 + $0xfa] sm:$0xff]
      %v3265 = vld [vmem:[%s2462 + $0x10a] sm:$0xff]
      %v3266 = vld [vmem:[%s2462 + $0x112] sm:$0xff]
      %v3267 = vld [vmem:[%s2462 + $0x122] sm:$0xff]
      %v3268 = vld [vmem:[%s2462 + $0x12a] sm:$0xff]
      %v3269 = vld [vmem:[%s2462 + $0x13a] sm:$0xff]
      %v3270 = vld [vmem:[%s2462 + $0x142] sm:$0xff]
      %v3271 = vld [vmem:[%s2462 + $0x152] sm:$0xff]
      %v3272 = vld [vmem:[%s2462 + $0x15a] sm:$0xff]
      %v3273 = vld [vmem:[%s2462 + $0x16a] sm:$0xff]
      %v3274 = vld [vmem:[%s2462 + $0x172] sm:$0xff]
      %s3275 = scalar_lea.vmem %s1, 32
      %v3276 = vld [vmem:[%s3275] sm:$0xf]
      %v3278 = vsel %vm251, %v3243, 0
      %v3281 = vsel %vm251, %v3244, 0
      %v3284 = vsel %vm251, %v3245, 0
      %v3287 = vsel %vm251, %v3246, 0
      %v3290 = vsel %vm251, %v3247, 0
      %v3293 = vsel %vm251, %v3248, 0
      %v3296 = vsel %vm251, %v3249, 0
      %v3299 = vsel %vm251, %v3250, 0
      %v3302 = vsel %vm251, %v3251, 0
      %v3305 = vsel %vm251, %v3252, 0
      %v3308 = vsel %vm251, %v3253, 0
      %v3311 = vsel %vm251, %v3254, 0
      %v3314 = vsel %vm251, %v3255, 0
      %v3317 = vsel %vm251, %v3256, 0
      %v3320 = vsel %vm251, %v3257, 0
      %v3323 = vsel %vm251, %v3258, 0
      %v3326 = vsel %vm251, %v3259, 0
      %v3329 = vsel %vm251, %v3260, 0
      %v3332 = vsel %vm251, %v3261, 0
      %v3335 = vsel %vm251, %v3262, 0
      %v3338 = vsel %vm251, %v3263, 0
      %v3341 = vsel %vm251, %v3264, 0
      %v3344 = vsel %vm251, %v3265, 0
      %v3347 = vsel %vm251, %v3266, 0
      %v3350 = vsel %vm251, %v3267, 0
      %v3353 = vsel %vm251, %v3268, 0
      %v3356 = vsel %vm251, %v3269, 0
      %v3359 = vsel %vm251, %v3270, 0
      %v3362 = vsel %vm251, %v3271, 0
      %v3365 = vsel %vm251, %v3272, 0
      %v3368 = vsel %vm251, %v3273, 0
      %v3371 = vsel %vm251, %v3274, 0
      %v3374 = vsel %vm348, %v3276, 0
      %3376 = vmatprep.subr.mxu0 0.0
      %3377 = vmatpush1.msra.mxu0 %v3374
      %3378 = vmatprep.subr.mxu0 0.0
      %3379 = vmatpush1.msra.mxu0 0.0
      %3380 = vmatprep.subr.mxu0 0.0
      %3381 = vmatpush1.msra.mxu0 0.0
      %3382 = vmatprep.subr.mxu0 0.0
      %3383 = vmatpush1.msra.mxu0 0.0
      %3384 = vmatprep.subr.mxu0 0.0
      %3385 = vmatpush1.msra.mxu0 0.0
      %3386 = vmatprep.subr.mxu0 0.0
      %3387 = vmatpush1.msra.mxu0 0.0
      %3388 = vmatprep.subr.mxu0 0.0
      %3389 = vmatpush1.msra.mxu0 0.0
      %3390 = vmatprep.subr.mxu0 0.0
      %3391 = vmatpush1.msra.mxu0 0.0
      %3392 = vmatprep.subr.mxu0 0.0
      %3393 = vmatpush1.msra.mxu0 0.0
      %3394 = vmatprep.subr.mxu0 0.0
      %3395 = vmatpush1.msra.mxu0 0.0
      %3396 = vmatprep.subr.mxu0 0.0
      %3397 = vmatpush1.msra.mxu0 0.0
      %3398 = vmatprep.subr.mxu0 0.0
      %3399 = vmatpush1.msra.mxu0 0.0
      %3400 = vmatprep.subr.mxu0 0.0
      %3401 = vmatpush1.msra.mxu0 0.0
      %3402 = vmatprep.subr.mxu0 0.0
      %3403 = vmatpush1.msra.mxu0 0.0
      %3404 = vmatprep.subr.mxu0 0.0
      %3405 = vmatpush1.msra.mxu0 0.0
      %3406 = vmatprep.subr.mxu0 0.0
      %3407 = vmatpush1.msra.mxu0 0.0
      %3408 = vmatprep.subr.mxu0 0.0
      %3409 = vmatpush1.msra.mxu0 0.0
      %3410 = vmatprep.subr.mxu0 0.0
      %3411 = vmatpush1.msra.mxu0 0.0
      %3412 = vmatprep.subr.mxu0 0.0
      %3413 = vmatpush1.msra.mxu0 0.0
      %3414 = vmatprep.subr.mxu0 0.0
      %3415 = vmatpush1.msra.mxu0 0.0
      %3416 = vmatprep.subr.mxu0 0.0
      %3417 = vmatpush1.msra.mxu0 0.0
      %3418 = vmatprep.subr.mxu0 0.0
      %3419 = vmatpush1.msra.mxu0 0.0
      %3420 = vmatprep.subr.mxu0 0.0
      %3421 = vmatpush1.msra.mxu0 0.0
      %3422 = vmatprep.subr.mxu0 0.0
      %3423 = vmatpush1.msra.mxu0 0.0
      %3424 = vmatprep.subr.mxu0 0.0
      %3425 = vmatpush1.msra.mxu0 0.0
      %3426 = vmatprep.subr.mxu0 0.0
      %3427 = vmatpush1.msra.mxu0 0.0
      %3428 = vmatprep.subr.mxu0 0.0
      %3429 = vmatpush1.msra.mxu0 0.0
      %3430 = vmatprep.subr.mxu0 0.0
      %3431 = vmatpush1.msra.mxu0 0.0
      %3432 = vmatprep.subr.mxu0 0.0
      %3433 = vmatpush1.msra.mxu0 0.0
      %3434 = vmatprep.subr.mxu0 0.0
      %3435 = vmatpush1.msra.mxu0 0.0
      %3436 = vmatprep.subr.mxu0 0.0
      %3437 = vmatpush1.msra.mxu0 0.0
      %3438 = vmatprep.subr.mxu0 0.0
      %3439 = vmatpush1.msra.mxu0 0.0
      %3440 = vmatprep.mubr.f32.mxu0 0.0
      %3441 = vmatmul.mubr.f32.gmra.mrb[0].mxu0 %v3278
      %v3442 = vpop.f32.mrb[0].mxu0
      %v3443 = vadd.f32 0.0, %v3442
      %v3444 = vpop.f32.mrb[0].mxu0
      %3445 = vmatprep.mubr.f32.mxu0 0.0
      %3446 = vmatmul.mubr.f32.gmra.mrb[0].mxu0 %v3281
      %v3447 = vpop.f32.mrb[0].mxu0
      %v3448 = vadd.f32 0.0, %v3447
      %v3449 = vpop.f32.mrb[0].mxu0
      %3450 = vmatprep.mubr.f32.mxu0 0.0
      %3451 = vmatmul.mubr.f32.gmra.mrb[0].mxu0 %v3284
      %v3452 = vpop.f32.mrb[0].mxu0
      %v3453 = vadd.f32 0.0, %v3452
      %v3454 = vpop.f32.mrb[0].mxu0
      %3455 = vmatprep.mubr.f32.mxu0 0.0
      %3456 = vmatmul.mubr.f32.gmra.mrb[0].mxu0 %v3287
      %v3457 = vpop.f32.mrb[0].mxu0
      %v3458 = vadd.f32 0.0, %v3457
      %v3459 = vpop.f32.mrb[0].mxu0
      %3460 = vmatprep.mubr.f32.mxu0 0.0
      %3461 = vmatmul.mubr.f32.gmra.mrb[0].mxu0 %v3290
      %v3462 = vpop.f32.mrb[0].mxu0
      %v3463 = vadd.f32 0.0, %v3462
      %v3464 = vpop.f32.mrb[0].mxu0
      %3465 = vmatprep.mubr.f32.mxu0 0.0
      %3466 = vmatmul.mubr.f32.gmra.mrb[0].mxu0 %v3293
      %v3467 = vpop.f32.mrb[0].mxu0
      %v3468 = vadd.f32 0.0, %v3467
      %v3469 = vpop.f32.mrb[0].mxu0
      %3470 = vmatprep.mubr.f32.mxu0 0.0
      %3471 = vmatmul.mubr.f32.gmra.mrb[0].mxu0 %v3296
      %v3472 = vpop.f32.mrb[0].mxu0
      %v3473 = vadd.f32 0.0, %v3472
      %v3474 = vpop.f32.mrb[0].mxu0
      %3475 = vmatprep.mubr.f32.mxu0 0.0
      %3476 = vmatmul.mubr.f32.gmra.mrb[0].mxu0 %v3299
      %v3477 = vpop.f32.mrb[0].mxu0
      %v3478 = vadd.f32 0.0, %v3477
      %v3479 = vpop.f32.mrb[0].mxu0
      %3480 = vmatprep.mubr.f32.mxu0 0.0
      %3481 = vmatmul.mubr.f32.gmra.mrb[0].mxu0 %v3302
      %v3482 = vpop.f32.mrb[0].mxu0
      %v3483 = vadd.f32 0.0, %v3482
      %v3484 = vpop.f32.mrb[0].mxu0
      %3485 = vmatprep.mubr.f32.mxu0 0.0
      %3486 = vmatmul.mubr.f32.gmra.mrb[0].mxu0 %v3305
      %v3487 = vpop.f32.mrb[0].mxu0
      %v3488 = vadd.f32 0.0, %v3487
      %v3489 = vpop.f32.mrb[0].mxu0
      %3490 = vmatprep.mubr.f32.mxu0 0.0
      %3491 = vmatmul.mubr.f32.gmra.mrb[0].mxu0 %v3308
      %v3492 = vpop.f32.mrb[0].mxu0
      %v3493 = vadd.f32 0.0, %v3492
      %v3494 = vpop.f32.mrb[0].mxu0
      %3495 = vmatprep.mubr.f32.mxu0 0.0
      %3496 = vmatmul.mubr.f32.gmra.mrb[0].mxu0 %v3311
      %v3497 = vpop.f32.mrb[0].mxu0
      %v3498 = vadd.f32 0.0, %v3497
      %v3499 = vpop.f32.mrb[0].mxu0
      %3500 = vmatprep.mubr.f32.mxu0 0.0
      %3501 = vmatmul.mubr.f32.gmra.mrb[0].mxu0 %v3314
      %v3502 = vpop.f32.mrb[0].mxu0
      %v3503 = vadd.f32 0.0, %v3502
      %v3504 = vpop.f32.mrb[0].mxu0
      %3505 = vmatprep.mubr.f32.mxu0 0.0
      %3506 = vmatmul.mubr.f32.gmra.mrb[0].mxu0 %v3317
      %v3507 = vpop.f32.mrb[0].mxu0
      %v3508 = vadd.f32 0.0, %v3507
      %v3509 = vpop.f32.mrb[0].mxu0
      %3510 = vmatprep.mubr.f32.mxu0 0.0
      %3511 = vmatmul.mubr.f32.gmra.mrb[0].mxu0 %v3320
      %v3512 = vpop.f32.mrb[0].mxu0
      %v3513 = vadd.f32 0.0, %v3512
      %v3514 = vpop.f32.mrb[0].mxu0
      %3515 = vmatprep.mubr.f32.mxu0 0.0
      %3516 = vmatmul.mubr.f32.gmra.mrb[0].mxu0 %v3323
      %v3517 = vpop.f32.mrb[0].mxu0
      %v3518 = vadd.f32 0.0, %v3517
      %v3519 = vpop.f32.mrb[0].mxu0
      %3520 = vmatprep.mubr.f32.mxu0 0.0
      %3521 = vmatmul.mubr.f32.gmra.mrb[0].mxu0 %v3326
      %v3522 = vpop.f32.mrb[0].mxu0
      %v3523 = vadd.f32 0.0, %v3522
      %v3524 = vpop.f32.mrb[0].mxu0
      %3525 = vmatprep.mubr.f32.mxu0 0.0
      %3526 = vmatmul.mubr.f32.gmra.mrb[0].mxu0 %v3329
      %v3527 = vpop.f32.mrb[0].mxu0
      %v3528 = vadd.f32 0.0, %v3527
      %v3529 = vpop.f32.mrb[0].mxu0
      %3530 = vmatprep.mubr.f32.mxu0 0.0
      %3531 = vmatmul.mubr.f32.gmra.mrb[0].mxu0 %v3332
      %v3532 = vpop.f32.mrb[0].mxu0
      %v3533 = vadd.f32 0.0, %v3532
      %v3534 = vpop.f32.mrb[0].mxu0
      %3535 = vmatprep.mubr.f32.mxu0 0.0
      %3536 = vmatmul.mubr.f32.gmra.mrb[0].mxu0 %v3335
      %v3537 = vpop.f32.mrb[0].mxu0
      %v3538 = vadd.f32 0.0, %v3537
      %v3539 = vpop.f32.mrb[0].mxu0
      %3540 = vmatprep.mubr.f32.mxu0 0.0
      %3541 = vmatmul.mubr.f32.gmra.mrb[0].mxu0 %v3338
      %v3542 = vpop.f32.mrb[0].mxu0
      %v3543 = vadd.f32 0.0, %v3542
      %v3544 = vpop.f32.mrb[0].mxu0
      %3545 = vmatprep.mubr.f32.mxu0 0.0
      %3546 = vmatmul.mubr.f32.gmra.mrb[0].mxu0 %v3341
      %v3547 = vpop.f32.mrb[0].mxu0
      %v3548 = vadd.f32 0.0, %v3547
      %v3549 = vpop.f32.mrb[0].mxu0
      %3550 = vmatprep.mubr.f32.mxu0 0.0
      %3551 = vmatmul.mubr.f32.gmra.mrb[0].mxu0 %v3344
      %v3552 = vpop.f32.mrb[0].mxu0
      %v3553 = vadd.f32 0.0, %v3552
      %v3554 = vpop.f32.mrb[0].mxu0
      %3555 = vmatprep.mubr.f32.mxu0 0.0
      %3556 = vmatmul.mubr.f32.gmra.mrb[0].mxu0 %v3347
      %v3557 = vpop.f32.mrb[0].mxu0
      %v3558 = vadd.f32 0.0, %v3557
      %v3559 = vpop.f32.mrb[0].mxu0
      %3560 = vmatprep.mubr.f32.mxu0 0.0
      %3561 = vmatmul.mubr.f32.gmra.mrb[0].mxu0 %v3350
      %v3562 = vpop.f32.mrb[0].mxu0
      %v3563 = vadd.f32 0.0, %v3562
      %v3564 = vpop.f32.mrb[0].mxu0
      %3565 = vmatprep.mubr.f32.mxu0 0.0
      %3566 = vmatmul.mubr.f32.gmra.mrb[0].mxu0 %v3353
      %v3567 = vpop.f32.mrb[0].mxu0
      %v3568 = vadd.f32 0.0, %v3567
      %v3569 = vpop.f32.mrb[0].mxu0
      %3570 = vmatprep.mubr.f32.mxu0 0.0
      %3571 = vmatmul.mubr.f32.gmra.mrb[0].mxu0 %v3356
      %v3572 = vpop.f32.mrb[0].mxu0
      %v3573 = vadd.f32 0.0, %v3572
      %v3574 = vpop.f32.mrb[0].mxu0
      %3575 = vmatprep.mubr.f32.mxu0 0.0
      %3576 = vmatmul.mubr.f32.gmra.mrb[0].mxu0 %v3359
      %v3577 = vpop.f32.mrb[0].mxu0
      %v3578 = vadd.f32 0.0, %v3577
      %v3579 = vpop.f32.mrb[0].mxu0
      %3580 = vmatprep.mubr.f32.mxu0 0.0
      %3581 = vmatmul.mubr.f32.gmra.mrb[0].mxu0 %v3362
      %v3582 = vpop.f32.mrb[0].mxu0
      %v3583 = vadd.f32 0.0, %v3582
      %v3584 = vpop.f32.mrb[0].mxu0
      %3585 = vmatprep.mubr.f32.mxu0 0.0
      %3586 = vmatmul.mubr.f32.gmra.mrb[0].mxu0 %v3365
      %v3587 = vpop.f32.mrb[0].mxu0
      %v3588 = vadd.f32 0.0, %v3587
      %v3589 = vpop.f32.mrb[0].mxu0
      %3590 = vmatprep.mubr.f32.mxu0 0.0
      %3591 = vmatmul.mubr.f32.gmra.mrb[0].mxu0 %v3368
      %v3592 = vpop.f32.mrb[0].mxu0
      %v3593 = vadd.f32 0.0, %v3592
      %v3594 = vpop.f32.mrb[0].mxu0
      %3595 = vmatprep.mubr.f32.mxu0 0.0
      %3596 = vmatmul.mubr.f32.gmra.mrb[0].mxu0 %v3371
      %v3597 = vpop.f32.mrb[0].mxu0
      %v3598 = vadd.f32 0.0, %v3597
      %v3599 = vpop.f32.mrb[0].mxu0
      %3600 = vdwg.mxu0
      %v3601 = vadd.f32 %v3211, %v3443
      %v3602 = vadd.f32 %v3212, %v3448
      %v3603 = vadd.f32 %v3213, %v3453
      %v3604 = vadd.f32 %v3214, %v3458
      %v3605 = vadd.f32 %v3215, %v3463
      %v3606 = vadd.f32 %v3216, %v3468
      %v3607 = vadd.f32 %v3217, %v3473
      %v3608 = vadd.f32 %v3218, %v3478
      %v3609 = vadd.f32 %v3219, %v3483
      %v3610 = vadd.f32 %v3220, %v3488
      %v3611 = vadd.f32 %v3221, %v3493
      %v3612 = vadd.f32 %v3222, %v3498
      %v3613 = vadd.f32 %v3223, %v3503
      %v3614 = vadd.f32 %v3224, %v3508
      %v3615 = vadd.f32 %v3225, %v3513
      %v3616 = vadd.f32 %v3226, %v3518
      %v3617 = vadd.f32 %v3227, %v3523
      %v3618 = vadd.f32 %v3228, %v3528
      %v3619 = vadd.f32 %v3229, %v3533
      %v3620 = vadd.f32 %v3230, %v3538
      %v3621 = vadd.f32 %v3231, %v3543
      %v3622 = vadd.f32 %v3232, %v3548
      %v3623 = vadd.f32 %v3233, %v3553
      %v3624 = vadd.f32 %v3234, %v3558
      %v3625 = vadd.f32 %v3235, %v3563
      %v3626 = vadd.f32 %v3236, %v3568
      %v3627 = vadd.f32 %v3237, %v3573
      %v3628 = vadd.f32 %v3238, %v3578
      %v3629 = vadd.f32 %v3239, %v3583
      %v3630 = vadd.f32 %v3240, %v3588
      %v3631 = vadd.f32 %v3241, %v3593
      %v3632 = vadd.f32 %v3242, %v3598
      %vm3633 = vcmask 64512
      %3634 = vst.msk [vmem:[%s178] sm:$0xff] %vm3633, %v3601
      %3635 = vst.msk [vmem:[%s178 + $0x8] sm:$0xff] %vm3633, %v3602
      %3636 = vst.msk [vmem:[%s178 + $0x10] sm:$0xff] %vm3633, %v3603
      %3637 = vst.msk [vmem:[%s178 + $0x18] sm:$0xff] %vm3633, %v3604
      %3638 = vst.msk [vmem:[%s178 + $0x20] sm:$0xff] %vm3633, %v3605
      %3639 = vst.msk [vmem:[%s178 + $0x28] sm:$0xff] %vm3633, %v3606
      %3640 = vst.msk [vmem:[%s178 + $0x30] sm:$0xff] %vm3633, %v3607
      %3641 = vst.msk [vmem:[%s178 + $0x38] sm:$0xff] %vm3633, %v3608
      %3642 = vst.msk [vmem:[%s178 + $0x40] sm:$0xff] %vm3633, %v3609
      %3643 = vst.msk [vmem:[%s178 + $0x48] sm:$0xff] %vm3633, %v3610
      %3644 = vst.msk [vmem:[%s178 + $0x50] sm:$0xff] %vm3633, %v3611
      %3645 = vst.msk [vmem:[%s178 + $0x58] sm:$0xff] %vm3633, %v3612
      %3646 = vst.msk [vmem:[%s178 + $0x60] sm:$0xff] %vm3633, %v3613
      %3647 = vst.msk [vmem:[%s178 + $0x68] sm:$0xff] %vm3633, %v3614
      %3648 = vst.msk [vmem:[%s178 + $0x70] sm:$0xff] %vm3633, %v3615
      %3649 = vst.msk [vmem:[%s178 + $0x78] sm:$0xff] %vm3633, %v3616
      %3650 = vst.msk [vmem:[%s178 + $0x80] sm:$0xff] %vm3633, %v3617
      %3651 = vst.msk [vmem:[%s178 + $0x88] sm:$0xff] %vm3633, %v3618
      %3652 = vst.msk [vmem:[%s178 + $0x90] sm:$0xff] %vm3633, %v3619
      %3653 = vst.msk [vmem:[%s178 + $0x98] sm:$0xff] %vm3633, %v3620
      %3654 = vst.msk [vmem:[%s178 + $0xa0] sm:$0xff] %vm3633, %v3621
      %3655 = vst.msk [vmem:[%s178 + $0xa8] sm:$0xff] %vm3633, %v3622
      %3656 = vst.msk [vmem:[%s178 + $0xb0] sm:$0xff] %vm3633, %v3623
      %3657 = vst.msk [vmem:[%s178 + $0xb8] sm:$0xff] %vm3633, %v3624
      %3658 = vst.msk [vmem:[%s178 + $0xc0] sm:$0xff] %vm3633, %v3625
      %3659 = vst.msk [vmem:[%s178 + $0xc8] sm:$0xff] %vm3633, %v3626
      %3660 = vst.msk [vmem:[%s178 + $0xd0] sm:$0xff] %vm3633, %v3627
      %3661 = vst.msk [vmem:[%s178 + $0xd8] sm:$0xff] %vm3633, %v3628
      %3662 = vst.msk [vmem:[%s178 + $0xe0] sm:$0xff] %vm3633, %v3629
      %3663 = vst.msk [vmem:[%s178 + $0xe8] sm:$0xff] %vm3633, %v3630
      %3664 = vst.msk [vmem:[%s178 + $0xf0] sm:$0xff] %vm3633, %v3631
      %3665 = vst.msk [vmem:[%s178 + $0xf8] sm:$0xff] %vm3633, %v3632
      %v3666 = vsel %vm3633, %v3601, 0.0
      %v3667 = vsel %vm3633, %v3602, 0.0
      %v3668 = vadd.f32 %v3666, %v3667
      %v3669 = vsel %vm3633, %v3603, 0.0
      %v3670 = vadd.f32 %v3668, %v3669
      %v3671 = vsel %vm3633, %v3604, 0.0
      %v3672 = vadd.f32 %v3670, %v3671
      %v3673 = vsel %vm3633, %v3605, 0.0
      %v3674 = vadd.f32 %v3672, %v3673
      %v3675 = vsel %vm3633, %v3606, 0.0
      %v3676 = vadd.f32 %v3674, %v3675
      %v3677 = vsel %vm3633, %v3607, 0.0
      %v3678 = vadd.f32 %v3676, %v3677
      %v3679 = vsel %vm3633, %v3608, 0.0
      %v3680 = vadd.f32 %v3678, %v3679
      %v3681 = vsel %vm3633, %v3609, 0.0
      %v3682 = vadd.f32 %v3680, %v3681
      %v3683 = vsel %vm3633, %v3610, 0.0
      %v3684 = vadd.f32 %v3682, %v3683
      %v3685 = vsel %vm3633, %v3611, 0.0
      %v3686 = vadd.f32 %v3684, %v3685
      %v3687 = vsel %vm3633, %v3612, 0.0
      %v3688 = vadd.f32 %v3686, %v3687
      %v3689 = vsel %vm3633, %v3613, 0.0
      %v3690 = vadd.f32 %v3688, %v3689
      %v3691 = vsel %vm3633, %v3614, 0.0
      %v3692 = vadd.f32 %v3690, %v3691
      %v3693 = vsel %vm3633, %v3615, 0.0
      %v3694 = vadd.f32 %v3692, %v3693
      %v3695 = vsel %vm3633, %v3616, 0.0
      %v3696 = vadd.f32 %v3694, %v3695
      %v3697 = vsel %vm3633, %v3617, 0.0
      %v3698 = vadd.f32 %v3696, %v3697
      %v3699 = vsel %vm3633, %v3618, 0.0
      %v3700 = vadd.f32 %v3698, %v3699
      %v3701 = vsel %vm3633, %v3619, 0.0
      %v3702 = vadd.f32 %v3700, %v3701
      %v3703 = vsel %vm3633, %v3620, 0.0
      %v3704 = vadd.f32 %v3702, %v3703
      %v3705 = vsel %vm3633, %v3621, 0.0
      %v3706 = vadd.f32 %v3704, %v3705
      %v3707 = vsel %vm3633, %v3622, 0.0
      %v3708 = vadd.f32 %v3706, %v3707
      %v3709 = vsel %vm3633, %v3623, 0.0
      %v3710 = vadd.f32 %v3708, %v3709
      %v3711 = vsel %vm3633, %v3624, 0.0
      %v3712 = vadd.f32 %v3710, %v3711
      %v3713 = vsel %vm3633, %v3625, 0.0
      %v3714 = vadd.f32 %v3712, %v3713
      %v3715 = vsel %vm3633, %v3626, 0.0
      %v3716 = vadd.f32 %v3714, %v3715
      %v3717 = vsel %vm3633, %v3627, 0.0
      %v3718 = vadd.f32 %v3716, %v3717
      %v3719 = vsel %vm3633, %v3628, 0.0
      %v3720 = vadd.f32 %v3718, %v3719
      %v3721 = vsel %vm3633, %v3629, 0.0
      %v3722 = vadd.f32 %v3720, %v3721
      %v3723 = vsel %vm3633, %v3630, 0.0
      %v3724 = vadd.f32 %v3722, %v3723
      %v3725 = vsel %vm3633, %v3631, 0.0
      %v3726 = vadd.f32 %v3724, %v3725
      %v3727 = vsel %vm3633, %v3632, 0.0
      %v3728 = vadd.f32 %v3726, %v3727
      %v3729 = vsel %vm3633, %v3728, 0.0
      %v3730 = vrot.slane %v3729, 4
      %v3731 = vadd.f32 %v3729, %v3730
      %v3732 = vrot.slane %v3731, 2
      %v3733 = vadd.f32 %v3731, %v3732
      %v3734 = vrot.slane %v3733, 1
      %v3735 = vadd.f32 %v3733, %v3734
      %v3736 = vmul.f32 %v3735, 0.00390625
      %v3737 = vsub.f32 %v3601, %v3736
      %v3738 = vsub.f32 %v3602, %v3736
      %v3739 = vsub.f32 %v3603, %v3736
      %v3740 = vsub.f32 %v3604, %v3736
      %v3741 = vsub.f32 %v3605, %v3736
      %v3742 = vsub.f32 %v3606, %v3736
      %v3743 = vsub.f32 %v3607, %v3736
      %v3744 = vsub.f32 %v3608, %v3736
      %v3745 = vsub.f32 %v3609, %v3736
      %v3746 = vsub.f32 %v3610, %v3736
      %v3747 = vsub.f32 %v3611, %v3736
      %v3748 = vsub.f32 %v3612, %v3736
      %v3749 = vsub.f32 %v3613, %v3736
      %v3750 = vsub.f32 %v3614, %v3736
      %v3751 = vsub.f32 %v3615, %v3736
      %v3752 = vsub.f32 %v3616, %v3736
      %v3753 = vsub.f32 %v3617, %v3736
      %v3754 = vsub.f32 %v3618, %v3736
      %v3755 = vsub.f32 %v3619, %v3736
      %v3756 = vsub.f32 %v3620, %v3736
      %v3757 = vsub.f32 %v3621, %v3736
      %v3758 = vsub.f32 %v3622, %v3736
      %v3759 = vsub.f32 %v3623, %v3736
      %v3760 = vsub.f32 %v3624, %v3736
      %v3761 = vsub.f32 %v3625, %v3736
      %v3762 = vsub.f32 %v3626, %v3736
      %v3763 = vsub.f32 %v3627, %v3736
      %v3764 = vsub.f32 %v3628, %v3736
      %v3765 = vsub.f32 %v3629, %v3736
      %v3766 = vsub.f32 %v3630, %v3736
      %v3767 = vsub.f32 %v3631, %v3736
      %v3768 = vsub.f32 %v3632, %v3736
      %v3769 = vmul.f32 %v3737, %v3737
      %v3770 = vmul.f32 %v3738, %v3738
      %v3771 = vmul.f32 %v3739, %v3739
      %v3772 = vmul.f32 %v3740, %v3740
      %v3773 = vmul.f32 %v3741, %v3741
      %v3774 = vmul.f32 %v3742, %v3742
      %v3775 = vmul.f32 %v3743, %v3743
      %v3776 = vmul.f32 %v3744, %v3744
      %v3777 = vmul.f32 %v3745, %v3745
      %v3778 = vmul.f32 %v3746, %v3746
      %v3779 = vmul.f32 %v3747, %v3747
      %v3780 = vmul.f32 %v3748, %v3748
      %v3781 = vmul.f32 %v3749, %v3749
      %v3782 = vmul.f32 %v3750, %v3750
      %v3783 = vmul.f32 %v3751, %v3751
      %v3784 = vmul.f32 %v3752, %v3752
      %v3785 = vmul.f32 %v3753, %v3753
      %v3786 = vmul.f32 %v3754, %v3754
      %v3787 = vmul.f32 %v3755, %v3755
      %v3788 = vmul.f32 %v3756, %v3756
      %v3789 = vmul.f32 %v3757, %v3757
      %v3790 = vmul.f32 %v3758, %v3758
      %v3791 = vmul.f32 %v3759, %v3759
      %v3792 = vmul.f32 %v3760, %v3760
      %v3793 = vmul.f32 %v3761, %v3761
      %v3794 = vmul.f32 %v3762, %v3762
      %v3795 = vmul.f32 %v3763, %v3763
      %v3796 = vmul.f32 %v3764, %v3764
      %v3797 = vmul.f32 %v3765, %v3765
      %v3798 = vmul.f32 %v3766, %v3766
      %v3799 = vmul.f32 %v3767, %v3767
      %v3800 = vmul.f32 %v3768, %v3768
      %v3801 = vsel %vm3633, %v3769, 0.0
      %v3802 = vsel %vm3633, %v3770, 0.0
      %v3803 = vadd.f32 %v3801, %v3802
      %v3804 = vsel %vm3633, %v3771, 0.0
      %v3805 = vadd.f32 %v3803, %v3804
      %v3806 = vsel %vm3633, %v3772, 0.0
      %v3807 = vadd.f32 %v3805, %v3806
      %v3808 = vsel %vm3633, %v3773, 0.0
      %v3809 = vadd.f32 %v3807, %v3808
      %v3810 = vsel %vm3633, %v3774, 0.0
      %v3811 = vadd.f32 %v3809, %v3810
      %v3812 = vsel %vm3633, %v3775, 0.0
      %v3813 = vadd.f32 %v3811, %v3812
      %v3814 = vsel %vm3633, %v3776, 0.0
      %v3815 = vadd.f32 %v3813, %v3814
      %v3816 = vsel %vm3633, %v3777, 0.0
      %v3817 = vadd.f32 %v3815, %v3816
      %v3818 = vsel %vm3633, %v3778, 0.0
      %v3819 = vadd.f32 %v3817, %v3818
      %v3820 = vsel %vm3633, %v3779, 0.0
      %v3821 = vadd.f32 %v3819, %v3820
      %v3822 = vsel %vm3633, %v3780, 0.0
      %v3823 = vadd.f32 %v3821, %v3822
      %v3824 = vsel %vm3633, %v3781, 0.0
      %v3825 = vadd.f32 %v3823, %v3824
      %v3826 = vsel %vm3633, %v3782, 0.0
      %v3827 = vadd.f32 %v3825, %v3826
      %v3828 = vsel %vm3633, %v3783, 0.0
      %v3829 = vadd.f32 %v3827, %v3828
      %v3830 = vsel %vm3633, %v3784, 0.0
      %v3831 = vadd.f32 %v3829, %v3830
      %v3832 = vsel %vm3633, %v3785, 0.0
      %v3833 = vadd.f32 %v3831, %v3832
      %v3834 = vsel %vm3633, %v3786, 0.0
      %v3835 = vadd.f32 %v3833, %v3834
      %v3836 = vsel %vm3633, %v3787, 0.0
      %v3837 = vadd.f32 %v3835, %v3836
      %v3838 = vsel %vm3633, %v3788, 0.0
      %v3839 = vadd.f32 %v3837, %v3838
      %v3840 = vsel %vm3633, %v3789, 0.0
      %v3841 = vadd.f32 %v3839, %v3840
      %v3842 = vsel %vm3633, %v3790, 0.0
      %v3843 = vadd.f32 %v3841, %v3842
      %v3844 = vsel %vm3633, %v3791, 0.0
      %v3845 = vadd.f32 %v3843, %v3844
      %v3846 = vsel %vm3633, %v3792, 0.0
      %v3847 = vadd.f32 %v3845, %v3846
      %v3848 = vsel %vm3633, %v3793, 0.0
      %v3849 = vadd.f32 %v3847, %v3848
      %v3850 = vsel %vm3633, %v3794, 0.0
      %v3851 = vadd.f32 %v3849, %v3850
      %v3852 = vsel %vm3633, %v3795, 0.0
      %v3853 = vadd.f32 %v3851, %v3852
      %v3854 = vsel %vm3633, %v3796, 0.0
      %v3855 = vadd.f32 %v3853, %v3854
      %v3856 = vsel %vm3633, %v3797, 0.0
      %v3857 = vadd.f32 %v3855, %v3856
      %v3858 = vsel %vm3633, %v3798, 0.0
      %v3859 = vadd.f32 %v3857, %v3858
      %v3860 = vsel %vm3633, %v3799, 0.0
      %v3861 = vadd.f32 %v3859, %v3860
      %v3862 = vsel %vm3633, %v3800, 0.0
      %v3863 = vadd.f32 %v3861, %v3862
      %3864 = vst.msk [vmem:[%s183] sm:$0xff] %vm3633, %v3728
      %3865 = vst.msk [vmem:[%s183 + $0x8] sm:$0xff] %vm3633, %v3863
      %p3866 = scmp.lt.s32.totalorder %s15, 1
      %s3867 = scalar_select %p3866, %s15, 1
      %s3868 = smul.addr %s3867, 32
      %s3869 = smul.addr %s3868, 8
      %s3870 = scalar_lea.vmem %s2, %s3869
      %p3871 = scmp.lt.s32.totalorder %s15, 1
      %s3872 = scalar_select %p3871, %s15, 1
      %s3873 = smul.addr %s3872, 2
      %s3874 = smul.addr %s3873, 8
      %s3875 = scalar_lea.vmem %s3, %s3874
      // Predicated region
      $region29: #{conv2_norm_relu.2} parent=27 // pred_check
        %p3876 = pneg %p80
      $region30: #{conv2_norm_relu.2} parent=27 // pred_check_branch
        %3878 = sbr.rel (%p3876) target = $region32
      $region31: #{conv2_norm_relu.2} parent=27 // pred_region
        _
      $region32: #{conv2_norm_relu.2} parent=27 // pred_fallthru
        _
      // Predicated region
      $region33: #{conv2_norm_relu.2} parent=27 // pred_check
        %p3879 = pneg %p106
      $region34: #{conv2_norm_relu.2} parent=27 // pred_check_branch
        %3881 = sbr.rel (%p3879) target = $region36
      $region35: #{conv2_norm_relu.2} parent=27 // pred_region
        _
      $region36: #{conv2_norm_relu.2} parent=27 // pred_fallthru
        _
    $region28: #{conv2_norm_relu.2} parent=5 // pred_fallthru
      _
    %p3882 = scmp.le.s32.totalorder 2, %s10
    // Predicated region
    $region37: #{conv2_norm_relu.2} parent=5 // pred_check
      %p3883 = pneg %p3882
    $region38: #{conv2_norm_relu.2} parent=5 // pred_check_branch
      %3885 = sbr.rel (%p3883) target = $region40
    $region39: #{conv2_norm_relu.2} parent=5 // pred_region
      %s3886 = ssub.s32 %s10, 2
      // Predicated region
      $region41: #{conv2_norm_relu.2} parent=39 // pred_check
        %p3887 = pneg %p86
      $region42: #{conv2_norm_relu.2} parent=39 // pred_check_branch
        %3889 = sbr.rel (%p3887) target = $region44
      $region43: #{conv2_norm_relu.2} parent=39 // pred_region
        %p3890 = scmp.lt.s32.totalorder %s16, 1
        %s3891 = scalar_select %p3890, %s16, 1
        %s3892 = smul.addr %s3891, 32
        %s3893 = smul.addr %s3892, 8
        %s3894 = scalar_lea.vmem %s2, %s3893
      $region44: #{conv2_norm_relu.2} parent=39 // pred_fallthru
        _
      // Predicated region
      $region45: #{conv2_norm_relu.2} parent=39 // pred_check
        %p3895 = pneg %p112
      $region46: #{conv2_norm_relu.2} parent=39 // pred_check_branch
        %3897 = sbr.rel (%p3895) target = $region48
      $region47: #{conv2_norm_relu.2} parent=39 // pred_region
        %p3898 = scmp.lt.s32.totalorder %s16, 1
        %s3899 = scalar_select %p3898, %s16, 1
        %s3900 = smul.addr %s3899, 2
        %s3901 = smul.addr %s3900, 8
        %s3902 = scalar_lea.vmem %s3, %s3901
      $region48: #{conv2_norm_relu.2} parent=39 // pred_fallthru
        _
    $region40: #{conv2_norm_relu.2} parent=5 // pred_fallthru
      _
  $region6: #{conv2_norm_relu.2} parent=0 // loop_footer
    %s14 = sadd.s32 1, %s10
  $region7: #{conv2_norm_relu.2} parent=0 // loop_footer_branch
    %9 = sbr.rel target = $region3
  $region8: #{conv2_norm_relu.2} parent=0 // loop_exit
    _

</llo_original>
